<compile_context>
chip_gen: v5e
topology: v5e:2x2
jax: 0.10.0
libtpu: 0.0.40
codegen_flags: <defaults>
</compile_context>

<pallas_src>
from functools import partial

import numpy as np
import jax
import jax.numpy as jnp
from jax.experimental import pallas as pl
from jax.experimental.pallas import tpu as pltpu

BEZIER_NUM_SAMPLES = 101
BEZIER_SURFACE_RESOLUTION = 50
BEZIER_RADIUS = 0.0015
EPSILON = 1e-4

# Packed small-output slab: samples on sublanes, quantities on lanes.
_COL_POS = 0        # 0..2   bezier_pos           (x, y, z)
_COL_POS_CAM = 3    # 3..5   bezier_pos_cam
_COL_DER_CAM = 6    # 6..8   bezier_der_cam       (full length; [1:] sliced in wrapper)
_COL_SND_CAM = 9    # 9..11  bezier_snd_der_cam   (full length; [1:] sliced in wrapper)
_COL_PROJ = 12      # 12..13 bezier_proj_img      (u, v; [1:] sliced in wrapper)
_COL_NORMAL = 14    # 14..16 bezier_normal
_COL_BINORMAL = 17  # 17..19 bezier_binormal
_SLAB_COLS = 20


# ---------------------------------------------------------------------------
# Pallas kernel: whole problem fits in VMEM, single invocation (no grid).
# ---------------------------------------------------------------------------
def _construction_bezier_kernel(ctrl_ref, rt_ref, k_ref,   # SMEM scalars
                                w_ref,                      # VMEM (9, L) surface weights
                                slab_ref, surf_ref,         # outputs
                                *, inv_step):
    npad = slab_ref.shape[0]

    # --- sample parameter as a sample-major column, generated in-kernel ------
    idx = jax.lax.broadcasted_iota(jnp.int32, (npad, 1), 0).astype(jnp.float32)
    s = jnp.minimum(idx * inv_step, 1.0)      # clamp padded rows to the endpoint
    om = 1.0 - s
    s2 = s * s
    om2 = om * om

    # Bernstein / (torch-style) derivative weights.
    b0 = om2 * om
    b1 = 3.0 * s * om2
    b2 = 3.0 * om * s2
    b3 = s * s2
    d0 = -om2
    d1 = om2 - 2.0 * s * om
    d2 = -s2 + 2.0 * om * s
    d3 = s2
    e0 = 6.0 * om
    e1 = 6.0 * s

    # --- position / derivative / second derivative, per coordinate -----------
    pos, der, snd = [], [], []
    for c in range(3):
        ps = ctrl_ref[c]          # p_start[c]
        pc1 = ctrl_ref[3 + c]     # p_c1[c]
        pc2 = ctrl_ref[6 + c]     # p_c2[c]
        pe = ctrl_ref[9 + c]      # p_end[c]
        pos.append(b0 * ps + b1 * pc1 + b2 * pc2 + b3 * pe)
        der.append(d0 * ps + d1 * pc1 + d2 * pc2 + d3 * pe)
        snd.append(e0 * (pc2 - 2.0 * pc1 + ps) + e1 * (pe - 2.0 * pc2 + pc1))

    # --- homogeneous camera transform (RT rows as SMEM scalars, w=1 / w=0) ---
    pos_cam, der_cam, snd_cam = [], [], []
    for r in range(3):
        r0 = rt_ref[4 * r + 0]
        r1 = rt_ref[4 * r + 1]
        r2 = rt_ref[4 * r + 2]
        r3 = rt_ref[4 * r + 3]
        pos_cam.append(r0 * pos[0] + r1 * pos[1] + r2 * pos[2] + r3)
        der_cam.append(r0 * der[0] + r1 * der[1] + r2 * der[2])
        snd_cam.append(r0 * snd[0] + r1 * snd[1] + r2 * snd[2])

    # --- pinhole projection (K rows as SMEM scalars, exact division) ---------
    inv_z = 1.0 / pos_cam[2]
    xn = pos_cam[0] * inv_z
    yn = pos_cam[1] * inv_z
    proj_u = k_ref[0] * xn + k_ref[1] * yn + k_ref[2]
    proj_v = k_ref[3] * xn + k_ref[4] * yn + k_ref[5]

    # --- Frenet-like normal / binormal (getBezierTNB) -------------------------
    # c_sd = cross(snd_der, der)
    csd = [snd[1] * der[2] - snd[2] * der[1],
           snd[2] * der[0] - snd[0] * der[2],
           snd[0] * der[1] - snd[1] * der[0]]
    # normal numerator = cross(der, c_sd)
    nn = [der[1] * csd[2] - der[2] * csd[1],
          der[2] * csd[0] - der[0] * csd[2],
          der[0] * csd[1] - der[1] * csd[0]]
    der_n = jnp.sqrt(der[0] * der[0] + der[1] * der[1] + der[2] * der[2])
    csd_n = jnp.sqrt(csd[0] * csd[0] + csd[1] * csd[1] + csd[2] * csd[2])
    inv_norm = pl.reciprocal(der_n * csd_n + EPSILON, approx=True)
    normal = [nn[c] * inv_norm for c in range(3)]
    # binormal numerator = cross(der, snd) = -cross(snd, der) = -csd (same norm)
    inv_bnorm = pl.reciprocal(csd_n + EPSILON, approx=True)
    binormal = [-csd[c] * inv_bnorm for c in range(3)]

    # --- packed small-output slab: (NPAD, 20), quantities on lanes -----------
    cols = (pos + pos_cam + der_cam + snd_cam + [proj_u, proj_v]
            + normal + binormal)                     # 20 columns of shape (NPAD, 1)
    for j, col in enumerate(cols):
        slab_ref[:, j:j + 1] = col

    # --- swept tube surface, lane-interleaved (ring, coord) ------------------
    # lane l -> ring r = l // 3, coord c = l % 3.
    #   w_ref rows 0..2 : coordinate-select masks (1 where l%3==c and l<3R)
    #   w_ref rows 3..5 : -radius*cos(theta_r) on coord c's lanes (0 elsewhere)
    #   w_ref rows 6..8 : +radius*sin(theta_r) on coord c's lanes (0 elsewhere)
    surf = None
    for c in range(3):
        pm = w_ref[c:c + 1, :]
        cw = w_ref[3 + c:4 + c, :]
        sw = w_ref[6 + c:7 + c, :]
        term = pm * pos[c] + cw * normal[c] + sw * binormal[c]
        surf = term if surf is None else surf + term
    surf_ref[...] = surf


# ---------------------------------------------------------------------------
# Wrapper (jitted): parameter setup, pallas_call, slice / reshape only.
# ---------------------------------------------------------------------------
@partial(jax.jit, static_argnames=("num_samples", "resolution"))
def construction_bezier_forward(para_gt, p_start, cam_RT_H, cam_K,
                                num_samples=BEZIER_NUM_SAMPLES,
                                resolution=BEZIER_SURFACE_RESOLUTION):
    N, R = num_samples, resolution
    NPAD = ((N + 7) // 8) * 8                 # samples on sublanes, padded to x8
    L = ((3 * R + 127) // 128) * 128          # interleaved (ring, coord) lanes, x128

    p_start = jnp.asarray(p_start, jnp.float32).reshape(3)
    para = jnp.asarray(para_gt, jnp.float32).reshape(6)
    p_mid, p_end = para[0:3], para[3:6]
    p_c2 = (4.0 / 3.0) * p_mid - (1.0 / 3.0) * p_start
    p_c1 = (4.0 / 3.0) * p_mid - (1.0 / 3.0) * p_end
    ctrl = jnp.concatenate([p_start, p_c1, p_c2, p_end]).astype(jnp.float32)  # (12,)

    rt_flat = jnp.asarray(cam_RT_H, jnp.float32).reshape(16)
    k_flat = jnp.asarray(cam_K, jnp.float32).reshape(9)

    # Per-lane surface weights (pure constants -> folded at compile time by jit).
    lane = jnp.arange(L)
    lane_r = lane // 3
    lane_c = lane % 3
    valid = lane < 3 * R
    theta = jnp.linspace(0.0, 2.0 * np.pi, R, dtype=jnp.float32)
    theta_l = theta[jnp.clip(lane_r, 0, R - 1)]
    cosv = jnp.where(valid, -BEZIER_RADIUS * jnp.cos(theta_l), 0.0)
    sinv = jnp.where(valid, BEZIER_RADIUS * jnp.sin(theta_l), 0.0)
    rows = []
    for c in range(3):
        rows.append(jnp.where(valid & (lane_c == c), 1.0, 0.0))
    for c in range(3):
        rows.append(jnp.where(lane_c == c, cosv, 0.0))
    for c in range(3):
        rows.append(jnp.where(lane_c == c, sinv, 0.0))
    w = jnp.stack(rows, axis=0).astype(jnp.float32)    # (9, L)

    smem = pl.BlockSpec(memory_space=pltpu.MemorySpace.SMEM)
    vmem = pl.BlockSpec(memory_space=pltpu.MemorySpace.VMEM)

    slab, surf = pl.pallas_call(
        partial(_construction_bezier_kernel, inv_step=1.0 / (N - 1)),
        out_shape=(
            jax.ShapeDtypeStruct((NPAD, _SLAB_COLS), jnp.float32),  # packed small outputs
            jax.ShapeDtypeStruct((NPAD, L), jnp.float32),           # surface, interleaved
        ),
        in_specs=[smem, smem, smem, vmem],
        out_specs=(vmem, vmem),
    )(ctrl, rt_flat, k_flat, w)

    # Pure slicing / contiguous reshape — no transposes anywhere.
    pos = slab[:N, _COL_POS:_COL_POS + 3]                       # (N, 3)
    pos_cam = slab[:N, _COL_POS_CAM:_COL_POS_CAM + 3]           # (N, 3)
    der_cam = slab[1:N, _COL_DER_CAM:_COL_DER_CAM + 3]          # (N-1, 3)
    snd_cam = slab[1:N, _COL_SND_CAM:_COL_SND_CAM + 3]          # (N-1, 3)
    proj = slab[1:N, _COL_PROJ:_COL_PROJ + 2]                   # (N-1, 2)
    normal = slab[:N, _COL_NORMAL:_COL_NORMAL + 3]              # (N, 3)
    binormal = slab[:N, _COL_BINORMAL:_COL_BINORMAL + 3]        # (N, 3)
    surface = surf[:N, :3 * R].reshape(N, R, 3)                 # (N, R, 3)

    updated_surface_vertices = jnp.concatenate(
        [pos[0:1, :], pos[N - 1:N, :], surface.reshape(-1, 3)], axis=0)

    return {
        "bezier_pos": pos,
        "bezier_pos_cam": pos_cam,
        "bezier_der_cam": der_cam,
        "bezier_snd_der_cam": snd_cam,
        "bezier_proj_img": proj,
        "bezier_normal": normal,
        "bezier_binormal": binormal,
        "bezier_surface": surface,
        "updated_surface_vertices": updated_surface_vertices,
    }


# ---------------------------------------------------------------------------
# Pure-JAX reference (mirrors the torch code) for a correctness check.
# ---------------------------------------------------------------------------
def _reference(para_gt, p_start, cam_RT_H, cam_K, N, R):
    p_mid, p_end = para_gt[0:3], para_gt[3:6]
    p_c2 = 4.0 / 3.0 * p_mid - 1.0 / 3.0 * p_start
    p_c1 = 4.0 / 3.0 * p_mid - 1.0 / 3.0 * p_end
    s = jnp.linspace(0.0, 1.0, N)[:, None]
    om = 1.0 - s
    pos = om ** 3 * p_start + 3 * s * om ** 2 * p_c1 + 3 * om * s ** 2 * p_c2 + s ** 3 * p_end
    der = -om ** 2 * p_start + (om ** 2 - 2 * s * om) * p_c1 + (-s ** 2 + 2 * om * s) * p_c2 + s ** 2 * p_end
    snd = 6 * om * (p_c2 - 2 * p_c1 + p_start) + 6 * s * (p_end - 2 * p_c2 + p_c1)
    pos_H = jnp.concatenate([pos, jnp.ones((N, 1))], 1)
    pos_cam = (cam_RT_H @ pos_H.T).T[:, :3]
    der_H = jnp.concatenate([der, jnp.zeros((N, 1))], 1)
    der_cam = (cam_RT_H @ der_H[1:].T).T[:, :3]
    snd_H = jnp.concatenate([snd, jnp.zeros((N, 1))], 1)
    snd_cam = (cam_RT_H @ snd_H[1:].T).T[:, :3]
    p = pos_cam[1:]
    div = jnp.concatenate([p[:, :2].T / p[:, 2], jnp.ones((1, N - 1))], 0)
    proj = (cam_K @ div)[:2].T
    der_n = jnp.linalg.norm(der, axis=1)
    c_sd = jnp.cross(snd, der)
    normal = jnp.cross(der, c_sd) / (der_n * jnp.linalg.norm(c_sd, axis=1) + EPSILON)[:, None]
    bn = jnp.cross(der, snd)
    binormal = bn / (jnp.linalg.norm(bn, axis=1) + EPSILON)[:, None]
    theta = jnp.linspace(0.0, 2.0 * np.pi, R)
    surface = pos[:, None, :] + BEZIER_RADIUS * (
        -normal[:, None, :] * jnp.cos(theta)[None, :, None]
        + binormal[:, None, :] * jnp.sin(theta)[None, :, None])
    return pos, pos_cam, der_cam, snd_cam, proj, normal, binormal, surface


if __name__ == "__main__":
    key = jax.random.PRNGKey(0)
    k1, k2 = jax.random.split(key)
    # para_gt = [p_mid(3), p_end(3)], p_start(3); z offsets keep the curve in front of
    # the camera (z comfortably > 0) so projection is well conditioned.
    para_gt = (jax.random.uniform(k1, (6,), minval=-0.05, maxval=0.05)
               + jnp.array([0.0, 0.0, 0.15, 0.0, 0.0, 0.30])).astype(jnp.float32)
    p_start = (jax.random.uniform(k2, (3,), minval=-0.05, maxval=0.05)
               + jnp.array([0.0, 0.0, 0.10])).astype(jnp.float32)

    # Deterministic camera parameters (stand-in for camera_settings):
    fx, fy, cx, cy = 200.0, 200.0, 320.0, 240.0
    cam_K = jnp.array([[fx, 0.0, cx], [0.0, fy, cy], [0.0, 0.0, 1.0]], jnp.float32)
    cam_RT_H = jnp.eye(4, dtype=jnp.float32)   # invert_y @ cam_RT_H == I in the module

    outs = construction_bezier_forward(para_gt, p_start, cam_RT_H, cam_K)
    jax.block_until_ready(outs)

    ref = _reference(para_gt, p_start, cam_RT_H, cam_K,
                     BEZIER_NUM_SAMPLES, BEZIER_SURFACE_RESOLUTION)
    names = ["bezier_pos", "bezier_pos_cam", "bezier_der_cam", "bezier_snd_der_cam",
             "bezier_proj_img", "bezier_normal", "bezier_binormal", "bezier_surface"]
    # Tolerance absorbs the EUP approximate reciprocal in the normal/binormal path
    # (projection now uses exact division per the perf review).
    for name, want in zip(names, ref):
        np.testing.assert_allclose(np.asarray(outs[name]), np.asarray(want),
                                   rtol=5e-3, atol=5e-3, err_msg=name)
    assert outs["updated_surface_vertices"].shape == (
        2 + BEZIER_NUM_SAMPLES * BEZIER_SURFACE_RESOLUTION, 3)
    print("KERNEL_OK")
</pallas_src>

<mosaic_0001>
module attributes {stable_mosaic.version = 11 : i64} {
  func.func @_construction_bezier_kernel(%arg0: memref<12xf32, #tpu.memory_space<smem>>, %arg1: memref<16xf32, #tpu.memory_space<smem>>, %arg2: memref<9xf32, #tpu.memory_space<smem>>, %arg3: memref<9x256xf32, #tpu.memory_space<vmem>>, %arg4: memref<104x20xf32, #tpu.memory_space<vmem>>, %arg5: memref<104x256xf32, #tpu.memory_space<vmem>>) attributes {dimension_semantics = [], scalar_prefetch = 0 : i64, scratch_operands = 0 : i64, tpu.core_type = #tpu.core_type<tc>} {
    %0 = tpu.iota {dimensions = array<i32: 0>} : vector<104x1xi32>
    %1 = arith.sitofp %0 : vector<104x1xi32> to vector<104x1xf32>
    %cst = arith.constant 0.00999999977 : f32
    %2 = vector.broadcast %cst : f32 to vector<104x1xf32>
    %3 = arith.mulf %1, %2 : vector<104x1xf32>
    %cst_0 = arith.constant 1.000000e+00 : f32
    %4 = vector.broadcast %cst_0 : f32 to vector<104x1xf32>
    %5 = arith.minimumf %3, %4 : vector<104x1xf32>
    %cst_1 = arith.constant 1.000000e+00 : f32
    %6 = vector.broadcast %cst_1 : f32 to vector<104x1xf32>
    %7 = arith.subf %6, %5 : vector<104x1xf32>
    %8 = arith.mulf %5, %5 : vector<104x1xf32>
    %9 = arith.mulf %7, %7 : vector<104x1xf32>
    %10 = arith.mulf %9, %7 : vector<104x1xf32>
    %cst_2 = arith.constant 3.000000e+00 : f32
    %11 = vector.broadcast %cst_2 : f32 to vector<104x1xf32>
    %12 = arith.mulf %11, %5 : vector<104x1xf32>
    %13 = arith.mulf %12, %9 : vector<104x1xf32>
    %cst_3 = arith.constant 3.000000e+00 : f32
    %14 = vector.broadcast %cst_3 : f32 to vector<104x1xf32>
    %15 = arith.mulf %14, %7 : vector<104x1xf32>
    %16 = arith.mulf %15, %8 : vector<104x1xf32>
    %17 = arith.mulf %5, %8 : vector<104x1xf32>
    %cst_4 = arith.constant 0.000000e+00 : f32
    %18 = vector.broadcast %cst_4 : f32 to vector<104x1xf32>
    %19 = arith.subf %18, %9 : vector<104x1xf32>
    %cst_5 = arith.constant 2.000000e+00 : f32
    %20 = vector.broadcast %cst_5 : f32 to vector<104x1xf32>
    %21 = arith.mulf %20, %5 : vector<104x1xf32>
    %22 = arith.mulf %21, %7 : vector<104x1xf32>
    %23 = arith.subf %9, %22 : vector<104x1xf32>
    %cst_6 = arith.constant 0.000000e+00 : f32
    %24 = vector.broadcast %cst_6 : f32 to vector<104x1xf32>
    %25 = arith.subf %24, %8 : vector<104x1xf32>
    %cst_7 = arith.constant 2.000000e+00 : f32
    %26 = vector.broadcast %cst_7 : f32 to vector<104x1xf32>
    %27 = arith.mulf %26, %7 : vector<104x1xf32>
    %28 = arith.mulf %27, %5 : vector<104x1xf32>
    %29 = arith.addf %25, %28 : vector<104x1xf32>
    %cst_8 = arith.constant 6.000000e+00 : f32
    %30 = vector.broadcast %cst_8 : f32 to vector<104x1xf32>
    %31 = arith.mulf %30, %7 : vector<104x1xf32>
    %cst_9 = arith.constant 6.000000e+00 : f32
    %32 = vector.broadcast %cst_9 : f32 to vector<104x1xf32>
    %33 = arith.mulf %32, %5 : vector<104x1xf32>
    %c0 = arith.constant 0 : index
    %34 = memref.load %arg0[%c0] : memref<12xf32, #tpu.memory_space<smem>>
    %c3 = arith.constant 3 : index
    %35 = memref.load %arg0[%c3] : memref<12xf32, #tpu.memory_space<smem>>
    %c6 = arith.constant 6 : index
    %36 = memref.load %arg0[%c6] : memref<12xf32, #tpu.memory_space<smem>>
    %c9 = arith.constant 9 : index
    %37 = memref.load %arg0[%c9] : memref<12xf32, #tpu.memory_space<smem>>
    %38 = vector.broadcast %34 : f32 to vector<104x1xf32>
    %39 = arith.mulf %10, %38 : vector<104x1xf32>
    %40 = vector.broadcast %35 : f32 to vector<104x1xf32>
    %41 = arith.mulf %13, %40 : vector<104x1xf32>
    %42 = arith.addf %39, %41 : vector<104x1xf32>
    %43 = vector.broadcast %36 : f32 to vector<104x1xf32>
    %44 = arith.mulf %16, %43 : vector<104x1xf32>
    %45 = arith.addf %42, %44 : vector<104x1xf32>
    %46 = vector.broadcast %37 : f32 to vector<104x1xf32>
    %47 = arith.mulf %17, %46 : vector<104x1xf32>
    %48 = arith.addf %45, %47 : vector<104x1xf32>
    %49 = vector.broadcast %34 : f32 to vector<104x1xf32>
    %50 = arith.mulf %19, %49 : vector<104x1xf32>
    %51 = vector.broadcast %35 : f32 to vector<104x1xf32>
    %52 = arith.mulf %23, %51 : vector<104x1xf32>
    %53 = arith.addf %50, %52 : vector<104x1xf32>
    %54 = vector.broadcast %36 : f32 to vector<104x1xf32>
    %55 = arith.mulf %29, %54 : vector<104x1xf32>
    %56 = arith.addf %53, %55 : vector<104x1xf32>
    %57 = vector.broadcast %37 : f32 to vector<104x1xf32>
    %58 = arith.mulf %8, %57 : vector<104x1xf32>
    %59 = arith.addf %56, %58 : vector<104x1xf32>
    %cst_10 = arith.constant 2.000000e+00 : f32
    %60 = arith.mulf %cst_10, %35 : f32
    %61 = arith.subf %36, %60 : f32
    %62 = arith.addf %61, %34 : f32
    %63 = vector.broadcast %62 : f32 to vector<104x1xf32>
    %64 = arith.mulf %31, %63 : vector<104x1xf32>
    %cst_11 = arith.constant 2.000000e+00 : f32
    %65 = arith.mulf %cst_11, %36 : f32
    %66 = arith.subf %37, %65 : f32
    %67 = arith.addf %66, %35 : f32
    %68 = vector.broadcast %67 : f32 to vector<104x1xf32>
    %69 = arith.mulf %33, %68 : vector<104x1xf32>
    %70 = arith.addf %64, %69 : vector<104x1xf32>
    %c1 = arith.constant 1 : index
    %71 = memref.load %arg0[%c1] : memref<12xf32, #tpu.memory_space<smem>>
    %c4 = arith.constant 4 : index
    %72 = memref.load %arg0[%c4] : memref<12xf32, #tpu.memory_space<smem>>
    %c7 = arith.constant 7 : index
    %73 = memref.load %arg0[%c7] : memref<12xf32, #tpu.memory_space<smem>>
    %c10 = arith.constant 10 : index
    %74 = memref.load %arg0[%c10] : memref<12xf32, #tpu.memory_space<smem>>
    %75 = vector.broadcast %71 : f32 to vector<104x1xf32>
    %76 = arith.mulf %10, %75 : vector<104x1xf32>
    %77 = vector.broadcast %72 : f32 to vector<104x1xf32>
    %78 = arith.mulf %13, %77 : vector<104x1xf32>
    %79 = arith.addf %76, %78 : vector<104x1xf32>
    %80 = vector.broadcast %73 : f32 to vector<104x1xf32>
    %81 = arith.mulf %16, %80 : vector<104x1xf32>
    %82 = arith.addf %79, %81 : vector<104x1xf32>
    %83 = vector.broadcast %74 : f32 to vector<104x1xf32>
    %84 = arith.mulf %17, %83 : vector<104x1xf32>
    %85 = arith.addf %82, %84 : vector<104x1xf32>
    %86 = vector.broadcast %71 : f32 to vector<104x1xf32>
    %87 = arith.mulf %19, %86 : vector<104x1xf32>
    %88 = vector.broadcast %72 : f32 to vector<104x1xf32>
    %89 = arith.mulf %23, %88 : vector<104x1xf32>
    %90 = arith.addf %87, %89 : vector<104x1xf32>
    %91 = vector.broadcast %73 : f32 to vector<104x1xf32>
    %92 = arith.mulf %29, %91 : vector<104x1xf32>
    %93 = arith.addf %90, %92 : vector<104x1xf32>
    %94 = vector.broadcast %74 : f32 to vector<104x1xf32>
    %95 = arith.mulf %8, %94 : vector<104x1xf32>
    %96 = arith.addf %93, %95 : vector<104x1xf32>
    %cst_12 = arith.constant 2.000000e+00 : f32
    %97 = arith.mulf %cst_12, %72 : f32
    %98 = arith.subf %73, %97 : f32
    %99 = arith.addf %98, %71 : f32
    %100 = vector.broadcast %99 : f32 to vector<104x1xf32>
    %101 = arith.mulf %31, %100 : vector<104x1xf32>
    %cst_13 = arith.constant 2.000000e+00 : f32
    %102 = arith.mulf %cst_13, %73 : f32
    %103 = arith.subf %74, %102 : f32
    %104 = arith.addf %103, %72 : f32
    %105 = vector.broadcast %104 : f32 to vector<104x1xf32>
    %106 = arith.mulf %33, %105 : vector<104x1xf32>
    %107 = arith.addf %101, %106 : vector<104x1xf32>
    %c2 = arith.constant 2 : index
    %108 = memref.load %arg0[%c2] : memref<12xf32, #tpu.memory_space<smem>>
    %c5 = arith.constant 5 : index
    %109 = memref.load %arg0[%c5] : memref<12xf32, #tpu.memory_space<smem>>
    %c8 = arith.constant 8 : index
    %110 = memref.load %arg0[%c8] : memref<12xf32, #tpu.memory_space<smem>>
    %c11 = arith.constant 11 : index
    %111 = memref.load %arg0[%c11] : memref<12xf32, #tpu.memory_space<smem>>
    %112 = vector.broadcast %108 : f32 to vector<104x1xf32>
    %113 = arith.mulf %10, %112 : vector<104x1xf32>
    %114 = vector.broadcast %109 : f32 to vector<104x1xf32>
    %115 = arith.mulf %13, %114 : vector<104x1xf32>
    %116 = arith.addf %113, %115 : vector<104x1xf32>
    %117 = vector.broadcast %110 : f32 to vector<104x1xf32>
    %118 = arith.mulf %16, %117 : vector<104x1xf32>
    %119 = arith.addf %116, %118 : vector<104x1xf32>
    %120 = vector.broadcast %111 : f32 to vector<104x1xf32>
    %121 = arith.mulf %17, %120 : vector<104x1xf32>
    %122 = arith.addf %119, %121 : vector<104x1xf32>
    %123 = vector.broadcast %108 : f32 to vector<104x1xf32>
    %124 = arith.mulf %19, %123 : vector<104x1xf32>
    %125 = vector.broadcast %109 : f32 to vector<104x1xf32>
    %126 = arith.mulf %23, %125 : vector<104x1xf32>
    %127 = arith.addf %124, %126 : vector<104x1xf32>
    %128 = vector.broadcast %110 : f32 to vector<104x1xf32>
    %129 = arith.mulf %29, %128 : vector<104x1xf32>
    %130 = arith.addf %127, %129 : vector<104x1xf32>
    %131 = vector.broadcast %111 : f32 to vector<104x1xf32>
    %132 = arith.mulf %8, %131 : vector<104x1xf32>
    %133 = arith.addf %130, %132 : vector<104x1xf32>
    %cst_14 = arith.constant 2.000000e+00 : f32
    %134 = arith.mulf %cst_14, %109 : f32
    %135 = arith.subf %110, %134 : f32
    %136 = arith.addf %135, %108 : f32
    %137 = vector.broadcast %136 : f32 to vector<104x1xf32>
    %138 = arith.mulf %31, %137 : vector<104x1xf32>
    %cst_15 = arith.constant 2.000000e+00 : f32
    %139 = arith.mulf %cst_15, %110 : f32
    %140 = arith.subf %111, %139 : f32
    %141 = arith.addf %140, %109 : f32
    %142 = vector.broadcast %141 : f32 to vector<104x1xf32>
    %143 = arith.mulf %33, %142 : vector<104x1xf32>
    %144 = arith.addf %138, %143 : vector<104x1xf32>
    %c0_16 = arith.constant 0 : index
    %145 = memref.load %arg1[%c0_16] : memref<16xf32, #tpu.memory_space<smem>>
    %c1_17 = arith.constant 1 : index
    %146 = memref.load %arg1[%c1_17] : memref<16xf32, #tpu.memory_space<smem>>
    %c2_18 = arith.constant 2 : index
    %147 = memref.load %arg1[%c2_18] : memref<16xf32, #tpu.memory_space<smem>>
    %c3_19 = arith.constant 3 : index
    %148 = memref.load %arg1[%c3_19] : memref<16xf32, #tpu.memory_space<smem>>
    %149 = vector.broadcast %145 : f32 to vector<104x1xf32>
    %150 = arith.mulf %149, %48 : vector<104x1xf32>
    %151 = vector.broadcast %146 : f32 to vector<104x1xf32>
    %152 = arith.mulf %151, %85 : vector<104x1xf32>
    %153 = arith.addf %150, %152 : vector<104x1xf32>
    %154 = vector.broadcast %147 : f32 to vector<104x1xf32>
    %155 = arith.mulf %154, %122 : vector<104x1xf32>
    %156 = arith.addf %153, %155 : vector<104x1xf32>
    %157 = vector.broadcast %148 : f32 to vector<104x1xf32>
    %158 = arith.addf %156, %157 : vector<104x1xf32>
    %159 = vector.broadcast %145 : f32 to vector<104x1xf32>
    %160 = arith.mulf %159, %59 : vector<104x1xf32>
    %161 = vector.broadcast %146 : f32 to vector<104x1xf32>
    %162 = arith.mulf %161, %96 : vector<104x1xf32>
    %163 = arith.addf %160, %162 : vector<104x1xf32>
    %164 = vector.broadcast %147 : f32 to vector<104x1xf32>
    %165 = arith.mulf %164, %133 : vector<104x1xf32>
    %166 = arith.addf %163, %165 : vector<104x1xf32>
    %167 = vector.broadcast %145 : f32 to vector<104x1xf32>
    %168 = arith.mulf %167, %70 : vector<104x1xf32>
    %169 = vector.broadcast %146 : f32 to vector<104x1xf32>
    %170 = arith.mulf %169, %107 : vector<104x1xf32>
    %171 = arith.addf %168, %170 : vector<104x1xf32>
    %172 = vector.broadcast %147 : f32 to vector<104x1xf32>
    %173 = arith.mulf %172, %144 : vector<104x1xf32>
    %174 = arith.addf %171, %173 : vector<104x1xf32>
    %c4_20 = arith.constant 4 : index
    %175 = memref.load %arg1[%c4_20] : memref<16xf32, #tpu.memory_space<smem>>
    %c5_21 = arith.constant 5 : index
    %176 = memref.load %arg1[%c5_21] : memref<16xf32, #tpu.memory_space<smem>>
    %c6_22 = arith.constant 6 : index
    %177 = memref.load %arg1[%c6_22] : memref<16xf32, #tpu.memory_space<smem>>
    %c7_23 = arith.constant 7 : index
    %178 = memref.load %arg1[%c7_23] : memref<16xf32, #tpu.memory_space<smem>>
    %179 = vector.broadcast %175 : f32 to vector<104x1xf32>
    %180 = arith.mulf %179, %48 : vector<104x1xf32>
    %181 = vector.broadcast %176 : f32 to vector<104x1xf32>
    %182 = arith.mulf %181, %85 : vector<104x1xf32>
    %183 = arith.addf %180, %182 : vector<104x1xf32>
    %184 = vector.broadcast %177 : f32 to vector<104x1xf32>
    %185 = arith.mulf %184, %122 : vector<104x1xf32>
    %186 = arith.addf %183, %185 : vector<104x1xf32>
    %187 = vector.broadcast %178 : f32 to vector<104x1xf32>
    %188 = arith.addf %186, %187 : vector<104x1xf32>
    %189 = vector.broadcast %175 : f32 to vector<104x1xf32>
    %190 = arith.mulf %189, %59 : vector<104x1xf32>
    %191 = vector.broadcast %176 : f32 to vector<104x1xf32>
    %192 = arith.mulf %191, %96 : vector<104x1xf32>
    %193 = arith.addf %190, %192 : vector<104x1xf32>
    %194 = vector.broadcast %177 : f32 to vector<104x1xf32>
    %195 = arith.mulf %194, %133 : vector<104x1xf32>
    %196 = arith.addf %193, %195 : vector<104x1xf32>
    %197 = vector.broadcast %175 : f32 to vector<104x1xf32>
    %198 = arith.mulf %197, %70 : vector<104x1xf32>
    %199 = vector.broadcast %176 : f32 to vector<104x1xf32>
    %200 = arith.mulf %199, %107 : vector<104x1xf32>
    %201 = arith.addf %198, %200 : vector<104x1xf32>
    %202 = vector.broadcast %177 : f32 to vector<104x1xf32>
    %203 = arith.mulf %202, %144 : vector<104x1xf32>
    %204 = arith.addf %201, %203 : vector<104x1xf32>
    %c8_24 = arith.constant 8 : index
    %205 = memref.load %arg1[%c8_24] : memref<16xf32, #tpu.memory_space<smem>>
    %c9_25 = arith.constant 9 : index
    %206 = memref.load %arg1[%c9_25] : memref<16xf32, #tpu.memory_space<smem>>
    %c10_26 = arith.constant 10 : index
    %207 = memref.load %arg1[%c10_26] : memref<16xf32, #tpu.memory_space<smem>>
    %c11_27 = arith.constant 11 : index
    %208 = memref.load %arg1[%c11_27] : memref<16xf32, #tpu.memory_space<smem>>
    %209 = vector.broadcast %205 : f32 to vector<104x1xf32>
    %210 = arith.mulf %209, %48 : vector<104x1xf32>
    %211 = vector.broadcast %206 : f32 to vector<104x1xf32>
    %212 = arith.mulf %211, %85 : vector<104x1xf32>
    %213 = arith.addf %210, %212 : vector<104x1xf32>
    %214 = vector.broadcast %207 : f32 to vector<104x1xf32>
    %215 = arith.mulf %214, %122 : vector<104x1xf32>
    %216 = arith.addf %213, %215 : vector<104x1xf32>
    %217 = vector.broadcast %208 : f32 to vector<104x1xf32>
    %218 = arith.addf %216, %217 : vector<104x1xf32>
    %219 = vector.broadcast %205 : f32 to vector<104x1xf32>
    %220 = arith.mulf %219, %59 : vector<104x1xf32>
    %221 = vector.broadcast %206 : f32 to vector<104x1xf32>
    %222 = arith.mulf %221, %96 : vector<104x1xf32>
    %223 = arith.addf %220, %222 : vector<104x1xf32>
    %224 = vector.broadcast %207 : f32 to vector<104x1xf32>
    %225 = arith.mulf %224, %133 : vector<104x1xf32>
    %226 = arith.addf %223, %225 : vector<104x1xf32>
    %227 = vector.broadcast %205 : f32 to vector<104x1xf32>
    %228 = arith.mulf %227, %70 : vector<104x1xf32>
    %229 = vector.broadcast %206 : f32 to vector<104x1xf32>
    %230 = arith.mulf %229, %107 : vector<104x1xf32>
    %231 = arith.addf %228, %230 : vector<104x1xf32>
    %232 = vector.broadcast %207 : f32 to vector<104x1xf32>
    %233 = arith.mulf %232, %144 : vector<104x1xf32>
    %234 = arith.addf %231, %233 : vector<104x1xf32>
    %cst_28 = arith.constant 1.000000e+00 : f32
    %235 = vector.broadcast %cst_28 : f32 to vector<104x1xf32>
    %236 = arith.divf %235, %218 : vector<104x1xf32>
    %237 = arith.mulf %158, %236 : vector<104x1xf32>
    %238 = arith.mulf %188, %236 : vector<104x1xf32>
    %c0_29 = arith.constant 0 : index
    %239 = memref.load %arg2[%c0_29] : memref<9xf32, #tpu.memory_space<smem>>
    %240 = vector.broadcast %239 : f32 to vector<104x1xf32>
    %241 = arith.mulf %240, %237 : vector<104x1xf32>
    %c1_30 = arith.constant 1 : index
    %242 = memref.load %arg2[%c1_30] : memref<9xf32, #tpu.memory_space<smem>>
    %243 = vector.broadcast %242 : f32 to vector<104x1xf32>
    %244 = arith.mulf %243, %238 : vector<104x1xf32>
    %245 = arith.addf %241, %244 : vector<104x1xf32>
    %c2_31 = arith.constant 2 : index
    %246 = memref.load %arg2[%c2_31] : memref<9xf32, #tpu.memory_space<smem>>
    %247 = vector.broadcast %246 : f32 to vector<104x1xf32>
    %248 = arith.addf %245, %247 : vector<104x1xf32>
    %c3_32 = arith.constant 3 : index
    %249 = memref.load %arg2[%c3_32] : memref<9xf32, #tpu.memory_space<smem>>
    %250 = vector.broadcast %249 : f32 to vector<104x1xf32>
    %251 = arith.mulf %250, %237 : vector<104x1xf32>
    %c4_33 = arith.constant 4 : index
    %252 = memref.load %arg2[%c4_33] : memref<9xf32, #tpu.memory_space<smem>>
    %253 = vector.broadcast %252 : f32 to vector<104x1xf32>
    %254 = arith.mulf %253, %238 : vector<104x1xf32>
    %255 = arith.addf %251, %254 : vector<104x1xf32>
    %c5_34 = arith.constant 5 : index
    %256 = memref.load %arg2[%c5_34] : memref<9xf32, #tpu.memory_space<smem>>
    %257 = vector.broadcast %256 : f32 to vector<104x1xf32>
    %258 = arith.addf %255, %257 : vector<104x1xf32>
    %259 = arith.mulf %107, %133 : vector<104x1xf32>
    %260 = arith.mulf %144, %96 : vector<104x1xf32>
    %261 = arith.subf %259, %260 : vector<104x1xf32>
    %262 = arith.mulf %144, %59 : vector<104x1xf32>
    %263 = arith.mulf %70, %133 : vector<104x1xf32>
    %264 = arith.subf %262, %263 : vector<104x1xf32>
    %265 = arith.mulf %70, %96 : vector<104x1xf32>
    %266 = arith.mulf %107, %59 : vector<104x1xf32>
    %267 = arith.subf %265, %266 : vector<104x1xf32>
    %268 = arith.mulf %96, %267 : vector<104x1xf32>
    %269 = arith.mulf %133, %264 : vector<104x1xf32>
    %270 = arith.subf %268, %269 : vector<104x1xf32>
    %271 = arith.mulf %133, %261 : vector<104x1xf32>
    %272 = arith.mulf %59, %267 : vector<104x1xf32>
    %273 = arith.subf %271, %272 : vector<104x1xf32>
    %274 = arith.mulf %59, %264 : vector<104x1xf32>
    %275 = arith.mulf %96, %261 : vector<104x1xf32>
    %276 = arith.subf %274, %275 : vector<104x1xf32>
    %277 = arith.mulf %59, %59 : vector<104x1xf32>
    %278 = arith.mulf %96, %96 : vector<104x1xf32>
    %279 = arith.addf %277, %278 : vector<104x1xf32>
    %280 = arith.mulf %133, %133 : vector<104x1xf32>
    %281 = arith.addf %279, %280 : vector<104x1xf32>
    %282 = math.sqrt %281 : vector<104x1xf32>
    %283 = arith.mulf %261, %261 : vector<104x1xf32>
    %284 = arith.mulf %264, %264 : vector<104x1xf32>
    %285 = arith.addf %283, %284 : vector<104x1xf32>
    %286 = arith.mulf %267, %267 : vector<104x1xf32>
    %287 = arith.addf %285, %286 : vector<104x1xf32>
    %288 = math.sqrt %287 : vector<104x1xf32>
    %289 = arith.mulf %282, %288 : vector<104x1xf32>
    %cst_35 = arith.constant 9.99999974E-5 : f32
    %290 = vector.broadcast %cst_35 : f32 to vector<104x1xf32>
    %291 = arith.addf %289, %290 : vector<104x1xf32>
    %292 = tpu.reciprocal %291 {approx = true} : vector<104x1xf32> -> vector<104x1xf32>
    %293 = arith.mulf %270, %292 : vector<104x1xf32>
    %294 = arith.mulf %273, %292 : vector<104x1xf32>
    %295 = arith.mulf %276, %292 : vector<104x1xf32>
    %cst_36 = arith.constant 9.99999974E-5 : f32
    %296 = vector.broadcast %cst_36 : f32 to vector<104x1xf32>
    %297 = arith.addf %288, %296 : vector<104x1xf32>
    %298 = tpu.reciprocal %297 {approx = true} : vector<104x1xf32> -> vector<104x1xf32>
    %cst_37 = arith.constant 0.000000e+00 : f32
    %299 = vector.broadcast %cst_37 : f32 to vector<104x1xf32>
    %300 = arith.subf %299, %261 : vector<104x1xf32>
    %301 = arith.mulf %300, %298 : vector<104x1xf32>
    %cst_38 = arith.constant 0.000000e+00 : f32
    %302 = vector.broadcast %cst_38 : f32 to vector<104x1xf32>
    %303 = arith.subf %302, %264 : vector<104x1xf32>
    %304 = arith.mulf %303, %298 : vector<104x1xf32>
    %cst_39 = arith.constant 0.000000e+00 : f32
    %305 = vector.broadcast %cst_39 : f32 to vector<104x1xf32>
    %306 = arith.subf %305, %267 : vector<104x1xf32>
    %307 = arith.mulf %306, %298 : vector<104x1xf32>
    %c0_40 = arith.constant 0 : index
    %c0_41 = arith.constant 0 : index
    %308 = vector.load %arg4[%c0_40, %c0_41] : memref<104x20xf32, #tpu.memory_space<vmem>>, vector<104x1xf32>
    tpu.vector_store %arg4[%c0_40, %c0_41], %48 {strides = array<i32>} : memref<104x20xf32, #tpu.memory_space<vmem>>, vector<104x1xf32>,
    %c0_42 = arith.constant 0 : index
    %c1_43 = arith.constant 1 : index
    %309 = vector.load %arg4[%c0_42, %c1_43] : memref<104x20xf32, #tpu.memory_space<vmem>>, vector<104x1xf32>
    tpu.vector_store %arg4[%c0_42, %c1_43], %85 {strides = array<i32>} : memref<104x20xf32, #tpu.memory_space<vmem>>, vector<104x1xf32>,
    %c0_44 = arith.constant 0 : index
    %c2_45 = arith.constant 2 : index
    %310 = vector.load %arg4[%c0_44, %c2_45] : memref<104x20xf32, #tpu.memory_space<vmem>>, vector<104x1xf32>
    tpu.vector_store %arg4[%c0_44, %c2_45], %122 {strides = array<i32>} : memref<104x20xf32, #tpu.memory_space<vmem>>, vector<104x1xf32>,
    %c0_46 = arith.constant 0 : index
    %c3_47 = arith.constant 3 : index
    %311 = vector.load %arg4[%c0_46, %c3_47] : memref<104x20xf32, #tpu.memory_space<vmem>>, vector<104x1xf32>
    tpu.vector_store %arg4[%c0_46, %c3_47], %158 {strides = array<i32>} : memref<104x20xf32, #tpu.memory_space<vmem>>, vector<104x1xf32>,
    %c0_48 = arith.constant 0 : index
    %c4_49 = arith.constant 4 : index
    %312 = vector.load %arg4[%c0_48, %c4_49] : memref<104x20xf32, #tpu.memory_space<vmem>>, vector<104x1xf32>
    tpu.vector_store %arg4[%c0_48, %c4_49], %188 {strides = array<i32>} : memref<104x20xf32, #tpu.memory_space<vmem>>, vector<104x1xf32>,
    %c0_50 = arith.constant 0 : index
    %c5_51 = arith.constant 5 : index
    %313 = vector.load %arg4[%c0_50, %c5_51] : memref<104x20xf32, #tpu.memory_space<vmem>>, vector<104x1xf32>
    tpu.vector_store %arg4[%c0_50, %c5_51], %218 {strides = array<i32>} : memref<104x20xf32, #tpu.memory_space<vmem>>, vector<104x1xf32>,
    %c0_52 = arith.constant 0 : index
    %c6_53 = arith.constant 6 : index
    %314 = vector.load %arg4[%c0_52, %c6_53] : memref<104x20xf32, #tpu.memory_space<vmem>>, vector<104x1xf32>
    tpu.vector_store %arg4[%c0_52, %c6_53], %166 {strides = array<i32>} : memref<104x20xf32, #tpu.memory_space<vmem>>, vector<104x1xf32>,
    %c0_54 = arith.constant 0 : index
    %c7_55 = arith.constant 7 : index
    %315 = vector.load %arg4[%c0_54, %c7_55] : memref<104x20xf32, #tpu.memory_space<vmem>>, vector<104x1xf32>
    tpu.vector_store %arg4[%c0_54, %c7_55], %196 {strides = array<i32>} : memref<104x20xf32, #tpu.memory_space<vmem>>, vector<104x1xf32>,
    %c0_56 = arith.constant 0 : index
    %c8_57 = arith.constant 8 : index
    %316 = vector.load %arg4[%c0_56, %c8_57] : memref<104x20xf32, #tpu.memory_space<vmem>>, vector<104x1xf32>
    tpu.vector_store %arg4[%c0_56, %c8_57], %226 {strides = array<i32>} : memref<104x20xf32, #tpu.memory_space<vmem>>, vector<104x1xf32>,
    %c0_58 = arith.constant 0 : index
    %c9_59 = arith.constant 9 : index
    %317 = vector.load %arg4[%c0_58, %c9_59] : memref<104x20xf32, #tpu.memory_space<vmem>>, vector<104x1xf32>
    tpu.vector_store %arg4[%c0_58, %c9_59], %174 {strides = array<i32>} : memref<104x20xf32, #tpu.memory_space<vmem>>, vector<104x1xf32>,
    %c0_60 = arith.constant 0 : index
    %c10_61 = arith.constant 10 : index
    %318 = vector.load %arg4[%c0_60, %c10_61] : memref<104x20xf32, #tpu.memory_space<vmem>>, vector<104x1xf32>
    tpu.vector_store %arg4[%c0_60, %c10_61], %204 {strides = array<i32>} : memref<104x20xf32, #tpu.memory_space<vmem>>, vector<104x1xf32>,
    %c0_62 = arith.constant 0 : index
    %c11_63 = arith.constant 11 : index
    %319 = vector.load %arg4[%c0_62, %c11_63] : memref<104x20xf32, #tpu.memory_space<vmem>>, vector<104x1xf32>
    tpu.vector_store %arg4[%c0_62, %c11_63], %234 {strides = array<i32>} : memref<104x20xf32, #tpu.memory_space<vmem>>, vector<104x1xf32>,
    %c0_64 = arith.constant 0 : index
    %c12 = arith.constant 12 : index
    %320 = vector.load %arg4[%c0_64, %c12] : memref<104x20xf32, #tpu.memory_space<vmem>>, vector<104x1xf32>
    tpu.vector_store %arg4[%c0_64, %c12], %248 {strides = array<i32>} : memref<104x20xf32, #tpu.memory_space<vmem>>, vector<104x1xf32>,
    %c0_65 = arith.constant 0 : index
    %c13 = arith.constant 13 : index
    %321 = vector.load %arg4[%c0_65, %c13] : memref<104x20xf32, #tpu.memory_space<vmem>>, vector<104x1xf32>
    tpu.vector_store %arg4[%c0_65, %c13], %258 {strides = array<i32>} : memref<104x20xf32, #tpu.memory_space<vmem>>, vector<104x1xf32>,
    %c0_66 = arith.constant 0 : index
    %c14 = arith.constant 14 : index
    %322 = vector.load %arg4[%c0_66, %c14] : memref<104x20xf32, #tpu.memory_space<vmem>>, vector<104x1xf32>
    tpu.vector_store %arg4[%c0_66, %c14], %293 {strides = array<i32>} : memref<104x20xf32, #tpu.memory_space<vmem>>, vector<104x1xf32>,
    %c0_67 = arith.constant 0 : index
    %c15 = arith.constant 15 : index
    %323 = vector.load %arg4[%c0_67, %c15] : memref<104x20xf32, #tpu.memory_space<vmem>>, vector<104x1xf32>
    tpu.vector_store %arg4[%c0_67, %c15], %294 {strides = array<i32>} : memref<104x20xf32, #tpu.memory_space<vmem>>, vector<104x1xf32>,
    %c0_68 = arith.constant 0 : index
    %c16 = arith.constant 16 : index
    %324 = vector.load %arg4[%c0_68, %c16] : memref<104x20xf32, #tpu.memory_space<vmem>>, vector<104x1xf32>
    tpu.vector_store %arg4[%c0_68, %c16], %295 {strides = array<i32>} : memref<104x20xf32, #tpu.memory_space<vmem>>, vector<104x1xf32>,
    %c0_69 = arith.constant 0 : index
    %c17 = arith.constant 17 : index
    %325 = vector.load %arg4[%c0_69, %c17] : memref<104x20xf32, #tpu.memory_space<vmem>>, vector<104x1xf32>
    tpu.vector_store %arg4[%c0_69, %c17], %301 {strides = array<i32>} : memref<104x20xf32, #tpu.memory_space<vmem>>, vector<104x1xf32>,
    %c0_70 = arith.constant 0 : index
    %c18 = arith.constant 18 : index
    %326 = vector.load %arg4[%c0_70, %c18] : memref<104x20xf32, #tpu.memory_space<vmem>>, vector<104x1xf32>
    tpu.vector_store %arg4[%c0_70, %c18], %304 {strides = array<i32>} : memref<104x20xf32, #tpu.memory_space<vmem>>, vector<104x1xf32>,
    %c0_71 = arith.constant 0 : index
    %c19 = arith.constant 19 : index
    %327 = vector.load %arg4[%c0_71, %c19] : memref<104x20xf32, #tpu.memory_space<vmem>>, vector<104x1xf32>
    tpu.vector_store %arg4[%c0_71, %c19], %307 {strides = array<i32>} : memref<104x20xf32, #tpu.memory_space<vmem>>, vector<104x1xf32>,
    %c0_72 = arith.constant 0 : index
    %c0_73 = arith.constant 0 : index
    %328 = vector.load %arg3[%c0_72, %c0_73] : memref<9x256xf32, #tpu.memory_space<vmem>>, vector<1x256xf32>
    %c3_74 = arith.constant 3 : index
    %c0_75 = arith.constant 0 : index
    %329 = vector.load %arg3[%c3_74, %c0_75] : memref<9x256xf32, #tpu.memory_space<vmem>>, vector<1x256xf32>
    %c6_76 = arith.constant 6 : index
    %c0_77 = arith.constant 0 : index
    %330 = vector.load %arg3[%c6_76, %c0_77] : memref<9x256xf32, #tpu.memory_space<vmem>>, vector<1x256xf32>
    %331 = vector.broadcast %328 : vector<1x256xf32> to vector<104x256xf32>
    %332 = vector.broadcast %48 : vector<104x1xf32> to vector<104x256xf32>
    %333 = arith.mulf %331, %332 : vector<104x256xf32>
    %334 = vector.broadcast %329 : vector<1x256xf32> to vector<104x256xf32>
    %335 = vector.broadcast %293 : vector<104x1xf32> to vector<104x256xf32>
    %336 = arith.mulf %334, %335 : vector<104x256xf32>
    %337 = arith.addf %333, %336 : vector<104x256xf32>
    %338 = vector.broadcast %330 : vector<1x256xf32> to vector<104x256xf32>
    %339 = vector.broadcast %301 : vector<104x1xf32> to vector<104x256xf32>
    %340 = arith.mulf %338, %339 : vector<104x256xf32>
    %341 = arith.addf %337, %340 : vector<104x256xf32>
    %c1_78 = arith.constant 1 : index
    %c0_79 = arith.constant 0 : index
    %342 = vector.load %arg3[%c1_78, %c0_79] : memref<9x256xf32, #tpu.memory_space<vmem>>, vector<1x256xf32>
    %c4_80 = arith.constant 4 : index
    %c0_81 = arith.constant 0 : index
    %343 = vector.load %arg3[%c4_80, %c0_81] : memref<9x256xf32, #tpu.memory_space<vmem>>, vector<1x256xf32>
    %c7_82 = arith.constant 7 : index
    %c0_83 = arith.constant 0 : index
    %344 = vector.load %arg3[%c7_82, %c0_83] : memref<9x256xf32, #tpu.memory_space<vmem>>, vector<1x256xf32>
    %345 = vector.broadcast %342 : vector<1x256xf32> to vector<104x256xf32>
    %346 = vector.broadcast %85 : vector<104x1xf32> to vector<104x256xf32>
    %347 = arith.mulf %345, %346 : vector<104x256xf32>
    %348 = vector.broadcast %343 : vector<1x256xf32> to vector<104x256xf32>
    %349 = vector.broadcast %294 : vector<104x1xf32> to vector<104x256xf32>
    %350 = arith.mulf %348, %349 : vector<104x256xf32>
    %351 = arith.addf %347, %350 : vector<104x256xf32>
    %352 = vector.broadcast %344 : vector<1x256xf32> to vector<104x256xf32>
    %353 = vector.broadcast %304 : vector<104x1xf32> to vector<104x256xf32>
    %354 = arith.mulf %352, %353 : vector<104x256xf32>
    %355 = arith.addf %351, %354 : vector<104x256xf32>
    %356 = arith.addf %341, %355 : vector<104x256xf32>
    %c2_84 = arith.constant 2 : index
    %c0_85 = arith.constant 0 : index
    %357 = vector.load %arg3[%c2_84, %c0_85] : memref<9x256xf32, #tpu.memory_space<vmem>>, vector<1x256xf32>
    %c5_86 = arith.constant 5 : index
    %c0_87 = arith.constant 0 : index
    %358 = vector.load %arg3[%c5_86, %c0_87] : memref<9x256xf32, #tpu.memory_space<vmem>>, vector<1x256xf32>
    %c8_88 = arith.constant 8 : index
    %c0_89 = arith.constant 0 : index
    %359 = vector.load %arg3[%c8_88, %c0_89] : memref<9x256xf32, #tpu.memory_space<vmem>>, vector<1x256xf32>
    %360 = vector.broadcast %357 : vector<1x256xf32> to vector<104x256xf32>
    %361 = vector.broadcast %122 : vector<104x1xf32> to vector<104x256xf32>
    %362 = arith.mulf %360, %361 : vector<104x256xf32>
    %363 = vector.broadcast %358 : vector<1x256xf32> to vector<104x256xf32>
    %364 = vector.broadcast %295 : vector<104x1xf32> to vector<104x256xf32>
    %365 = arith.mulf %363, %364 : vector<104x256xf32>
    %366 = arith.addf %362, %365 : vector<104x256xf32>
    %367 = vector.broadcast %359 : vector<1x256xf32> to vector<104x256xf32>
    %368 = vector.broadcast %307 : vector<104x1xf32> to vector<104x256xf32>
    %369 = arith.mulf %367, %368 : vector<104x256xf32>
    %370 = arith.addf %366, %369 : vector<104x256xf32>
    %371 = arith.addf %356, %370 : vector<104x256xf32>
    %c0_90 = arith.constant 0 : index
    %c0_91 = arith.constant 0 : index
    %372 = vector.load %arg5[%c0_90, %c0_91] : memref<104x256xf32, #tpu.memory_space<vmem>>, vector<104x256xf32>
    tpu.vector_store %arg5[%c0_90, %c0_91], %371 {strides = array<i32>} : memref<104x256xf32, #tpu.memory_space<vmem>>, vector<104x256xf32>,
    return
  }
}

</mosaic_0001>

<llo_original>
// kernel: construction_bezier_forward.1
$region0: #{construction_bezier_forward.1}
  #allocation0 [shape = 'u32[]', space=smem, size = 0x4, offset = 0x4, fixed_abs, tag = 'smem constant byte address 0x4 - core index']
  #allocation1 [shape = 'u32[72,128]{1,0:T(1,128)}', space=vmem, size = 0x9000, scoped, tag = 'internal scratch']
  %s0 = inlined_call_operand.vmem [shape: f32[12], index: 0, kind: input, shape index: {}]
  %s1 = inlined_call_operand.vmem [shape: f32[16], index: 1, kind: input, shape index: {}]
  %s2 = inlined_call_operand.vmem [shape: f32[9], index: 2, kind: input, shape index: {}]
  %s3 = inlined_call_operand.vmem [shape: f32[9,256], index: 3, kind: input, shape index: {}]
  %s4 = inlined_call_operand.vmem [shape: f32[104,20], index: 4, kind: output, shape index: {0}]
  %s5 = inlined_call_operand.vmem [shape: f32[104,256], index: 5, kind: output, shape index: {1}]
  %6 = xla_tuple %s4, %s5
  %s7 = sld [smem:[#allocation0]]
  $region46: #{construction_bezier_forward.1} parent=0
    _
  %s9 = ssub.s32 1, %s7
  %s10 = scalar_select 0, %s9, %s7
  $region1: #{construction_bezier_forward.1} parent=0
    #allocation2 [shape = 'u8[512]{0}', space=smem, size = 0x200, scoped, tag = 'input window, operand 0, single buffered']
    #allocation3 [shape = 's32[1]{0}', space=sflag, size = 0x4, scoped, tag = 'scoped memory for construction_bezier_forward.1']
    #allocation4 [shape = 'u8[512]{0}', space=smem, size = 0x200, scoped, tag = 'input window, operand 1, single buffered']
    #allocation5 [shape = 's32[1]{0}', space=sflag, size = 0x4, scoped, tag = 'scoped memory for construction_bezier_forward.1']
    #allocation6 [shape = 'u8[512]{0}', space=smem, size = 0x200, scoped, tag = 'input window, operand 2, single buffered']
    %11 = vsyncpa [#allocation3], 0
    %12 = vsyncpa [#allocation5], 0
    // Predicated region
    $region2: #{construction_bezier_forward.1} parent=1 // pred_check
      _
    $region3: #{construction_bezier_forward.1} parent=1 // pred_check_branch
      %14 = sbr.rel (0) target = $region5
    $region4: #{construction_bezier_forward.1} parent=1 // pred_region
      %16 = vsyncadd [#allocation3], 0
      %s18 = sshll.u32 %s0, 4
      %s19 = int_to_ptr.vmem [resolvable:$true] %s18
      %21 = dma.vmem_to_smem %s19, 16, [#allocation2], [#allocation3]
    $region5: #{construction_bezier_forward.1} parent=1 // pred_fallthru
      _
    // Predicated region
    $region6: #{construction_bezier_forward.1} parent=1 // pred_check
      _
    $region7: #{construction_bezier_forward.1} parent=1 // pred_check_branch
      %23 = sbr.rel (0) target = $region9
    $region8: #{construction_bezier_forward.1} parent=1 // pred_region
      %25 = vsyncadd [#allocation5], 0
      %s27 = sshll.u32 %s1, 4
      %s28 = int_to_ptr.vmem [resolvable:$true] %s27
      %30 = dma.vmem_to_smem %s28, 16, [#allocation4], [#allocation5]
    $region9: #{construction_bezier_forward.1} parent=1 // pred_fallthru
      _
    // Predicated region
    $region10: #{construction_bezier_forward.1} parent=1 // pred_check
      _
    $region11: #{construction_bezier_forward.1} parent=1 // pred_check_branch
      %32 = sbr.rel (0) target = $region13
    $region12: #{construction_bezier_forward.1} parent=1 // pred_region
      %34 = vsyncadd [#allocation5], 0
      %s36 = sshll.u32 %s2, 4
      %s37 = int_to_ptr.vmem [resolvable:$true] %s36
      %39 = dma.vmem_to_smem %s37, 16, [#allocation6], [#allocation5]
    $region13: #{construction_bezier_forward.1} parent=1 // pred_fallthru
      _
    // Predicated region
    $region14: #{construction_bezier_forward.1} parent=1 // pred_check
      _
    $region15: #{construction_bezier_forward.1} parent=1 // pred_check_branch
      %41 = sbr.rel (0) target = $region17
    $region16: #{construction_bezier_forward.1} parent=1 // pred_region
      _
    $region17: #{construction_bezier_forward.1} parent=1 // pred_fallthru
      _
    // Predicated region
    $region18: #{construction_bezier_forward.1} parent=1 // pred_check
      _
    $region19: #{construction_bezier_forward.1} parent=1 // pred_check_branch
      %43 = sbr.rel (0) target = $region21
    $region20: #{construction_bezier_forward.1} parent=1 // pred_region
      %45 = dma.done [#allocation3], 16
    $region21: #{construction_bezier_forward.1} parent=1 // pred_fallthru
      _
    // Predicated region
    $region22: #{construction_bezier_forward.1} parent=1 // pred_check
      _
    $region23: #{construction_bezier_forward.1} parent=1 // pred_check_branch
      %47 = sbr.rel (0) target = $region25
    $region24: #{construction_bezier_forward.1} parent=1 // pred_region
      %49 = dma.done [#allocation5], 16
    $region25: #{construction_bezier_forward.1} parent=1 // pred_fallthru
      _
    // Predicated region
    $region26: #{construction_bezier_forward.1} parent=1 // pred_check
      _
    $region27: #{construction_bezier_forward.1} parent=1 // pred_check_branch
      %51 = sbr.rel (0) target = $region29
    $region28: #{construction_bezier_forward.1} parent=1 // pred_region
      %53 = dma.done [#allocation5], 16
    $region29: #{construction_bezier_forward.1} parent=1 // pred_fallthru
      _
    %54 = sfence
    %v55 = vlaneseq
    %v56 = vshrl.u32 %v55, 7
    %v57 = vadd.s32 %v56, 8
    %v58 = vadd.s32 %v56, 16
    %v59 = vadd.s32 %v56, 24
    %v60 = vadd.s32 %v56, 32
    %v61 = vadd.s32 %v56, 40
    %v62 = vadd.s32 %v56, 48
    %v63 = vadd.s32 %v56, 56
    %v64 = vadd.s32 %v56, 64
    %v65 = vadd.s32 %v56, 72
    %v66 = vadd.s32 %v56, 80
    %v67 = vadd.s32 %v56, 88
    %v68 = vadd.s32 %v56, 96
    %v69 = vcvt.s32.f32 %v56
    %v70 = vcvt.s32.f32 %v57
    %v71 = vcvt.s32.f32 %v58
    %v72 = vcvt.s32.f32 %v59
    %v73 = vcvt.s32.f32 %v60
    %v74 = vcvt.s32.f32 %v61
    %v75 = vcvt.s32.f32 %v62
    %v76 = vcvt.s32.f32 %v63
    %v77 = vcvt.s32.f32 %v64
    %v78 = vcvt.s32.f32 %v65
    %v79 = vcvt.s32.f32 %v66
    %v80 = vcvt.s32.f32 %v67
    %v81 = vcvt.s32.f32 %v68
    %v82 = vmul.f32 %v69, 0.01
    %v83 = vmul.f32 %v70, 0.01
    %v84 = vmul.f32 %v71, 0.01
    %v85 = vmul.f32 %v72, 0.01
    %v86 = vmul.f32 %v73, 0.01
    %v87 = vmul.f32 %v74, 0.01
    %v88 = vmul.f32 %v75, 0.01
    %v89 = vmul.f32 %v76, 0.01
    %v90 = vmul.f32 %v77, 0.01
    %v91 = vmul.f32 %v78, 0.01
    %v92 = vmul.f32 %v79, 0.01
    %v93 = vmul.f32 %v80, 0.01
    %v94 = vmul.f32 %v81, 0.01
    %v95 = vmin.f32 %v82, 1.0
    %v96 = vmin.f32 %v83, 1.0
    %v97 = vmin.f32 %v84, 1.0
    %v98 = vmin.f32 %v85, 1.0
    %v99 = vmin.f32 %v86, 1.0
    %v100 = vmin.f32 %v87, 1.0
    %v101 = vmin.f32 %v88, 1.0
    %v102 = vmin.f32 %v89, 1.0
    %v103 = vmin.f32 %v90, 1.0
    %v104 = vmin.f32 %v91, 1.0
    %v105 = vmin.f32 %v92, 1.0
    %v106 = vmin.f32 %v93, 1.0
    %v107 = vmin.f32 %v94, 1.0
    %v108 = vsub.f32 1.0, %v95
    %v109 = vsub.f32 1.0, %v96
    %v110 = vsub.f32 1.0, %v97
    %v111 = vsub.f32 1.0, %v98
    %v112 = vsub.f32 1.0, %v99
    %v113 = vsub.f32 1.0, %v100
    %v114 = vsub.f32 1.0, %v101
    %v115 = vsub.f32 1.0, %v102
    %v116 = vsub.f32 1.0, %v103
    %v117 = vsub.f32 1.0, %v104
    %v118 = vsub.f32 1.0, %v105
    %v119 = vsub.f32 1.0, %v106
    %v120 = vsub.f32 1.0, %v107
    %v121 = vmul.f32 %v95, %v95
    %v122 = vmul.f32 %v96, %v96
    %v123 = vmul.f32 %v97, %v97
    %v124 = vmul.f32 %v98, %v98
    %v125 = vmul.f32 %v99, %v99
    %v126 = vmul.f32 %v100, %v100
    %v127 = vmul.f32 %v101, %v101
    %v128 = vmul.f32 %v102, %v102
    %v129 = vmul.f32 %v103, %v103
    %v130 = vmul.f32 %v104, %v104
    %v131 = vmul.f32 %v105, %v105
    %v132 = vmul.f32 %v106, %v106
    %v133 = vmul.f32 %v107, %v107
    %v134 = vmul.f32 %v108, %v108
    %v135 = vmul.f32 %v109, %v109
    %v136 = vmul.f32 %v110, %v110
    %v137 = vmul.f32 %v111, %v111
    %v138 = vmul.f32 %v112, %v112
    %v139 = vmul.f32 %v113, %v113
    %v140 = vmul.f32 %v114, %v114
    %v141 = vmul.f32 %v115, %v115
    %v142 = vmul.f32 %v116, %v116
    %v143 = vmul.f32 %v117, %v117
    %v144 = vmul.f32 %v118, %v118
    %v145 = vmul.f32 %v119, %v119
    %v146 = vmul.f32 %v120, %v120
    %v147 = vmul.f32 %v134, %v108
    %v148 = vmul.f32 %v135, %v109
    %v149 = vmul.f32 %v136, %v110
    %v150 = vmul.f32 %v137, %v111
    %v151 = vmul.f32 %v138, %v112
    %v152 = vmul.f32 %v139, %v113
    %v153 = vmul.f32 %v140, %v114
    %v154 = vmul.f32 %v141, %v115
    %v155 = vmul.f32 %v142, %v116
    %v156 = vmul.f32 %v143, %v117
    %v157 = vmul.f32 %v144, %v118
    %v158 = vmul.f32 %v145, %v119
    %v159 = vmul.f32 %v146, %v120
    %v160 = vmul.f32 %v95, 3.0
    %v161 = vmul.f32 %v96, 3.0
    %v162 = vmul.f32 %v97, 3.0
    %v163 = vmul.f32 %v98, 3.0
    %v164 = vmul.f32 %v99, 3.0
    %v165 = vmul.f32 %v100, 3.0
    %v166 = vmul.f32 %v101, 3.0
    %v167 = vmul.f32 %v102, 3.0
    %v168 = vmul.f32 %v103, 3.0
    %v169 = vmul.f32 %v104, 3.0
    %v170 = vmul.f32 %v105, 3.0
    %v171 = vmul.f32 %v106, 3.0
    %v172 = vmul.f32 %v107, 3.0
    %v173 = vmul.f32 %v160, %v134
    %v174 = vmul.f32 %v161, %v135
    %v175 = vmul.f32 %v162, %v136
    %v176 = vmul.f32 %v163, %v137
    %v177 = vmul.f32 %v164, %v138
    %v178 = vmul.f32 %v165, %v139
    %v179 = vmul.f32 %v166, %v140
    %v180 = vmul.f32 %v167, %v141
    %v181 = vmul.f32 %v168, %v142
    %v182 = vmul.f32 %v169, %v143
    %v183 = vmul.f32 %v170, %v144
    %v184 = vmul.f32 %v171, %v145
    %v185 = vmul.f32 %v172, %v146
    %v186 = vmul.f32 %v108, 3.0
    %v187 = vmul.f32 %v109, 3.0
    %v188 = vmul.f32 %v110, 3.0
    %v189 = vmul.f32 %v111, 3.0
    %v190 = vmul.f32 %v112, 3.0
    %v191 = vmul.f32 %v113, 3.0
    %v192 = vmul.f32 %v114, 3.0
    %v193 = vmul.f32 %v115, 3.0
    %v194 = vmul.f32 %v116, 3.0
    %v195 = vmul.f32 %v117, 3.0
    %v196 = vmul.f32 %v118, 3.0
    %v197 = vmul.f32 %v119, 3.0
    %v198 = vmul.f32 %v120, 3.0
    %v199 = vmul.f32 %v186, %v121
    %v200 = vmul.f32 %v187, %v122
    %v201 = vmul.f32 %v188, %v123
    %v202 = vmul.f32 %v189, %v124
    %v203 = vmul.f32 %v190, %v125
    %v204 = vmul.f32 %v191, %v126
    %v205 = vmul.f32 %v192, %v127
    %v206 = vmul.f32 %v193, %v128
    %v207 = vmul.f32 %v194, %v129
    %v208 = vmul.f32 %v195, %v130
    %v209 = vmul.f32 %v196, %v131
    %v210 = vmul.f32 %v197, %v132
    %v211 = vmul.f32 %v198, %v133
    %v212 = vmul.f32 %v95, %v121
    %v213 = vmul.f32 %v96, %v122
    %v214 = vmul.f32 %v97, %v123
    %v215 = vmul.f32 %v98, %v124
    %v216 = vmul.f32 %v99, %v125
    %v217 = vmul.f32 %v100, %v126
    %v218 = vmul.f32 %v101, %v127
    %v219 = vmul.f32 %v102, %v128
    %v220 = vmul.f32 %v103, %v129
    %v221 = vmul.f32 %v104, %v130
    %v222 = vmul.f32 %v105, %v131
    %v223 = vmul.f32 %v106, %v132
    %v224 = vmul.f32 %v107, %v133
    %v225 = vsub.f32 0.0, %v134
    %v226 = vsub.f32 0.0, %v135
    %v227 = vsub.f32 0.0, %v136
    %v228 = vsub.f32 0.0, %v137
    %v229 = vsub.f32 0.0, %v138
    %v230 = vsub.f32 0.0, %v139
    %v231 = vsub.f32 0.0, %v140
    %v232 = vsub.f32 0.0, %v141
    %v233 = vsub.f32 0.0, %v142
    %v234 = vsub.f32 0.0, %v143
    %v235 = vsub.f32 0.0, %v144
    %v236 = vsub.f32 0.0, %v145
    %v237 = vsub.f32 0.0, %v146
    %v238 = vmul.f32 %v95, 2.0
    %v239 = vmul.f32 %v96, 2.0
    %v240 = vmul.f32 %v97, 2.0
    %v241 = vmul.f32 %v98, 2.0
    %v242 = vmul.f32 %v99, 2.0
    %v243 = vmul.f32 %v100, 2.0
    %v244 = vmul.f32 %v101, 2.0
    %v245 = vmul.f32 %v102, 2.0
    %v246 = vmul.f32 %v103, 2.0
    %v247 = vmul.f32 %v104, 2.0
    %v248 = vmul.f32 %v105, 2.0
    %v249 = vmul.f32 %v106, 2.0
    %v250 = vmul.f32 %v107, 2.0
    %v251 = vmul.f32 %v238, %v108
    %v252 = vmul.f32 %v239, %v109
    %v253 = vmul.f32 %v240, %v110
    %v254 = vmul.f32 %v241, %v111
    %v255 = vmul.f32 %v242, %v112
    %v256 = vmul.f32 %v243, %v113
    %v257 = vmul.f32 %v244, %v114
    %v258 = vmul.f32 %v245, %v115
    %v259 = vmul.f32 %v246, %v116
    %v260 = vmul.f32 %v247, %v117
    %v261 = vmul.f32 %v248, %v118
    %v262 = vmul.f32 %v249, %v119
    %v263 = vmul.f32 %v250, %v120
    %v264 = vsub.f32 %v134, %v251
    %v265 = vsub.f32 %v135, %v252
    %v266 = vsub.f32 %v136, %v253
    %v267 = vsub.f32 %v137, %v254
    %v268 = vsub.f32 %v138, %v255
    %v269 = vsub.f32 %v139, %v256
    %v270 = vsub.f32 %v140, %v257
    %v271 = vsub.f32 %v141, %v258
    %v272 = vsub.f32 %v142, %v259
    %v273 = vsub.f32 %v143, %v260
    %v274 = vsub.f32 %v144, %v261
    %v275 = vsub.f32 %v145, %v262
    %v276 = vsub.f32 %v146, %v263
    %v277 = vsub.f32 0.0, %v121
    %v278 = vsub.f32 0.0, %v122
    %v279 = vsub.f32 0.0, %v123
    %v280 = vsub.f32 0.0, %v124
    %v281 = vsub.f32 0.0, %v125
    %v282 = vsub.f32 0.0, %v126
    %v283 = vsub.f32 0.0, %v127
    %v284 = vsub.f32 0.0, %v128
    %v285 = vsub.f32 0.0, %v129
    %v286 = vsub.f32 0.0, %v130
    %v287 = vsub.f32 0.0, %v131
    %v288 = vsub.f32 0.0, %v132
    %v289 = vsub.f32 0.0, %v133
    %v290 = vmul.f32 %v108, 2.0
    %v291 = vmul.f32 %v109, 2.0
    %v292 = vmul.f32 %v110, 2.0
    %v293 = vmul.f32 %v111, 2.0
    %v294 = vmul.f32 %v112, 2.0
    %v295 = vmul.f32 %v113, 2.0
    %v296 = vmul.f32 %v114, 2.0
    %v297 = vmul.f32 %v115, 2.0
    %v298 = vmul.f32 %v116, 2.0
    %v299 = vmul.f32 %v117, 2.0
    %v300 = vmul.f32 %v118, 2.0
    %v301 = vmul.f32 %v119, 2.0
    %v302 = vmul.f32 %v120, 2.0
    %v303 = vmul.f32 %v290, %v95
    %v304 = vmul.f32 %v291, %v96
    %v305 = vmul.f32 %v292, %v97
    %v306 = vmul.f32 %v293, %v98
    %v307 = vmul.f32 %v294, %v99
    %v308 = vmul.f32 %v295, %v100
    %v309 = vmul.f32 %v296, %v101
    %v310 = vmul.f32 %v297, %v102
    %v311 = vmul.f32 %v298, %v103
    %v312 = vmul.f32 %v299, %v104
    %v313 = vmul.f32 %v300, %v105
    %v314 = vmul.f32 %v301, %v106
    %v315 = vmul.f32 %v302, %v107
    %v316 = vadd.f32 %v277, %v303
    %v317 = vadd.f32 %v278, %v304
    %v318 = vadd.f32 %v279, %v305
    %v319 = vadd.f32 %v280, %v306
    %v320 = vadd.f32 %v281, %v307
    %v321 = vadd.f32 %v282, %v308
    %v322 = vadd.f32 %v283, %v309
    %v323 = vadd.f32 %v284, %v310
    %v324 = vadd.f32 %v285, %v311
    %v325 = vadd.f32 %v286, %v312
    %v326 = vadd.f32 %v287, %v313
    %v327 = vadd.f32 %v288, %v314
    %v328 = vadd.f32 %v289, %v315
    %v329 = vmul.f32 %v108, 6.0
    %v330 = vmul.f32 %v109, 6.0
    %v331 = vmul.f32 %v110, 6.0
    %v332 = vmul.f32 %v111, 6.0
    %v333 = vmul.f32 %v112, 6.0
    %v334 = vmul.f32 %v113, 6.0
    %v335 = vmul.f32 %v114, 6.0
    %v336 = vmul.f32 %v115, 6.0
    %v337 = vmul.f32 %v116, 6.0
    %v338 = vmul.f32 %v117, 6.0
    %v339 = vmul.f32 %v118, 6.0
    %v340 = vmul.f32 %v119, 6.0
    %v341 = vmul.f32 %v120, 6.0
    %v342 = vmul.f32 %v95, 6.0
    %v343 = vmul.f32 %v96, 6.0
    %v344 = vmul.f32 %v97, 6.0
    %v345 = vmul.f32 %v98, 6.0
    %v346 = vmul.f32 %v99, 6.0
    %v347 = vmul.f32 %v100, 6.0
    %v348 = vmul.f32 %v101, 6.0
    %v349 = vmul.f32 %v102, 6.0
    %v350 = vmul.f32 %v103, 6.0
    %v351 = vmul.f32 %v104, 6.0
    %v352 = vmul.f32 %v105, 6.0
    %v353 = vmul.f32 %v106, 6.0
    %v354 = vmul.f32 %v107, 6.0
    %s355 = sld [smem:[#allocation2]]
    %s356 = sld [smem:[#allocation2 + $0x3]]
    %s357 = sld [smem:[#allocation2 + $0x6]]
    %s358 = sld [smem:[#allocation2 + $0x9]]
    %v359 = vstv %s355
    %v360 = vmul.f32 %v147, %v359
    %v361 = vmul.f32 %v148, %v359
    %v362 = vmul.f32 %v149, %v359
    %v363 = vmul.f32 %v150, %v359
    %v364 = vmul.f32 %v151, %v359
    %v365 = vmul.f32 %v152, %v359
    %v366 = vmul.f32 %v153, %v359
    %v367 = vmul.f32 %v154, %v359
    %v368 = vmul.f32 %v155, %v359
    %v369 = vmul.f32 %v156, %v359
    %v370 = vmul.f32 %v157, %v359
    %v371 = vmul.f32 %v158, %v359
    %v372 = vmul.f32 %v159, %v359
    %v373 = vstv %s356
    %v374 = vmul.f32 %v173, %v373
    %v375 = vmul.f32 %v174, %v373
    %v376 = vmul.f32 %v175, %v373
    %v377 = vmul.f32 %v176, %v373
    %v378 = vmul.f32 %v177, %v373
    %v379 = vmul.f32 %v178, %v373
    %v380 = vmul.f32 %v179, %v373
    %v381 = vmul.f32 %v180, %v373
    %v382 = vmul.f32 %v181, %v373
    %v383 = vmul.f32 %v182, %v373
    %v384 = vmul.f32 %v183, %v373
    %v385 = vmul.f32 %v184, %v373
    %v386 = vmul.f32 %v185, %v373
    %v387 = vadd.f32 %v360, %v374
    %v388 = vadd.f32 %v361, %v375
    %v389 = vadd.f32 %v362, %v376
    %v390 = vadd.f32 %v363, %v377
    %v391 = vadd.f32 %v364, %v378
    %v392 = vadd.f32 %v365, %v379
    %v393 = vadd.f32 %v366, %v380
    %v394 = vadd.f32 %v367, %v381
    %v395 = vadd.f32 %v368, %v382
    %v396 = vadd.f32 %v369, %v383
    %v397 = vadd.f32 %v370, %v384
    %v398 = vadd.f32 %v371, %v385
    %v399 = vadd.f32 %v372, %v386
    %v400 = vstv %s357
    %v401 = vmul.f32 %v199, %v400
    %v402 = vmul.f32 %v200, %v400
    %v403 = vmul.f32 %v201, %v400
    %v404 = vmul.f32 %v202, %v400
    %v405 = vmul.f32 %v203, %v400
    %v406 = vmul.f32 %v204, %v400
    %v407 = vmul.f32 %v205, %v400
    %v408 = vmul.f32 %v206, %v400
    %v409 = vmul.f32 %v207, %v400
    %v410 = vmul.f32 %v208, %v400
    %v411 = vmul.f32 %v209, %v400
    %v412 = vmul.f32 %v210, %v400
    %v413 = vmul.f32 %v211, %v400
    %v414 = vadd.f32 %v387, %v401
    %v415 = vadd.f32 %v388, %v402
    %v416 = vadd.f32 %v389, %v403
    %v417 = vadd.f32 %v390, %v404
    %v418 = vadd.f32 %v391, %v405
    %v419 = vadd.f32 %v392, %v406
    %v420 = vadd.f32 %v393, %v407
    %v421 = vadd.f32 %v394, %v408
    %v422 = vadd.f32 %v395, %v409
    %v423 = vadd.f32 %v396, %v410
    %v424 = vadd.f32 %v397, %v411
    %v425 = vadd.f32 %v398, %v412
    %v426 = vadd.f32 %v399, %v413
    %v427 = vstv %s358
    %v428 = vmul.f32 %v212, %v427
    %v429 = vmul.f32 %v213, %v427
    %v430 = vmul.f32 %v214, %v427
    %v431 = vmul.f32 %v215, %v427
    %v432 = vmul.f32 %v216, %v427
    %v433 = vmul.f32 %v217, %v427
    %v434 = vmul.f32 %v218, %v427
    %v435 = vmul.f32 %v219, %v427
    %v436 = vmul.f32 %v220, %v427
    %v437 = vmul.f32 %v221, %v427
    %v438 = vmul.f32 %v222, %v427
    %v439 = vmul.f32 %v223, %v427
    %v440 = vmul.f32 %v224, %v427
    %v441 = vadd.f32 %v414, %v428
    %v442 = vadd.f32 %v415, %v429
    %v443 = vadd.f32 %v416, %v430
    %v444 = vadd.f32 %v417, %v431
    %v445 = vadd.f32 %v418, %v432
    %v446 = vadd.f32 %v419, %v433
    %v447 = vadd.f32 %v420, %v434
    %v448 = vadd.f32 %v421, %v435
    %v449 = vadd.f32 %v422, %v436
    %v450 = vadd.f32 %v423, %v437
    %v451 = vadd.f32 %v424, %v438
    %v452 = vadd.f32 %v425, %v439
    %v453 = vadd.f32 %v426, %v440
    %v454 = vmul.f32 %v225, %v359
    %v455 = vmul.f32 %v226, %v359
    %v456 = vmul.f32 %v227, %v359
    %v457 = vmul.f32 %v228, %v359
    %v458 = vmul.f32 %v229, %v359
    %v459 = vmul.f32 %v230, %v359
    %v460 = vmul.f32 %v231, %v359
    %v461 = vmul.f32 %v232, %v359
    %v462 = vmul.f32 %v233, %v359
    %v463 = vmul.f32 %v234, %v359
    %v464 = vmul.f32 %v235, %v359
    %v465 = vmul.f32 %v236, %v359
    %v466 = vmul.f32 %v237, %v359
    %v467 = vmul.f32 %v264, %v373
    %v468 = vmul.f32 %v265, %v373
    %v469 = vmul.f32 %v266, %v373
    %v470 = vmul.f32 %v267, %v373
    %v471 = vmul.f32 %v268, %v373
    %v472 = vmul.f32 %v269, %v373
    %v473 = vmul.f32 %v270, %v373
    %v474 = vmul.f32 %v271, %v373
    %v475 = vmul.f32 %v272, %v373
    %v476 = vmul.f32 %v273, %v373
    %v477 = vmul.f32 %v274, %v373
    %v478 = vmul.f32 %v275, %v373
    %v479 = vmul.f32 %v276, %v373
    %v480 = vadd.f32 %v454, %v467
    %v481 = vadd.f32 %v455, %v468
    %v482 = vadd.f32 %v456, %v469
    %v483 = vadd.f32 %v457, %v470
    %v484 = vadd.f32 %v458, %v471
    %v485 = vadd.f32 %v459, %v472
    %v486 = vadd.f32 %v460, %v473
    %v487 = vadd.f32 %v461, %v474
    %v488 = vadd.f32 %v462, %v475
    %v489 = vadd.f32 %v463, %v476
    %v490 = vadd.f32 %v464, %v477
    %v491 = vadd.f32 %v465, %v478
    %v492 = vadd.f32 %v466, %v479
    %v493 = vmul.f32 %v316, %v400
    %v494 = vmul.f32 %v317, %v400
    %v495 = vmul.f32 %v318, %v400
    %v496 = vmul.f32 %v319, %v400
    %v497 = vmul.f32 %v320, %v400
    %v498 = vmul.f32 %v321, %v400
    %v499 = vmul.f32 %v322, %v400
    %v500 = vmul.f32 %v323, %v400
    %v501 = vmul.f32 %v324, %v400
    %v502 = vmul.f32 %v325, %v400
    %v503 = vmul.f32 %v326, %v400
    %v504 = vmul.f32 %v327, %v400
    %v505 = vmul.f32 %v328, %v400
    %v506 = vadd.f32 %v480, %v493
    %v507 = vadd.f32 %v481, %v494
    %v508 = vadd.f32 %v482, %v495
    %v509 = vadd.f32 %v483, %v496
    %v510 = vadd.f32 %v484, %v497
    %v511 = vadd.f32 %v485, %v498
    %v512 = vadd.f32 %v486, %v499
    %v513 = vadd.f32 %v487, %v500
    %v514 = vadd.f32 %v488, %v501
    %v515 = vadd.f32 %v489, %v502
    %v516 = vadd.f32 %v490, %v503
    %v517 = vadd.f32 %v491, %v504
    %v518 = vadd.f32 %v492, %v505
    %v519 = vmul.f32 %v121, %v427
    %v520 = vmul.f32 %v122, %v427
    %v521 = vmul.f32 %v123, %v427
    %v522 = vmul.f32 %v124, %v427
    %v523 = vmul.f32 %v125, %v427
    %v524 = vmul.f32 %v126, %v427
    %v525 = vmul.f32 %v127, %v427
    %v526 = vmul.f32 %v128, %v427
    %v527 = vmul.f32 %v129, %v427
    %v528 = vmul.f32 %v130, %v427
    %v529 = vmul.f32 %v131, %v427
    %v530 = vmul.f32 %v132, %v427
    %v531 = vmul.f32 %v133, %v427
    %v532 = vadd.f32 %v506, %v519
    %v533 = vadd.f32 %v507, %v520
    %v534 = vadd.f32 %v508, %v521
    %v535 = vadd.f32 %v509, %v522
    %v536 = vadd.f32 %v510, %v523
    %v537 = vadd.f32 %v511, %v524
    %v538 = vadd.f32 %v512, %v525
    %v539 = vadd.f32 %v513, %v526
    %v540 = vadd.f32 %v514, %v527
    %v541 = vadd.f32 %v515, %v528
    %v542 = vadd.f32 %v516, %v529
    %v543 = vadd.f32 %v517, %v530
    %v544 = vadd.f32 %v518, %v531
    %s545 = smul.f32 %s356, 2.0
    %s546 = ssub.f32 %s357, %s545
    %s547 = sadd.f32 %s546, %s355
    %v548 = vstv %s547
    %v549 = vmul.f32 %v329, %v548
    %v550 = vmul.f32 %v330, %v548
    %v551 = vmul.f32 %v331, %v548
    %v552 = vmul.f32 %v332, %v548
    %v553 = vmul.f32 %v333, %v548
    %v554 = vmul.f32 %v334, %v548
    %v555 = vmul.f32 %v335, %v548
    %v556 = vmul.f32 %v336, %v548
    %v557 = vmul.f32 %v337, %v548
    %v558 = vmul.f32 %v338, %v548
    %v559 = vmul.f32 %v339, %v548
    %v560 = vmul.f32 %v340, %v548
    %v561 = vmul.f32 %v341, %v548
    %s562 = smul.f32 %s357, 2.0
    %s563 = ssub.f32 %s358, %s562
    %s564 = sadd.f32 %s563, %s356
    %v565 = vstv %s564
    %v566 = vmul.f32 %v342, %v565
    %v567 = vmul.f32 %v343, %v565
    %v568 = vmul.f32 %v344, %v565
    %v569 = vmul.f32 %v345, %v565
    %v570 = vmul.f32 %v346, %v565
    %v571 = vmul.f32 %v347, %v565
    %v572 = vmul.f32 %v348, %v565
    %v573 = vmul.f32 %v349, %v565
    %v574 = vmul.f32 %v350, %v565
    %v575 = vmul.f32 %v351, %v565
    %v576 = vmul.f32 %v352, %v565
    %v577 = vmul.f32 %v353, %v565
    %v578 = vmul.f32 %v354, %v565
    %v579 = vadd.f32 %v549, %v566
    %v580 = vadd.f32 %v550, %v567
    %v581 = vadd.f32 %v551, %v568
    %v582 = vadd.f32 %v552, %v569
    %v583 = vadd.f32 %v553, %v570
    %v584 = vadd.f32 %v554, %v571
    %v585 = vadd.f32 %v555, %v572
    %v586 = vadd.f32 %v556, %v573
    %v587 = vadd.f32 %v557, %v574
    %v588 = vadd.f32 %v558, %v575
    %v589 = vadd.f32 %v559, %v576
    %v590 = vadd.f32 %v560, %v577
    %v591 = vadd.f32 %v561, %v578
    %s592 = sld [smem:[#allocation2 + $0x1]]
    %s593 = sld [smem:[#allocation2 + $0x4]]
    %s594 = sld [smem:[#allocation2 + $0x7]]
    %s595 = sld [smem:[#allocation2 + $0xa]]
    %v596 = vstv %s592
    %v597 = vmul.f32 %v147, %v596
    %v598 = vmul.f32 %v148, %v596
    %v599 = vmul.f32 %v149, %v596
    %v600 = vmul.f32 %v150, %v596
    %v601 = vmul.f32 %v151, %v596
    %v602 = vmul.f32 %v152, %v596
    %v603 = vmul.f32 %v153, %v596
    %v604 = vmul.f32 %v154, %v596
    %v605 = vmul.f32 %v155, %v596
    %v606 = vmul.f32 %v156, %v596
    %v607 = vmul.f32 %v157, %v596
    %v608 = vmul.f32 %v158, %v596
    %v609 = vmul.f32 %v159, %v596
    %v610 = vstv %s593
    %v611 = vmul.f32 %v173, %v610
    %v612 = vmul.f32 %v174, %v610
    %v613 = vmul.f32 %v175, %v610
    %v614 = vmul.f32 %v176, %v610
    %v615 = vmul.f32 %v177, %v610
    %v616 = vmul.f32 %v178, %v610
    %v617 = vmul.f32 %v179, %v610
    %v618 = vmul.f32 %v180, %v610
    %v619 = vmul.f32 %v181, %v610
    %v620 = vmul.f32 %v182, %v610
    %v621 = vmul.f32 %v183, %v610
    %v622 = vmul.f32 %v184, %v610
    %v623 = vmul.f32 %v185, %v610
    %v624 = vadd.f32 %v597, %v611
    %v625 = vadd.f32 %v598, %v612
    %v626 = vadd.f32 %v599, %v613
    %v627 = vadd.f32 %v600, %v614
    %v628 = vadd.f32 %v601, %v615
    %v629 = vadd.f32 %v602, %v616
    %v630 = vadd.f32 %v603, %v617
    %v631 = vadd.f32 %v604, %v618
    %v632 = vadd.f32 %v605, %v619
    %v633 = vadd.f32 %v606, %v620
    %v634 = vadd.f32 %v607, %v621
    %v635 = vadd.f32 %v608, %v622
    %v636 = vadd.f32 %v609, %v623
    %v637 = vstv %s594
    %v638 = vmul.f32 %v199, %v637
    %v639 = vmul.f32 %v200, %v637
    %v640 = vmul.f32 %v201, %v637
    %v641 = vmul.f32 %v202, %v637
    %v642 = vmul.f32 %v203, %v637
    %v643 = vmul.f32 %v204, %v637
    %v644 = vmul.f32 %v205, %v637
    %v645 = vmul.f32 %v206, %v637
    %v646 = vmul.f32 %v207, %v637
    %v647 = vmul.f32 %v208, %v637
    %v648 = vmul.f32 %v209, %v637
    %v649 = vmul.f32 %v210, %v637
    %v650 = vmul.f32 %v211, %v637
    %v651 = vadd.f32 %v624, %v638
    %v652 = vadd.f32 %v625, %v639
    %v653 = vadd.f32 %v626, %v640
    %v654 = vadd.f32 %v627, %v641
    %v655 = vadd.f32 %v628, %v642
    %v656 = vadd.f32 %v629, %v643
    %v657 = vadd.f32 %v630, %v644
    %v658 = vadd.f32 %v631, %v645
    %v659 = vadd.f32 %v632, %v646
    %v660 = vadd.f32 %v633, %v647
    %v661 = vadd.f32 %v634, %v648
    %v662 = vadd.f32 %v635, %v649
    %v663 = vadd.f32 %v636, %v650
    %v664 = vstv %s595
    %v665 = vmul.f32 %v212, %v664
    %v666 = vmul.f32 %v213, %v664
    %v667 = vmul.f32 %v214, %v664
    %v668 = vmul.f32 %v215, %v664
    %v669 = vmul.f32 %v216, %v664
    %v670 = vmul.f32 %v217, %v664
    %v671 = vmul.f32 %v218, %v664
    %v672 = vmul.f32 %v219, %v664
    %v673 = vmul.f32 %v220, %v664
    %v674 = vmul.f32 %v221, %v664
    %v675 = vmul.f32 %v222, %v664
    %v676 = vmul.f32 %v223, %v664
    %v677 = vmul.f32 %v224, %v664
    %v678 = vadd.f32 %v651, %v665
    %v679 = vadd.f32 %v652, %v666
    %v680 = vadd.f32 %v653, %v667
    %v681 = vadd.f32 %v654, %v668
    %v682 = vadd.f32 %v655, %v669
    %v683 = vadd.f32 %v656, %v670
    %v684 = vadd.f32 %v657, %v671
    %v685 = vadd.f32 %v658, %v672
    %v686 = vadd.f32 %v659, %v673
    %v687 = vadd.f32 %v660, %v674
    %v688 = vadd.f32 %v661, %v675
    %v689 = vadd.f32 %v662, %v676
    %v690 = vadd.f32 %v663, %v677
    %v691 = vmul.f32 %v225, %v596
    %v692 = vmul.f32 %v226, %v596
    %v693 = vmul.f32 %v227, %v596
    %v694 = vmul.f32 %v228, %v596
    %v695 = vmul.f32 %v229, %v596
    %v696 = vmul.f32 %v230, %v596
    %v697 = vmul.f32 %v231, %v596
    %v698 = vmul.f32 %v232, %v596
    %v699 = vmul.f32 %v233, %v596
    %v700 = vmul.f32 %v234, %v596
    %v701 = vmul.f32 %v235, %v596
    %v702 = vmul.f32 %v236, %v596
    %v703 = vmul.f32 %v237, %v596
    %v704 = vmul.f32 %v264, %v610
    %v705 = vmul.f32 %v265, %v610
    %v706 = vmul.f32 %v266, %v610
    %v707 = vmul.f32 %v267, %v610
    %v708 = vmul.f32 %v268, %v610
    %v709 = vmul.f32 %v269, %v610
    %v710 = vmul.f32 %v270, %v610
    %v711 = vmul.f32 %v271, %v610
    %v712 = vmul.f32 %v272, %v610
    %v713 = vmul.f32 %v273, %v610
    %v714 = vmul.f32 %v274, %v610
    %v715 = vmul.f32 %v275, %v610
    %v716 = vmul.f32 %v276, %v610
    %v717 = vadd.f32 %v691, %v704
    %v718 = vadd.f32 %v692, %v705
    %v719 = vadd.f32 %v693, %v706
    %v720 = vadd.f32 %v694, %v707
    %v721 = vadd.f32 %v695, %v708
    %v722 = vadd.f32 %v696, %v709
    %v723 = vadd.f32 %v697, %v710
    %v724 = vadd.f32 %v698, %v711
    %v725 = vadd.f32 %v699, %v712
    %v726 = vadd.f32 %v700, %v713
    %v727 = vadd.f32 %v701, %v714
    %v728 = vadd.f32 %v702, %v715
    %v729 = vadd.f32 %v703, %v716
    %v730 = vmul.f32 %v316, %v637
    %v731 = vmul.f32 %v317, %v637
    %v732 = vmul.f32 %v318, %v637
    %v733 = vmul.f32 %v319, %v637
    %v734 = vmul.f32 %v320, %v637
    %v735 = vmul.f32 %v321, %v637
    %v736 = vmul.f32 %v322, %v637
    %v737 = vmul.f32 %v323, %v637
    %v738 = vmul.f32 %v324, %v637
    %v739 = vmul.f32 %v325, %v637
    %v740 = vmul.f32 %v326, %v637
    %v741 = vmul.f32 %v327, %v637
    %v742 = vmul.f32 %v328, %v637
    %v743 = vadd.f32 %v717, %v730
    %v744 = vadd.f32 %v718, %v731
    %v745 = vadd.f32 %v719, %v732
    %v746 = vadd.f32 %v720, %v733
    %v747 = vadd.f32 %v721, %v734
    %v748 = vadd.f32 %v722, %v735
    %v749 = vadd.f32 %v723, %v736
    %v750 = vadd.f32 %v724, %v737
    %v751 = vadd.f32 %v725, %v738
    %v752 = vadd.f32 %v726, %v739
    %v753 = vadd.f32 %v727, %v740
    %v754 = vadd.f32 %v728, %v741
    %v755 = vadd.f32 %v729, %v742
    %v756 = vmul.f32 %v121, %v664
    %v757 = vmul.f32 %v122, %v664
    %v758 = vmul.f32 %v123, %v664
    %v759 = vmul.f32 %v124, %v664
    %v760 = vmul.f32 %v125, %v664
    %v761 = vmul.f32 %v126, %v664
    %v762 = vmul.f32 %v127, %v664
    %v763 = vmul.f32 %v128, %v664
    %v764 = vmul.f32 %v129, %v664
    %v765 = vmul.f32 %v130, %v664
    %v766 = vmul.f32 %v131, %v664
    %v767 = vmul.f32 %v132, %v664
    %v768 = vmul.f32 %v133, %v664
    %v769 = vadd.f32 %v743, %v756
    %v770 = vadd.f32 %v744, %v757
    %v771 = vadd.f32 %v745, %v758
    %v772 = vadd.f32 %v746, %v759
    %v773 = vadd.f32 %v747, %v760
    %v774 = vadd.f32 %v748, %v761
    %v775 = vadd.f32 %v749, %v762
    %v776 = vadd.f32 %v750, %v763
    %v777 = vadd.f32 %v751, %v764
    %v778 = vadd.f32 %v752, %v765
    %v779 = vadd.f32 %v753, %v766
    %v780 = vadd.f32 %v754, %v767
    %v781 = vadd.f32 %v755, %v768
    %s782 = smul.f32 %s593, 2.0
    %s783 = ssub.f32 %s594, %s782
    %s784 = sadd.f32 %s783, %s592
    %v785 = vstv %s784
    %v786 = vmul.f32 %v329, %v785
    %v787 = vmul.f32 %v330, %v785
    %v788 = vmul.f32 %v331, %v785
    %v789 = vmul.f32 %v332, %v785
    %v790 = vmul.f32 %v333, %v785
    %v791 = vmul.f32 %v334, %v785
    %v792 = vmul.f32 %v335, %v785
    %v793 = vmul.f32 %v336, %v785
    %v794 = vmul.f32 %v337, %v785
    %v795 = vmul.f32 %v338, %v785
    %v796 = vmul.f32 %v339, %v785
    %v797 = vmul.f32 %v340, %v785
    %v798 = vmul.f32 %v341, %v785
    %s799 = smul.f32 %s594, 2.0
    %s800 = ssub.f32 %s595, %s799
    %s801 = sadd.f32 %s800, %s593
    %v802 = vstv %s801
    %v803 = vmul.f32 %v342, %v802
    %v804 = vmul.f32 %v343, %v802
    %v805 = vmul.f32 %v344, %v802
    %v806 = vmul.f32 %v345, %v802
    %v807 = vmul.f32 %v346, %v802
    %v808 = vmul.f32 %v347, %v802
    %v809 = vmul.f32 %v348, %v802
    %v810 = vmul.f32 %v349, %v802
    %v811 = vmul.f32 %v350, %v802
    %v812 = vmul.f32 %v351, %v802
    %v813 = vmul.f32 %v352, %v802
    %v814 = vmul.f32 %v353, %v802
    %v815 = vmul.f32 %v354, %v802
    %v816 = vadd.f32 %v786, %v803
    %v817 = vadd.f32 %v787, %v804
    %v818 = vadd.f32 %v788, %v805
    %v819 = vadd.f32 %v789, %v806
    %v820 = vadd.f32 %v790, %v807
    %v821 = vadd.f32 %v791, %v808
    %v822 = vadd.f32 %v792, %v809
    %v823 = vadd.f32 %v793, %v810
    %v824 = vadd.f32 %v794, %v811
    %v825 = vadd.f32 %v795, %v812
    %v826 = vadd.f32 %v796, %v813
    %v827 = vadd.f32 %v797, %v814
    %v828 = vadd.f32 %v798, %v815
    %s829 = sld [smem:[#allocation2 + $0x2]]
    %s830 = sld [smem:[#allocation2 + $0x5]]
    %s831 = sld [smem:[#allocation2 + $0x8]]
    %s832 = sld [smem:[#allocation2 + $0xb]]
    %v833 = vstv %s829
    %v834 = vmul.f32 %v147, %v833
    %v835 = vmul.f32 %v148, %v833
    %v836 = vmul.f32 %v149, %v833
    %v837 = vmul.f32 %v150, %v833
    %v838 = vmul.f32 %v151, %v833
    %v839 = vmul.f32 %v152, %v833
    %v840 = vmul.f32 %v153, %v833
    %v841 = vmul.f32 %v154, %v833
    %v842 = vmul.f32 %v155, %v833
    %v843 = vmul.f32 %v156, %v833
    %v844 = vmul.f32 %v157, %v833
    %v845 = vmul.f32 %v158, %v833
    %v846 = vmul.f32 %v159, %v833
    %v847 = vstv %s830
    %v848 = vmul.f32 %v173, %v847
    %v849 = vmul.f32 %v174, %v847
    %v850 = vmul.f32 %v175, %v847
    %v851 = vmul.f32 %v176, %v847
    %v852 = vmul.f32 %v177, %v847
    %v853 = vmul.f32 %v178, %v847
    %v854 = vmul.f32 %v179, %v847
    %v855 = vmul.f32 %v180, %v847
    %v856 = vmul.f32 %v181, %v847
    %v857 = vmul.f32 %v182, %v847
    %v858 = vmul.f32 %v183, %v847
    %v859 = vmul.f32 %v184, %v847
    %v860 = vmul.f32 %v185, %v847
    %v861 = vadd.f32 %v834, %v848
    %v862 = vadd.f32 %v835, %v849
    %v863 = vadd.f32 %v836, %v850
    %v864 = vadd.f32 %v837, %v851
    %v865 = vadd.f32 %v838, %v852
    %v866 = vadd.f32 %v839, %v853
    %v867 = vadd.f32 %v840, %v854
    %v868 = vadd.f32 %v841, %v855
    %v869 = vadd.f32 %v842, %v856
    %v870 = vadd.f32 %v843, %v857
    %v871 = vadd.f32 %v844, %v858
    %v872 = vadd.f32 %v845, %v859
    %v873 = vadd.f32 %v846, %v860
    %v874 = vstv %s831
    %v875 = vmul.f32 %v199, %v874
    %v876 = vmul.f32 %v200, %v874
    %v877 = vmul.f32 %v201, %v874
    %v878 = vmul.f32 %v202, %v874
    %v879 = vmul.f32 %v203, %v874
    %v880 = vmul.f32 %v204, %v874
    %v881 = vmul.f32 %v205, %v874
    %v882 = vmul.f32 %v206, %v874
    %v883 = vmul.f32 %v207, %v874
    %v884 = vmul.f32 %v208, %v874
    %v885 = vmul.f32 %v209, %v874
    %v886 = vmul.f32 %v210, %v874
    %v887 = vmul.f32 %v211, %v874
    %v888 = vadd.f32 %v861, %v875
    %v889 = vadd.f32 %v862, %v876
    %v890 = vadd.f32 %v863, %v877
    %v891 = vadd.f32 %v864, %v878
    %v892 = vadd.f32 %v865, %v879
    %v893 = vadd.f32 %v866, %v880
    %v894 = vadd.f32 %v867, %v881
    %v895 = vadd.f32 %v868, %v882
    %v896 = vadd.f32 %v869, %v883
    %v897 = vadd.f32 %v870, %v884
    %v898 = vadd.f32 %v871, %v885
    %v899 = vadd.f32 %v872, %v886
    %v900 = vadd.f32 %v873, %v887
    %v901 = vstv %s832
    %v902 = vmul.f32 %v212, %v901
    %v903 = vmul.f32 %v213, %v901
    %v904 = vmul.f32 %v214, %v901
    %v905 = vmul.f32 %v215, %v901
    %v906 = vmul.f32 %v216, %v901
    %v907 = vmul.f32 %v217, %v901
    %v908 = vmul.f32 %v218, %v901
    %v909 = vmul.f32 %v219, %v901
    %v910 = vmul.f32 %v220, %v901
    %v911 = vmul.f32 %v221, %v901
    %v912 = vmul.f32 %v222, %v901
    %v913 = vmul.f32 %v223, %v901
    %v914 = vmul.f32 %v224, %v901
    %v915 = vadd.f32 %v888, %v902
    %v916 = vadd.f32 %v889, %v903
    %v917 = vadd.f32 %v890, %v904
    %v918 = vadd.f32 %v891, %v905
    %v919 = vadd.f32 %v892, %v906
    %v920 = vadd.f32 %v893, %v907
    %v921 = vadd.f32 %v894, %v908
    %v922 = vadd.f32 %v895, %v909
    %v923 = vadd.f32 %v896, %v910
    %v924 = vadd.f32 %v897, %v911
    %v925 = vadd.f32 %v898, %v912
    %v926 = vadd.f32 %v899, %v913
    %v927 = vadd.f32 %v900, %v914
    %v928 = vmul.f32 %v225, %v833
    %v929 = vmul.f32 %v226, %v833
    %v930 = vmul.f32 %v227, %v833
    %v931 = vmul.f32 %v228, %v833
    %v932 = vmul.f32 %v229, %v833
    %v933 = vmul.f32 %v230, %v833
    %v934 = vmul.f32 %v231, %v833
    %v935 = vmul.f32 %v232, %v833
    %v936 = vmul.f32 %v233, %v833
    %v937 = vmul.f32 %v234, %v833
    %v938 = vmul.f32 %v235, %v833
    %v939 = vmul.f32 %v236, %v833
    %v940 = vmul.f32 %v237, %v833
    %v941 = vmul.f32 %v264, %v847
    %v942 = vmul.f32 %v265, %v847
    %v943 = vmul.f32 %v266, %v847
    %v944 = vmul.f32 %v267, %v847
    %v945 = vmul.f32 %v268, %v847
    %v946 = vmul.f32 %v269, %v847
    %v947 = vmul.f32 %v270, %v847
    %v948 = vmul.f32 %v271, %v847
    %v949 = vmul.f32 %v272, %v847
    %v950 = vmul.f32 %v273, %v847
    %v951 = vmul.f32 %v274, %v847
    %v952 = vmul.f32 %v275, %v847
    %v953 = vmul.f32 %v276, %v847
    %v954 = vadd.f32 %v928, %v941
    %v955 = vadd.f32 %v929, %v942
    %v956 = vadd.f32 %v930, %v943
    %v957 = vadd.f32 %v931, %v944
    %v958 = vadd.f32 %v932, %v945
    %v959 = vadd.f32 %v933, %v946
    %v960 = vadd.f32 %v934, %v947
    %v961 = vadd.f32 %v935, %v948
    %v962 = vadd.f32 %v936, %v949
    %v963 = vadd.f32 %v937, %v950
    %v964 = vadd.f32 %v938, %v951
    %v965 = vadd.f32 %v939, %v952
    %v966 = vadd.f32 %v940, %v953
    %v967 = vmul.f32 %v316, %v874
    %v968 = vmul.f32 %v317, %v874
    %v969 = vmul.f32 %v318, %v874
    %v970 = vmul.f32 %v319, %v874
    %v971 = vmul.f32 %v320, %v874
    %v972 = vmul.f32 %v321, %v874
    %v973 = vmul.f32 %v322, %v874
    %v974 = vmul.f32 %v323, %v874
    %v975 = vmul.f32 %v324, %v874
    %v976 = vmul.f32 %v325, %v874
    %v977 = vmul.f32 %v326, %v874
    %v978 = vmul.f32 %v327, %v874
    %v979 = vmul.f32 %v328, %v874
    %v980 = vadd.f32 %v954, %v967
    %v981 = vadd.f32 %v955, %v968
    %v982 = vadd.f32 %v956, %v969
    %v983 = vadd.f32 %v957, %v970
    %v984 = vadd.f32 %v958, %v971
    %v985 = vadd.f32 %v959, %v972
    %v986 = vadd.f32 %v960, %v973
    %v987 = vadd.f32 %v961, %v974
    %v988 = vadd.f32 %v962, %v975
    %v989 = vadd.f32 %v963, %v976
    %v990 = vadd.f32 %v964, %v977
    %v991 = vadd.f32 %v965, %v978
    %v992 = vadd.f32 %v966, %v979
    %v993 = vmul.f32 %v121, %v901
    %v994 = vmul.f32 %v122, %v901
    %v995 = vmul.f32 %v123, %v901
    %v996 = vmul.f32 %v124, %v901
    %v997 = vmul.f32 %v125, %v901
    %v998 = vmul.f32 %v126, %v901
    %v999 = vmul.f32 %v127, %v901
    %v1000 = vmul.f32 %v128, %v901
    %v1001 = vmul.f32 %v129, %v901
    %v1002 = vmul.f32 %v130, %v901
    %v1003 = vmul.f32 %v131, %v901
    %v1004 = vmul.f32 %v132, %v901
    %v1005 = vmul.f32 %v133, %v901
    %v1006 = vadd.f32 %v980, %v993
    %v1007 = vadd.f32 %v981, %v994
    %v1008 = vadd.f32 %v982, %v995
    %v1009 = vadd.f32 %v983, %v996
    %v1010 = vadd.f32 %v984, %v997
    %v1011 = vadd.f32 %v985, %v998
    %v1012 = vadd.f32 %v986, %v999
    %v1013 = vadd.f32 %v987, %v1000
    %v1014 = vadd.f32 %v988, %v1001
    %v1015 = vadd.f32 %v989, %v1002
    %v1016 = vadd.f32 %v990, %v1003
    %v1017 = vadd.f32 %v991, %v1004
    %v1018 = vadd.f32 %v992, %v1005
    %s1019 = smul.f32 %s830, 2.0
    %s1020 = ssub.f32 %s831, %s1019
    %s1021 = sadd.f32 %s1020, %s829
    %v1022 = vstv %s1021
    %v1023 = vmul.f32 %v329, %v1022
    %v1024 = vmul.f32 %v330, %v1022
    %v1025 = vmul.f32 %v331, %v1022
    %v1026 = vmul.f32 %v332, %v1022
    %v1027 = vmul.f32 %v333, %v1022
    %v1028 = vmul.f32 %v334, %v1022
    %v1029 = vmul.f32 %v335, %v1022
    %v1030 = vmul.f32 %v336, %v1022
    %v1031 = vmul.f32 %v337, %v1022
    %v1032 = vmul.f32 %v338, %v1022
    %v1033 = vmul.f32 %v339, %v1022
    %v1034 = vmul.f32 %v340, %v1022
    %v1035 = vmul.f32 %v341, %v1022
    %s1036 = smul.f32 %s831, 2.0
    %s1037 = ssub.f32 %s832, %s1036
    %s1038 = sadd.f32 %s1037, %s830
    %v1039 = vstv %s1038
    %v1040 = vmul.f32 %v342, %v1039
    %v1041 = vmul.f32 %v343, %v1039
    %v1042 = vmul.f32 %v344, %v1039
    %v1043 = vmul.f32 %v345, %v1039
    %v1044 = vmul.f32 %v346, %v1039
    %v1045 = vmul.f32 %v347, %v1039
    %v1046 = vmul.f32 %v348, %v1039
    %v1047 = vmul.f32 %v349, %v1039
    %v1048 = vmul.f32 %v350, %v1039
    %v1049 = vmul.f32 %v351, %v1039
    %v1050 = vmul.f32 %v352, %v1039
    %v1051 = vmul.f32 %v353, %v1039
    %v1052 = vmul.f32 %v354, %v1039
    %v1053 = vadd.f32 %v1023, %v1040
    %v1054 = vadd.f32 %v1024, %v1041
    %v1055 = vadd.f32 %v1025, %v1042
    %v1056 = vadd.f32 %v1026, %v1043
    %v1057 = vadd.f32 %v1027, %v1044
    %v1058 = vadd.f32 %v1028, %v1045
    %v1059 = vadd.f32 %v1029, %v1046
    %v1060 = vadd.f32 %v1030, %v1047
    %v1061 = vadd.f32 %v1031, %v1048
    %v1062 = vadd.f32 %v1032, %v1049
    %v1063 = vadd.f32 %v1033, %v1050
    %v1064 = vadd.f32 %v1034, %v1051
    %v1065 = vadd.f32 %v1035, %v1052
    %s1066 = sld [smem:[#allocation4]]
    %s1067 = sld [smem:[#allocation4 + $0x1]]
    %s1068 = sld [smem:[#allocation4 + $0x2]]
    %s1069 = sld [smem:[#allocation4 + $0x3]]
    %v1070 = vstv %s1066
    %v1071 = vmul.f32 %v1070, %v441
    %v1072 = vmul.f32 %v1070, %v442
    %v1073 = vmul.f32 %v1070, %v443
    %v1074 = vmul.f32 %v1070, %v444
    %v1075 = vmul.f32 %v1070, %v445
    %v1076 = vmul.f32 %v1070, %v446
    %v1077 = vmul.f32 %v1070, %v447
    %v1078 = vmul.f32 %v1070, %v448
    %v1079 = vmul.f32 %v1070, %v449
    %v1080 = vmul.f32 %v1070, %v450
    %v1081 = vmul.f32 %v1070, %v451
    %v1082 = vmul.f32 %v1070, %v452
    %v1083 = vmul.f32 %v1070, %v453
    %v1084 = vstv %s1067
    %v1085 = vmul.f32 %v1084, %v678
    %v1086 = vmul.f32 %v1084, %v679
    %v1087 = vmul.f32 %v1084, %v680
    %v1088 = vmul.f32 %v1084, %v681
    %v1089 = vmul.f32 %v1084, %v682
    %v1090 = vmul.f32 %v1084, %v683
    %v1091 = vmul.f32 %v1084, %v684
    %v1092 = vmul.f32 %v1084, %v685
    %v1093 = vmul.f32 %v1084, %v686
    %v1094 = vmul.f32 %v1084, %v687
    %v1095 = vmul.f32 %v1084, %v688
    %v1096 = vmul.f32 %v1084, %v689
    %v1097 = vmul.f32 %v1084, %v690
    %v1098 = vadd.f32 %v1071, %v1085
    %v1099 = vadd.f32 %v1072, %v1086
    %v1100 = vadd.f32 %v1073, %v1087
    %v1101 = vadd.f32 %v1074, %v1088
    %v1102 = vadd.f32 %v1075, %v1089
    %v1103 = vadd.f32 %v1076, %v1090
    %v1104 = vadd.f32 %v1077, %v1091
    %v1105 = vadd.f32 %v1078, %v1092
    %v1106 = vadd.f32 %v1079, %v1093
    %v1107 = vadd.f32 %v1080, %v1094
    %v1108 = vadd.f32 %v1081, %v1095
    %v1109 = vadd.f32 %v1082, %v1096
    %v1110 = vadd.f32 %v1083, %v1097
    %v1111 = vstv %s1068
    %v1112 = vmul.f32 %v1111, %v915
    %v1113 = vmul.f32 %v1111, %v916
    %v1114 = vmul.f32 %v1111, %v917
    %v1115 = vmul.f32 %v1111, %v918
    %v1116 = vmul.f32 %v1111, %v919
    %v1117 = vmul.f32 %v1111, %v920
    %v1118 = vmul.f32 %v1111, %v921
    %v1119 = vmul.f32 %v1111, %v922
    %v1120 = vmul.f32 %v1111, %v923
    %v1121 = vmul.f32 %v1111, %v924
    %v1122 = vmul.f32 %v1111, %v925
    %v1123 = vmul.f32 %v1111, %v926
    %v1124 = vmul.f32 %v1111, %v927
    %v1125 = vadd.f32 %v1098, %v1112
    %v1126 = vadd.f32 %v1099, %v1113
    %v1127 = vadd.f32 %v1100, %v1114
    %v1128 = vadd.f32 %v1101, %v1115
    %v1129 = vadd.f32 %v1102, %v1116
    %v1130 = vadd.f32 %v1103, %v1117
    %v1131 = vadd.f32 %v1104, %v1118
    %v1132 = vadd.f32 %v1105, %v1119
    %v1133 = vadd.f32 %v1106, %v1120
    %v1134 = vadd.f32 %v1107, %v1121
    %v1135 = vadd.f32 %v1108, %v1122
    %v1136 = vadd.f32 %v1109, %v1123
    %v1137 = vadd.f32 %v1110, %v1124
    %v1138 = vstv %s1069
    %v1139 = vadd.f32 %v1125, %v1138
    %v1140 = vadd.f32 %v1126, %v1138
    %v1141 = vadd.f32 %v1127, %v1138
    %v1142 = vadd.f32 %v1128, %v1138
    %v1143 = vadd.f32 %v1129, %v1138
    %v1144 = vadd.f32 %v1130, %v1138
    %v1145 = vadd.f32 %v1131, %v1138
    %v1146 = vadd.f32 %v1132, %v1138
    %v1147 = vadd.f32 %v1133, %v1138
    %v1148 = vadd.f32 %v1134, %v1138
    %v1149 = vadd.f32 %v1135, %v1138
    %v1150 = vadd.f32 %v1136, %v1138
    %v1151 = vadd.f32 %v1137, %v1138
    %v1152 = vmul.f32 %v1070, %v532
    %v1153 = vmul.f32 %v1070, %v533
    %v1154 = vmul.f32 %v1070, %v534
    %v1155 = vmul.f32 %v1070, %v535
    %v1156 = vmul.f32 %v1070, %v536
    %v1157 = vmul.f32 %v1070, %v537
    %v1158 = vmul.f32 %v1070, %v538
    %v1159 = vmul.f32 %v1070, %v539
    %v1160 = vmul.f32 %v1070, %v540
    %v1161 = vmul.f32 %v1070, %v541
    %v1162 = vmul.f32 %v1070, %v542
    %v1163 = vmul.f32 %v1070, %v543
    %v1164 = vmul.f32 %v1070, %v544
    %v1165 = vmul.f32 %v1084, %v769
    %v1166 = vmul.f32 %v1084, %v770
    %v1167 = vmul.f32 %v1084, %v771
    %v1168 = vmul.f32 %v1084, %v772
    %v1169 = vmul.f32 %v1084, %v773
    %v1170 = vmul.f32 %v1084, %v774
    %v1171 = vmul.f32 %v1084, %v775
    %v1172 = vmul.f32 %v1084, %v776
    %v1173 = vmul.f32 %v1084, %v777
    %v1174 = vmul.f32 %v1084, %v778
    %v1175 = vmul.f32 %v1084, %v779
    %v1176 = vmul.f32 %v1084, %v780
    %v1177 = vmul.f32 %v1084, %v781
    %v1178 = vadd.f32 %v1152, %v1165
    %v1179 = vadd.f32 %v1153, %v1166
    %v1180 = vadd.f32 %v1154, %v1167
    %v1181 = vadd.f32 %v1155, %v1168
    %v1182 = vadd.f32 %v1156, %v1169
    %v1183 = vadd.f32 %v1157, %v1170
    %v1184 = vadd.f32 %v1158, %v1171
    %v1185 = vadd.f32 %v1159, %v1172
    %v1186 = vadd.f32 %v1160, %v1173
    %v1187 = vadd.f32 %v1161, %v1174
    %v1188 = vadd.f32 %v1162, %v1175
    %v1189 = vadd.f32 %v1163, %v1176
    %v1190 = vadd.f32 %v1164, %v1177
    %v1191 = vmul.f32 %v1111, %v1006
    %v1192 = vmul.f32 %v1111, %v1007
    %v1193 = vmul.f32 %v1111, %v1008
    %v1194 = vmul.f32 %v1111, %v1009
    %v1195 = vmul.f32 %v1111, %v1010
    %v1196 = vmul.f32 %v1111, %v1011
    %v1197 = vmul.f32 %v1111, %v1012
    %v1198 = vmul.f32 %v1111, %v1013
    %v1199 = vmul.f32 %v1111, %v1014
    %v1200 = vmul.f32 %v1111, %v1015
    %v1201 = vmul.f32 %v1111, %v1016
    %v1202 = vmul.f32 %v1111, %v1017
    %v1203 = vmul.f32 %v1111, %v1018
    %v1204 = vadd.f32 %v1178, %v1191
    %v1205 = vadd.f32 %v1179, %v1192
    %v1206 = vadd.f32 %v1180, %v1193
    %v1207 = vadd.f32 %v1181, %v1194
    %v1208 = vadd.f32 %v1182, %v1195
    %v1209 = vadd.f32 %v1183, %v1196
    %v1210 = vadd.f32 %v1184, %v1197
    %v1211 = vadd.f32 %v1185, %v1198
    %v1212 = vadd.f32 %v1186, %v1199
    %v1213 = vadd.f32 %v1187, %v1200
    %v1214 = vadd.f32 %v1188, %v1201
    %v1215 = vadd.f32 %v1189, %v1202
    %v1216 = vadd.f32 %v1190, %v1203
    %v1217 = vmul.f32 %v1070, %v579
    %v1218 = vmul.f32 %v1070, %v580
    %v1219 = vmul.f32 %v1070, %v581
    %v1220 = vmul.f32 %v1070, %v582
    %v1221 = vmul.f32 %v1070, %v583
    %v1222 = vmul.f32 %v1070, %v584
    %v1223 = vmul.f32 %v1070, %v585
    %v1224 = vmul.f32 %v1070, %v586
    %v1225 = vmul.f32 %v1070, %v587
    %v1226 = vmul.f32 %v1070, %v588
    %v1227 = vmul.f32 %v1070, %v589
    %v1228 = vmul.f32 %v1070, %v590
    %v1229 = vmul.f32 %v1070, %v591
    %v1230 = vmul.f32 %v1084, %v816
    %v1231 = vmul.f32 %v1084, %v817
    %v1232 = vmul.f32 %v1084, %v818
    %v1233 = vmul.f32 %v1084, %v819
    %v1234 = vmul.f32 %v1084, %v820
    %v1235 = vmul.f32 %v1084, %v821
    %v1236 = vmul.f32 %v1084, %v822
    %v1237 = vmul.f32 %v1084, %v823
    %v1238 = vmul.f32 %v1084, %v824
    %v1239 = vmul.f32 %v1084, %v825
    %v1240 = vmul.f32 %v1084, %v826
    %v1241 = vmul.f32 %v1084, %v827
    %v1242 = vmul.f32 %v1084, %v828
    %v1243 = vadd.f32 %v1217, %v1230
    %v1244 = vadd.f32 %v1218, %v1231
    %v1245 = vadd.f32 %v1219, %v1232
    %v1246 = vadd.f32 %v1220, %v1233
    %v1247 = vadd.f32 %v1221, %v1234
    %v1248 = vadd.f32 %v1222, %v1235
    %v1249 = vadd.f32 %v1223, %v1236
    %v1250 = vadd.f32 %v1224, %v1237
    %v1251 = vadd.f32 %v1225, %v1238
    %v1252 = vadd.f32 %v1226, %v1239
    %v1253 = vadd.f32 %v1227, %v1240
    %v1254 = vadd.f32 %v1228, %v1241
    %v1255 = vadd.f32 %v1229, %v1242
    %v1256 = vmul.f32 %v1111, %v1053
    %v1257 = vmul.f32 %v1111, %v1054
    %v1258 = vmul.f32 %v1111, %v1055
    %v1259 = vmul.f32 %v1111, %v1056
    %v1260 = vmul.f32 %v1111, %v1057
    %v1261 = vmul.f32 %v1111, %v1058
    %v1262 = vmul.f32 %v1111, %v1059
    %v1263 = vmul.f32 %v1111, %v1060
    %v1264 = vmul.f32 %v1111, %v1061
    %v1265 = vmul.f32 %v1111, %v1062
    %v1266 = vmul.f32 %v1111, %v1063
    %v1267 = vmul.f32 %v1111, %v1064
    %v1268 = vmul.f32 %v1111, %v1065
    %v1269 = vadd.f32 %v1243, %v1256
    %v1270 = vadd.f32 %v1244, %v1257
    %v1271 = vadd.f32 %v1245, %v1258
    %v1272 = vadd.f32 %v1246, %v1259
    %v1273 = vadd.f32 %v1247, %v1260
    %v1274 = vadd.f32 %v1248, %v1261
    %v1275 = vadd.f32 %v1249, %v1262
    %v1276 = vadd.f32 %v1250, %v1263
    %v1277 = vadd.f32 %v1251, %v1264
    %v1278 = vadd.f32 %v1252, %v1265
    %v1279 = vadd.f32 %v1253, %v1266
    %v1280 = vadd.f32 %v1254, %v1267
    %v1281 = vadd.f32 %v1255, %v1268
    %s1282 = sld [smem:[#allocation4 + $0x4]]
    %s1283 = sld [smem:[#allocation4 + $0x5]]
    %s1284 = sld [smem:[#allocation4 + $0x6]]
    %s1285 = sld [smem:[#allocation4 + $0x7]]
    %v1286 = vstv %s1282
    %v1287 = vmul.f32 %v1286, %v441
    %v1288 = vmul.f32 %v1286, %v442
    %v1289 = vmul.f32 %v1286, %v443
    %v1290 = vmul.f32 %v1286, %v444
    %v1291 = vmul.f32 %v1286, %v445
    %v1292 = vmul.f32 %v1286, %v446
    %v1293 = vmul.f32 %v1286, %v447
    %v1294 = vmul.f32 %v1286, %v448
    %v1295 = vmul.f32 %v1286, %v449
    %v1296 = vmul.f32 %v1286, %v450
    %v1297 = vmul.f32 %v1286, %v451
    %v1298 = vmul.f32 %v1286, %v452
    %v1299 = vmul.f32 %v1286, %v453
    %v1300 = vstv %s1283
    %v1301 = vmul.f32 %v1300, %v678
    %v1302 = vmul.f32 %v1300, %v679
    %v1303 = vmul.f32 %v1300, %v680
    %v1304 = vmul.f32 %v1300, %v681
    %v1305 = vmul.f32 %v1300, %v682
    %v1306 = vmul.f32 %v1300, %v683
    %v1307 = vmul.f32 %v1300, %v684
    %v1308 = vmul.f32 %v1300, %v685
    %v1309 = vmul.f32 %v1300, %v686
    %v1310 = vmul.f32 %v1300, %v687
    %v1311 = vmul.f32 %v1300, %v688
    %v1312 = vmul.f32 %v1300, %v689
    %v1313 = vmul.f32 %v1300, %v690
    %v1314 = vadd.f32 %v1287, %v1301
    %v1315 = vadd.f32 %v1288, %v1302
    %v1316 = vadd.f32 %v1289, %v1303
    %v1317 = vadd.f32 %v1290, %v1304
    %v1318 = vadd.f32 %v1291, %v1305
    %v1319 = vadd.f32 %v1292, %v1306
    %v1320 = vadd.f32 %v1293, %v1307
    %v1321 = vadd.f32 %v1294, %v1308
    %v1322 = vadd.f32 %v1295, %v1309
    %v1323 = vadd.f32 %v1296, %v1310
    %v1324 = vadd.f32 %v1297, %v1311
    %v1325 = vadd.f32 %v1298, %v1312
    %v1326 = vadd.f32 %v1299, %v1313
    %v1327 = vstv %s1284
    %v1328 = vmul.f32 %v1327, %v915
    %v1329 = vmul.f32 %v1327, %v916
    %v1330 = vmul.f32 %v1327, %v917
    %v1331 = vmul.f32 %v1327, %v918
    %v1332 = vmul.f32 %v1327, %v919
    %v1333 = vmul.f32 %v1327, %v920
    %v1334 = vmul.f32 %v1327, %v921
    %v1335 = vmul.f32 %v1327, %v922
    %v1336 = vmul.f32 %v1327, %v923
    %v1337 = vmul.f32 %v1327, %v924
    %v1338 = vmul.f32 %v1327, %v925
    %v1339 = vmul.f32 %v1327, %v926
    %v1340 = vmul.f32 %v1327, %v927
    %v1341 = vadd.f32 %v1314, %v1328
    %v1342 = vadd.f32 %v1315, %v1329
    %v1343 = vadd.f32 %v1316, %v1330
    %v1344 = vadd.f32 %v1317, %v1331
    %v1345 = vadd.f32 %v1318, %v1332
    %v1346 = vadd.f32 %v1319, %v1333
    %v1347 = vadd.f32 %v1320, %v1334
    %v1348 = vadd.f32 %v1321, %v1335
    %v1349 = vadd.f32 %v1322, %v1336
    %v1350 = vadd.f32 %v1323, %v1337
    %v1351 = vadd.f32 %v1324, %v1338
    %v1352 = vadd.f32 %v1325, %v1339
    %v1353 = vadd.f32 %v1326, %v1340
    %v1354 = vstv %s1285
    %v1355 = vadd.f32 %v1341, %v1354
    %v1356 = vadd.f32 %v1342, %v1354
    %v1357 = vadd.f32 %v1343, %v1354
    %v1358 = vadd.f32 %v1344, %v1354
    %v1359 = vadd.f32 %v1345, %v1354
    %v1360 = vadd.f32 %v1346, %v1354
    %v1361 = vadd.f32 %v1347, %v1354
    %v1362 = vadd.f32 %v1348, %v1354
    %v1363 = vadd.f32 %v1349, %v1354
    %v1364 = vadd.f32 %v1350, %v1354
    %v1365 = vadd.f32 %v1351, %v1354
    %v1366 = vadd.f32 %v1352, %v1354
    %v1367 = vadd.f32 %v1353, %v1354
    %v1368 = vmul.f32 %v1286, %v532
    %v1369 = vmul.f32 %v1286, %v533
    %v1370 = vmul.f32 %v1286, %v534
    %v1371 = vmul.f32 %v1286, %v535
    %v1372 = vmul.f32 %v1286, %v536
    %v1373 = vmul.f32 %v1286, %v537
    %v1374 = vmul.f32 %v1286, %v538
    %v1375 = vmul.f32 %v1286, %v539
    %v1376 = vmul.f32 %v1286, %v540
    %v1377 = vmul.f32 %v1286, %v541
    %v1378 = vmul.f32 %v1286, %v542
    %v1379 = vmul.f32 %v1286, %v543
    %v1380 = vmul.f32 %v1286, %v544
    %v1381 = vmul.f32 %v1300, %v769
    %v1382 = vmul.f32 %v1300, %v770
    %v1383 = vmul.f32 %v1300, %v771
    %v1384 = vmul.f32 %v1300, %v772
    %v1385 = vmul.f32 %v1300, %v773
    %v1386 = vmul.f32 %v1300, %v774
    %v1387 = vmul.f32 %v1300, %v775
    %v1388 = vmul.f32 %v1300, %v776
    %v1389 = vmul.f32 %v1300, %v777
    %v1390 = vmul.f32 %v1300, %v778
    %v1391 = vmul.f32 %v1300, %v779
    %v1392 = vmul.f32 %v1300, %v780
    %v1393 = vmul.f32 %v1300, %v781
    %v1394 = vadd.f32 %v1368, %v1381
    %v1395 = vadd.f32 %v1369, %v1382
    %v1396 = vadd.f32 %v1370, %v1383
    %v1397 = vadd.f32 %v1371, %v1384
    %v1398 = vadd.f32 %v1372, %v1385
    %v1399 = vadd.f32 %v1373, %v1386
    %v1400 = vadd.f32 %v1374, %v1387
    %v1401 = vadd.f32 %v1375, %v1388
    %v1402 = vadd.f32 %v1376, %v1389
    %v1403 = vadd.f32 %v1377, %v1390
    %v1404 = vadd.f32 %v1378, %v1391
    %v1405 = vadd.f32 %v1379, %v1392
    %v1406 = vadd.f32 %v1380, %v1393
    %v1407 = vmul.f32 %v1327, %v1006
    %v1408 = vmul.f32 %v1327, %v1007
    %v1409 = vmul.f32 %v1327, %v1008
    %v1410 = vmul.f32 %v1327, %v1009
    %v1411 = vmul.f32 %v1327, %v1010
    %v1412 = vmul.f32 %v1327, %v1011
    %v1413 = vmul.f32 %v1327, %v1012
    %v1414 = vmul.f32 %v1327, %v1013
    %v1415 = vmul.f32 %v1327, %v1014
    %v1416 = vmul.f32 %v1327, %v1015
    %v1417 = vmul.f32 %v1327, %v1016
    %v1418 = vmul.f32 %v1327, %v1017
    %v1419 = vmul.f32 %v1327, %v1018
    %v1420 = vadd.f32 %v1394, %v1407
    %v1421 = vadd.f32 %v1395, %v1408
    %v1422 = vadd.f32 %v1396, %v1409
    %v1423 = vadd.f32 %v1397, %v1410
    %v1424 = vadd.f32 %v1398, %v1411
    %v1425 = vadd.f32 %v1399, %v1412
    %v1426 = vadd.f32 %v1400, %v1413
    %v1427 = vadd.f32 %v1401, %v1414
    %v1428 = vadd.f32 %v1402, %v1415
    %v1429 = vadd.f32 %v1403, %v1416
    %v1430 = vadd.f32 %v1404, %v1417
    %v1431 = vadd.f32 %v1405, %v1418
    %v1432 = vadd.f32 %v1406, %v1419
    %v1433 = vmul.f32 %v1286, %v579
    %v1434 = vmul.f32 %v1286, %v580
    %v1435 = vmul.f32 %v1286, %v581
    %v1436 = vmul.f32 %v1286, %v582
    %v1437 = vmul.f32 %v1286, %v583
    %v1438 = vmul.f32 %v1286, %v584
    %v1439 = vmul.f32 %v1286, %v585
    %v1440 = vmul.f32 %v1286, %v586
    %v1441 = vmul.f32 %v1286, %v587
    %v1442 = vmul.f32 %v1286, %v588
    %v1443 = vmul.f32 %v1286, %v589
    %v1444 = vmul.f32 %v1286, %v590
    %v1445 = vmul.f32 %v1286, %v591
    %v1446 = vmul.f32 %v1300, %v816
    %v1447 = vmul.f32 %v1300, %v817
    %v1448 = vmul.f32 %v1300, %v818
    %v1449 = vmul.f32 %v1300, %v819
    %v1450 = vmul.f32 %v1300, %v820
    %v1451 = vmul.f32 %v1300, %v821
    %v1452 = vmul.f32 %v1300, %v822
    %v1453 = vmul.f32 %v1300, %v823
    %v1454 = vmul.f32 %v1300, %v824
    %v1455 = vmul.f32 %v1300, %v825
    %v1456 = vmul.f32 %v1300, %v826
    %v1457 = vmul.f32 %v1300, %v827
    %v1458 = vmul.f32 %v1300, %v828
    %v1459 = vadd.f32 %v1433, %v1446
    %v1460 = vadd.f32 %v1434, %v1447
    %v1461 = vadd.f32 %v1435, %v1448
    %v1462 = vadd.f32 %v1436, %v1449
    %v1463 = vadd.f32 %v1437, %v1450
    %v1464 = vadd.f32 %v1438, %v1451
    %v1465 = vadd.f32 %v1439, %v1452
    %v1466 = vadd.f32 %v1440, %v1453
    %v1467 = vadd.f32 %v1441, %v1454
    %v1468 = vadd.f32 %v1442, %v1455
    %v1469 = vadd.f32 %v1443, %v1456
    %v1470 = vadd.f32 %v1444, %v1457
    %v1471 = vadd.f32 %v1445, %v1458
    %v1472 = vmul.f32 %v1327, %v1053
    %v1473 = vmul.f32 %v1327, %v1054
    %v1474 = vmul.f32 %v1327, %v1055
    %v1475 = vmul.f32 %v1327, %v1056
    %v1476 = vmul.f32 %v1327, %v1057
    %v1477 = vmul.f32 %v1327, %v1058
    %v1478 = vmul.f32 %v1327, %v1059
    %v1479 = vmul.f32 %v1327, %v1060
    %v1480 = vmul.f32 %v1327, %v1061
    %v1481 = vmul.f32 %v1327, %v1062
    %v1482 = vmul.f32 %v1327, %v1063
    %v1483 = vmul.f32 %v1327, %v1064
    %v1484 = vmul.f32 %v1327, %v1065
    %v1485 = vadd.f32 %v1459, %v1472
    %v1486 = vadd.f32 %v1460, %v1473
    %v1487 = vadd.f32 %v1461, %v1474
    %v1488 = vadd.f32 %v1462, %v1475
    %v1489 = vadd.f32 %v1463, %v1476
    %v1490 = vadd.f32 %v1464, %v1477
    %v1491 = vadd.f32 %v1465, %v1478
    %v1492 = vadd.f32 %v1466, %v1479
    %v1493 = vadd.f32 %v1467, %v1480
    %v1494 = vadd.f32 %v1468, %v1481
    %v1495 = vadd.f32 %v1469, %v1482
    %v1496 = vadd.f32 %v1470, %v1483
    %v1497 = vadd.f32 %v1471, %v1484
    %s1498 = sld [smem:[#allocation4 + $0x8]]
    %s1499 = sld [smem:[#allocation4 + $0x9]]
    %s1500 = sld [smem:[#allocation4 + $0xa]]
    %s1501 = sld [smem:[#allocation4 + $0xb]]
    %v1502 = vstv %s1498
    %v1503 = vmul.f32 %v1502, %v441
    %v1504 = vmul.f32 %v1502, %v442
    %v1505 = vmul.f32 %v1502, %v443
    %v1506 = vmul.f32 %v1502, %v444
    %v1507 = vmul.f32 %v1502, %v445
    %v1508 = vmul.f32 %v1502, %v446
    %v1509 = vmul.f32 %v1502, %v447
    %v1510 = vmul.f32 %v1502, %v448
    %v1511 = vmul.f32 %v1502, %v449
    %v1512 = vmul.f32 %v1502, %v450
    %v1513 = vmul.f32 %v1502, %v451
    %v1514 = vmul.f32 %v1502, %v452
    %v1515 = vmul.f32 %v1502, %v453
    %v1516 = vstv %s1499
    %v1517 = vmul.f32 %v1516, %v678
    %v1518 = vmul.f32 %v1516, %v679
    %v1519 = vmul.f32 %v1516, %v680
    %v1520 = vmul.f32 %v1516, %v681
    %v1521 = vmul.f32 %v1516, %v682
    %v1522 = vmul.f32 %v1516, %v683
    %v1523 = vmul.f32 %v1516, %v684
    %v1524 = vmul.f32 %v1516, %v685
    %v1525 = vmul.f32 %v1516, %v686
    %v1526 = vmul.f32 %v1516, %v687
    %v1527 = vmul.f32 %v1516, %v688
    %v1528 = vmul.f32 %v1516, %v689
    %v1529 = vmul.f32 %v1516, %v690
    %v1530 = vadd.f32 %v1503, %v1517
    %v1531 = vadd.f32 %v1504, %v1518
    %v1532 = vadd.f32 %v1505, %v1519
    %v1533 = vadd.f32 %v1506, %v1520
    %v1534 = vadd.f32 %v1507, %v1521
    %v1535 = vadd.f32 %v1508, %v1522
    %v1536 = vadd.f32 %v1509, %v1523
    %v1537 = vadd.f32 %v1510, %v1524
    %v1538 = vadd.f32 %v1511, %v1525
    %v1539 = vadd.f32 %v1512, %v1526
    %v1540 = vadd.f32 %v1513, %v1527
    %v1541 = vadd.f32 %v1514, %v1528
    %v1542 = vadd.f32 %v1515, %v1529
    %v1543 = vstv %s1500
    %v1544 = vmul.f32 %v1543, %v915
    %v1545 = vmul.f32 %v1543, %v916
    %v1546 = vmul.f32 %v1543, %v917
    %v1547 = vmul.f32 %v1543, %v918
    %v1548 = vmul.f32 %v1543, %v919
    %v1549 = vmul.f32 %v1543, %v920
    %v1550 = vmul.f32 %v1543, %v921
    %v1551 = vmul.f32 %v1543, %v922
    %v1552 = vmul.f32 %v1543, %v923
    %v1553 = vmul.f32 %v1543, %v924
    %v1554 = vmul.f32 %v1543, %v925
    %v1555 = vmul.f32 %v1543, %v926
    %v1556 = vmul.f32 %v1543, %v927
    %v1557 = vadd.f32 %v1530, %v1544
    %v1558 = vadd.f32 %v1531, %v1545
    %v1559 = vadd.f32 %v1532, %v1546
    %v1560 = vadd.f32 %v1533, %v1547
    %v1561 = vadd.f32 %v1534, %v1548
    %v1562 = vadd.f32 %v1535, %v1549
    %v1563 = vadd.f32 %v1536, %v1550
    %v1564 = vadd.f32 %v1537, %v1551
    %v1565 = vadd.f32 %v1538, %v1552
    %v1566 = vadd.f32 %v1539, %v1553
    %v1567 = vadd.f32 %v1540, %v1554
    %v1568 = vadd.f32 %v1541, %v1555
    %v1569 = vadd.f32 %v1542, %v1556
    %v1570 = vstv %s1501
    %v1571 = vadd.f32 %v1557, %v1570
    %v1572 = vadd.f32 %v1558, %v1570
    %v1573 = vadd.f32 %v1559, %v1570
    %v1574 = vadd.f32 %v1560, %v1570
    %v1575 = vadd.f32 %v1561, %v1570
    %v1576 = vadd.f32 %v1562, %v1570
    %v1577 = vadd.f32 %v1563, %v1570
    %v1578 = vadd.f32 %v1564, %v1570
    %v1579 = vadd.f32 %v1565, %v1570
    %v1580 = vadd.f32 %v1566, %v1570
    %v1581 = vadd.f32 %v1567, %v1570
    %v1582 = vadd.f32 %v1568, %v1570
    %v1583 = vadd.f32 %v1569, %v1570
    %v1584 = vmul.f32 %v1502, %v532
    %v1585 = vmul.f32 %v1502, %v533
    %v1586 = vmul.f32 %v1502, %v534
    %v1587 = vmul.f32 %v1502, %v535
    %v1588 = vmul.f32 %v1502, %v536
    %v1589 = vmul.f32 %v1502, %v537
    %v1590 = vmul.f32 %v1502, %v538
    %v1591 = vmul.f32 %v1502, %v539
    %v1592 = vmul.f32 %v1502, %v540
    %v1593 = vmul.f32 %v1502, %v541
    %v1594 = vmul.f32 %v1502, %v542
    %v1595 = vmul.f32 %v1502, %v543
    %v1596 = vmul.f32 %v1502, %v544
    %v1597 = vmul.f32 %v1516, %v769
    %v1598 = vmul.f32 %v1516, %v770
    %v1599 = vmul.f32 %v1516, %v771
    %v1600 = vmul.f32 %v1516, %v772
    %v1601 = vmul.f32 %v1516, %v773
    %v1602 = vmul.f32 %v1516, %v774
    %v1603 = vmul.f32 %v1516, %v775
    %v1604 = vmul.f32 %v1516, %v776
    %v1605 = vmul.f32 %v1516, %v777
    %v1606 = vmul.f32 %v1516, %v778
    %v1607 = vmul.f32 %v1516, %v779
    %v1608 = vmul.f32 %v1516, %v780
    %v1609 = vmul.f32 %v1516, %v781
    %v1610 = vadd.f32 %v1584, %v1597
    %v1611 = vadd.f32 %v1585, %v1598
    %v1612 = vadd.f32 %v1586, %v1599
    %v1613 = vadd.f32 %v1587, %v1600
    %v1614 = vadd.f32 %v1588, %v1601
    %v1615 = vadd.f32 %v1589, %v1602
    %v1616 = vadd.f32 %v1590, %v1603
    %v1617 = vadd.f32 %v1591, %v1604
    %v1618 = vadd.f32 %v1592, %v1605
    %v1619 = vadd.f32 %v1593, %v1606
    %v1620 = vadd.f32 %v1594, %v1607
    %v1621 = vadd.f32 %v1595, %v1608
    %v1622 = vadd.f32 %v1596, %v1609
    %v1623 = vmul.f32 %v1543, %v1006
    %v1624 = vmul.f32 %v1543, %v1007
    %v1625 = vmul.f32 %v1543, %v1008
    %v1626 = vmul.f32 %v1543, %v1009
    %v1627 = vmul.f32 %v1543, %v1010
    %v1628 = vmul.f32 %v1543, %v1011
    %v1629 = vmul.f32 %v1543, %v1012
    %v1630 = vmul.f32 %v1543, %v1013
    %v1631 = vmul.f32 %v1543, %v1014
    %v1632 = vmul.f32 %v1543, %v1015
    %v1633 = vmul.f32 %v1543, %v1016
    %v1634 = vmul.f32 %v1543, %v1017
    %v1635 = vmul.f32 %v1543, %v1018
    %v1636 = vadd.f32 %v1610, %v1623
    %v1637 = vadd.f32 %v1611, %v1624
    %v1638 = vadd.f32 %v1612, %v1625
    %v1639 = vadd.f32 %v1613, %v1626
    %v1640 = vadd.f32 %v1614, %v1627
    %v1641 = vadd.f32 %v1615, %v1628
    %v1642 = vadd.f32 %v1616, %v1629
    %v1643 = vadd.f32 %v1617, %v1630
    %v1644 = vadd.f32 %v1618, %v1631
    %v1645 = vadd.f32 %v1619, %v1632
    %v1646 = vadd.f32 %v1620, %v1633
    %v1647 = vadd.f32 %v1621, %v1634
    %v1648 = vadd.f32 %v1622, %v1635
    %v1649 = vmul.f32 %v1502, %v579
    %v1650 = vmul.f32 %v1502, %v580
    %v1651 = vmul.f32 %v1502, %v581
    %v1652 = vmul.f32 %v1502, %v582
    %v1653 = vmul.f32 %v1502, %v583
    %v1654 = vmul.f32 %v1502, %v584
    %v1655 = vmul.f32 %v1502, %v585
    %v1656 = vmul.f32 %v1502, %v586
    %v1657 = vmul.f32 %v1502, %v587
    %v1658 = vmul.f32 %v1502, %v588
    %v1659 = vmul.f32 %v1502, %v589
    %v1660 = vmul.f32 %v1502, %v590
    %v1661 = vmul.f32 %v1502, %v591
    %v1662 = vmul.f32 %v1516, %v816
    %v1663 = vmul.f32 %v1516, %v817
    %v1664 = vmul.f32 %v1516, %v818
    %v1665 = vmul.f32 %v1516, %v819
    %v1666 = vmul.f32 %v1516, %v820
    %v1667 = vmul.f32 %v1516, %v821
    %v1668 = vmul.f32 %v1516, %v822
    %v1669 = vmul.f32 %v1516, %v823
    %v1670 = vmul.f32 %v1516, %v824
    %v1671 = vmul.f32 %v1516, %v825
    %v1672 = vmul.f32 %v1516, %v826
    %v1673 = vmul.f32 %v1516, %v827
    %v1674 = vmul.f32 %v1516, %v828
    %v1675 = vadd.f32 %v1649, %v1662
    %v1676 = vadd.f32 %v1650, %v1663
    %v1677 = vadd.f32 %v1651, %v1664
    %v1678 = vadd.f32 %v1652, %v1665
    %v1679 = vadd.f32 %v1653, %v1666
    %v1680 = vadd.f32 %v1654, %v1667
    %v1681 = vadd.f32 %v1655, %v1668
    %v1682 = vadd.f32 %v1656, %v1669
    %v1683 = vadd.f32 %v1657, %v1670
    %v1684 = vadd.f32 %v1658, %v1671
    %v1685 = vadd.f32 %v1659, %v1672
    %v1686 = vadd.f32 %v1660, %v1673
    %v1687 = vadd.f32 %v1661, %v1674
    %v1688 = vmul.f32 %v1543, %v1053
    %v1689 = vmul.f32 %v1543, %v1054
    %v1690 = vmul.f32 %v1543, %v1055
    %v1691 = vmul.f32 %v1543, %v1056
    %v1692 = vmul.f32 %v1543, %v1057
    %v1693 = vmul.f32 %v1543, %v1058
    %v1694 = vmul.f32 %v1543, %v1059
    %v1695 = vmul.f32 %v1543, %v1060
    %v1696 = vmul.f32 %v1543, %v1061
    %v1697 = vmul.f32 %v1543, %v1062
    %v1698 = vmul.f32 %v1543, %v1063
    %v1699 = vmul.f32 %v1543, %v1064
    %v1700 = vmul.f32 %v1543, %v1065
    %v1701 = vadd.f32 %v1675, %v1688
    %v1702 = vadd.f32 %v1676, %v1689
    %v1703 = vadd.f32 %v1677, %v1690
    %v1704 = vadd.f32 %v1678, %v1691
    %v1705 = vadd.f32 %v1679, %v1692
    %v1706 = vadd.f32 %v1680, %v1693
    %v1707 = vadd.f32 %v1681, %v1694
    %v1708 = vadd.f32 %v1682, %v1695
    %v1709 = vadd.f32 %v1683, %v1696
    %v1710 = vadd.f32 %v1684, %v1697
    %v1711 = vadd.f32 %v1685, %v1698
    %v1712 = vadd.f32 %v1686, %v1699
    %v1713 = vadd.f32 %v1687, %v1700
    %v1714 = vrcp.pop %v1571
    %v1715 = vmul.f32 %v1571, %v1714
    %v1716 = vsub.f32 1.0, %v1715
    %v1717 = vmul.f32 %v1714, %v1716
    %v1718 = vadd.f32 %v1714, %v1717
    %vm1719 = vweird.f32 %v1571
    %vm1720 = vweird.f32 %v1714
    %vm1721 = vmor %vm1719, %vm1720
    %v1722 = vsel %vm1721, %v1714, %v1718
    %v1723 = vand.u32 2147483647, %v1571
    %vm1724 = vcmp.eq.f32.partialorder %v1723, 8.507059e+37
    %v1725 = vand.u32 %v1571, 2147483648
    %v1726 = vor.u32 1.1754944e-38, %v1725
    %v1727 = vsel %vm1724, %v1726, %v1722
    %v1728 = vmul.f32 1.0, %v1727
    %v1729 = vrcp.pop %v1572
    %v1730 = vmul.f32 %v1572, %v1729
    %v1731 = vsub.f32 1.0, %v1730
    %v1732 = vmul.f32 %v1729, %v1731
    %v1733 = vadd.f32 %v1729, %v1732
    %vm1734 = vweird.f32 %v1572
    %vm1735 = vweird.f32 %v1729
    %vm1736 = vmor %vm1734, %vm1735
    %v1737 = vsel %vm1736, %v1729, %v1733
    %v1738 = vand.u32 2147483647, %v1572
    %vm1739 = vcmp.eq.f32.partialorder %v1738, 8.507059e+37
    %v1740 = vand.u32 %v1572, 2147483648
    %v1741 = vor.u32 1.1754944e-38, %v1740
    %v1742 = vsel %vm1739, %v1741, %v1737
    %v1743 = vmul.f32 1.0, %v1742
    %v1744 = vrcp.pop %v1573
    %v1745 = vmul.f32 %v1573, %v1744
    %v1746 = vsub.f32 1.0, %v1745
    %v1747 = vmul.f32 %v1744, %v1746
    %v1748 = vadd.f32 %v1744, %v1747
    %vm1749 = vweird.f32 %v1573
    %vm1750 = vweird.f32 %v1744
    %vm1751 = vmor %vm1749, %vm1750
    %v1752 = vsel %vm1751, %v1744, %v1748
    %v1753 = vand.u32 2147483647, %v1573
    %vm1754 = vcmp.eq.f32.partialorder %v1753, 8.507059e+37
    %v1755 = vand.u32 %v1573, 2147483648
    %v1756 = vor.u32 1.1754944e-38, %v1755
    %v1757 = vsel %vm1754, %v1756, %v1752
    %v1758 = vmul.f32 1.0, %v1757
    %v1759 = vrcp.pop %v1574
    %v1760 = vmul.f32 %v1574, %v1759
    %v1761 = vsub.f32 1.0, %v1760
    %v1762 = vmul.f32 %v1759, %v1761
    %v1763 = vadd.f32 %v1759, %v1762
    %vm1764 = vweird.f32 %v1574
    %vm1765 = vweird.f32 %v1759
    %vm1766 = vmor %vm1764, %vm1765
    %v1767 = vsel %vm1766, %v1759, %v1763
    %v1768 = vand.u32 2147483647, %v1574
    %vm1769 = vcmp.eq.f32.partialorder %v1768, 8.507059e+37
    %v1770 = vand.u32 %v1574, 2147483648
    %v1771 = vor.u32 1.1754944e-38, %v1770
    %v1772 = vsel %vm1769, %v1771, %v1767
    %v1773 = vmul.f32 1.0, %v1772
    %v1774 = vrcp.pop %v1575
    %v1775 = vmul.f32 %v1575, %v1774
    %v1776 = vsub.f32 1.0, %v1775
    %v1777 = vmul.f32 %v1774, %v1776
    %v1778 = vadd.f32 %v1774, %v1777
    %vm1779 = vweird.f32 %v1575
    %vm1780 = vweird.f32 %v1774
    %vm1781 = vmor %vm1779, %vm1780
    %v1782 = vsel %vm1781, %v1774, %v1778
    %v1783 = vand.u32 2147483647, %v1575
    %vm1784 = vcmp.eq.f32.partialorder %v1783, 8.507059e+37
    %v1785 = vand.u32 %v1575, 2147483648
    %v1786 = vor.u32 1.1754944e-38, %v1785
    %v1787 = vsel %vm1784, %v1786, %v1782
    %v1788 = vmul.f32 1.0, %v1787
    %v1789 = vrcp.pop %v1576
    %v1790 = vmul.f32 %v1576, %v1789
    %v1791 = vsub.f32 1.0, %v1790
    %v1792 = vmul.f32 %v1789, %v1791
    %v1793 = vadd.f32 %v1789, %v1792
    %vm1794 = vweird.f32 %v1576
    %vm1795 = vweird.f32 %v1789
    %vm1796 = vmor %vm1794, %vm1795
    %v1797 = vsel %vm1796, %v1789, %v1793
    %v1798 = vand.u32 2147483647, %v1576
    %vm1799 = vcmp.eq.f32.partialorder %v1798, 8.507059e+37
    %v1800 = vand.u32 %v1576, 2147483648
    %v1801 = vor.u32 1.1754944e-38, %v1800
    %v1802 = vsel %vm1799, %v1801, %v1797
    %v1803 = vmul.f32 1.0, %v1802
    %v1804 = vrcp.pop %v1577
    %v1805 = vmul.f32 %v1577, %v1804
    %v1806 = vsub.f32 1.0, %v1805
    %v1807 = vmul.f32 %v1804, %v1806
    %v1808 = vadd.f32 %v1804, %v1807
    %vm1809 = vweird.f32 %v1577
    %vm1810 = vweird.f32 %v1804
    %vm1811 = vmor %vm1809, %vm1810
    %v1812 = vsel %vm1811, %v1804, %v1808
    %v1813 = vand.u32 2147483647, %v1577
    %vm1814 = vcmp.eq.f32.partialorder %v1813, 8.507059e+37
    %v1815 = vand.u32 %v1577, 2147483648
    %v1816 = vor.u32 1.1754944e-38, %v1815
    %v1817 = vsel %vm1814, %v1816, %v1812
    %v1818 = vmul.f32 1.0, %v1817
    %v1819 = vrcp.pop %v1578
    %v1820 = vmul.f32 %v1578, %v1819
    %v1821 = vsub.f32 1.0, %v1820
    %v1822 = vmul.f32 %v1819, %v1821
    %v1823 = vadd.f32 %v1819, %v1822
    %vm1824 = vweird.f32 %v1578
    %vm1825 = vweird.f32 %v1819
    %vm1826 = vmor %vm1824, %vm1825
    %v1827 = vsel %vm1826, %v1819, %v1823
    %v1828 = vand.u32 2147483647, %v1578
    %vm1829 = vcmp.eq.f32.partialorder %v1828, 8.507059e+37
    %v1830 = vand.u32 %v1578, 2147483648
    %v1831 = vor.u32 1.1754944e-38, %v1830
    %v1832 = vsel %vm1829, %v1831, %v1827
    %v1833 = vmul.f32 1.0, %v1832
    %v1834 = vrcp.pop %v1579
    %v1835 = vmul.f32 %v1579, %v1834
    %v1836 = vsub.f32 1.0, %v1835
    %v1837 = vmul.f32 %v1834, %v1836
    %v1838 = vadd.f32 %v1834, %v1837
    %vm1839 = vweird.f32 %v1579
    %vm1840 = vweird.f32 %v1834
    %vm1841 = vmor %vm1839, %vm1840
    %v1842 = vsel %vm1841, %v1834, %v1838
    %v1843 = vand.u32 2147483647, %v1579
    %vm1844 = vcmp.eq.f32.partialorder %v1843, 8.507059e+37
    %v1845 = vand.u32 %v1579, 2147483648
    %v1846 = vor.u32 1.1754944e-38, %v1845
    %v1847 = vsel %vm1844, %v1846, %v1842
    %v1848 = vmul.f32 1.0, %v1847
    %v1849 = vrcp.pop %v1580
    %v1850 = vmul.f32 %v1580, %v1849
    %v1851 = vsub.f32 1.0, %v1850
    %v1852 = vmul.f32 %v1849, %v1851
    %v1853 = vadd.f32 %v1849, %v1852
    %vm1854 = vweird.f32 %v1580
    %vm1855 = vweird.f32 %v1849
    %vm1856 = vmor %vm1854, %vm1855
    %v1857 = vsel %vm1856, %v1849, %v1853
    %v1858 = vand.u32 2147483647, %v1580
    %vm1859 = vcmp.eq.f32.partialorder %v1858, 8.507059e+37
    %v1860 = vand.u32 %v1580, 2147483648
    %v1861 = vor.u32 1.1754944e-38, %v1860
    %v1862 = vsel %vm1859, %v1861, %v1857
    %v1863 = vmul.f32 1.0, %v1862
    %v1864 = vrcp.pop %v1581
    %v1865 = vmul.f32 %v1581, %v1864
    %v1866 = vsub.f32 1.0, %v1865
    %v1867 = vmul.f32 %v1864, %v1866
    %v1868 = vadd.f32 %v1864, %v1867
    %vm1869 = vweird.f32 %v1581
    %vm1870 = vweird.f32 %v1864
    %vm1871 = vmor %vm1869, %vm1870
    %v1872 = vsel %vm1871, %v1864, %v1868
    %v1873 = vand.u32 2147483647, %v1581
    %vm1874 = vcmp.eq.f32.partialorder %v1873, 8.507059e+37
    %v1875 = vand.u32 %v1581, 2147483648
    %v1876 = vor.u32 1.1754944e-38, %v1875
    %v1877 = vsel %vm1874, %v1876, %v1872
    %v1878 = vmul.f32 1.0, %v1877
    %v1879 = vrcp.pop %v1582
    %v1880 = vmul.f32 %v1582, %v1879
    %v1881 = vsub.f32 1.0, %v1880
    %v1882 = vmul.f32 %v1879, %v1881
    %v1883 = vadd.f32 %v1879, %v1882
    %vm1884 = vweird.f32 %v1582
    %vm1885 = vweird.f32 %v1879
    %vm1886 = vmor %vm1884, %vm1885
    %v1887 = vsel %vm1886, %v1879, %v1883
    %v1888 = vand.u32 2147483647, %v1582
    %vm1889 = vcmp.eq.f32.partialorder %v1888, 8.507059e+37
    %v1890 = vand.u32 %v1582, 2147483648
    %v1891 = vor.u32 1.1754944e-38, %v1890
    %v1892 = vsel %vm1889, %v1891, %v1887
    %v1893 = vmul.f32 1.0, %v1892
    %v1894 = vrcp.pop %v1583
    %v1895 = vmul.f32 %v1583, %v1894
    %v1896 = vsub.f32 1.0, %v1895
    %v1897 = vmul.f32 %v1894, %v1896
    %v1898 = vadd.f32 %v1894, %v1897
    %vm1899 = vweird.f32 %v1583
    %vm1900 = vweird.f32 %v1894
    %vm1901 = vmor %vm1899, %vm1900
    %v1902 = vsel %vm1901, %v1894, %v1898
    %v1903 = vand.u32 2147483647, %v1583
    %vm1904 = vcmp.eq.f32.partialorder %v1903, 8.507059e+37
    %v1905 = vand.u32 %v1583, 2147483648
    %v1906 = vor.u32 1.1754944e-38, %v1905
    %v1907 = vsel %vm1904, %v1906, %v1902
    %v1908 = vmul.f32 1.0, %v1907
    %v1909 = vmul.f32 %v1139, %v1728
    %v1910 = vmul.f32 %v1140, %v1743
    %v1911 = vmul.f32 %v1141, %v1758
    %v1912 = vmul.f32 %v1142, %v1773
    %v1913 = vmul.f32 %v1143, %v1788
    %v1914 = vmul.f32 %v1144, %v1803
    %v1915 = vmul.f32 %v1145, %v1818
    %v1916 = vmul.f32 %v1146, %v1833
    %v1917 = vmul.f32 %v1147, %v1848
    %v1918 = vmul.f32 %v1148, %v1863
    %v1919 = vmul.f32 %v1149, %v1878
    %v1920 = vmul.f32 %v1150, %v1893
    %v1921 = vmul.f32 %v1151, %v1908
    %v1922 = vmul.f32 %v1355, %v1728
    %v1923 = vmul.f32 %v1356, %v1743
    %v1924 = vmul.f32 %v1357, %v1758
    %v1925 = vmul.f32 %v1358, %v1773
    %v1926 = vmul.f32 %v1359, %v1788
    %v1927 = vmul.f32 %v1360, %v1803
    %v1928 = vmul.f32 %v1361, %v1818
    %v1929 = vmul.f32 %v1362, %v1833
    %v1930 = vmul.f32 %v1363, %v1848
    %v1931 = vmul.f32 %v1364, %v1863
    %v1932 = vmul.f32 %v1365, %v1878
    %v1933 = vmul.f32 %v1366, %v1893
    %v1934 = vmul.f32 %v1367, %v1908
    %s1935 = sld [smem:[#allocation6]]
    %v1936 = vstv %s1935
    %v1937 = vmul.f32 %v1936, %v1909
    %v1938 = vmul.f32 %v1936, %v1910
    %v1939 = vmul.f32 %v1936, %v1911
    %v1940 = vmul.f32 %v1936, %v1912
    %v1941 = vmul.f32 %v1936, %v1913
    %v1942 = vmul.f32 %v1936, %v1914
    %v1943 = vmul.f32 %v1936, %v1915
    %v1944 = vmul.f32 %v1936, %v1916
    %v1945 = vmul.f32 %v1936, %v1917
    %v1946 = vmul.f32 %v1936, %v1918
    %v1947 = vmul.f32 %v1936, %v1919
    %v1948 = vmul.f32 %v1936, %v1920
    %v1949 = vmul.f32 %v1936, %v1921
    %s1950 = sld [smem:[#allocation6 + $0x1]]
    %v1951 = vstv %s1950
    %v1952 = vmul.f32 %v1951, %v1922
    %v1953 = vmul.f32 %v1951, %v1923
    %v1954 = vmul.f32 %v1951, %v1924
    %v1955 = vmul.f32 %v1951, %v1925
    %v1956 = vmul.f32 %v1951, %v1926
    %v1957 = vmul.f32 %v1951, %v1927
    %v1958 = vmul.f32 %v1951, %v1928
    %v1959 = vmul.f32 %v1951, %v1929
    %v1960 = vmul.f32 %v1951, %v1930
    %v1961 = vmul.f32 %v1951, %v1931
    %v1962 = vmul.f32 %v1951, %v1932
    %v1963 = vmul.f32 %v1951, %v1933
    %v1964 = vmul.f32 %v1951, %v1934
    %v1965 = vadd.f32 %v1937, %v1952
    %v1966 = vadd.f32 %v1938, %v1953
    %v1967 = vadd.f32 %v1939, %v1954
    %v1968 = vadd.f32 %v1940, %v1955
    %v1969 = vadd.f32 %v1941, %v1956
    %v1970 = vadd.f32 %v1942, %v1957
    %v1971 = vadd.f32 %v1943, %v1958
    %v1972 = vadd.f32 %v1944, %v1959
    %v1973 = vadd.f32 %v1945, %v1960
    %v1974 = vadd.f32 %v1946, %v1961
    %v1975 = vadd.f32 %v1947, %v1962
    %v1976 = vadd.f32 %v1948, %v1963
    %v1977 = vadd.f32 %v1949, %v1964
    %s1978 = sld [smem:[#allocation6 + $0x2]]
    %v1979 = vstv %s1978
    %v1980 = vadd.f32 %v1965, %v1979
    %v1981 = vadd.f32 %v1966, %v1979
    %v1982 = vadd.f32 %v1967, %v1979
    %v1983 = vadd.f32 %v1968, %v1979
    %v1984 = vadd.f32 %v1969, %v1979
    %v1985 = vadd.f32 %v1970, %v1979
    %v1986 = vadd.f32 %v1971, %v1979
    %v1987 = vadd.f32 %v1972, %v1979
    %v1988 = vadd.f32 %v1973, %v1979
    %v1989 = vadd.f32 %v1974, %v1979
    %v1990 = vadd.f32 %v1975, %v1979
    %v1991 = vadd.f32 %v1976, %v1979
    %v1992 = vadd.f32 %v1977, %v1979
    %s1993 = sld [smem:[#allocation6 + $0x3]]
    %v1994 = vstv %s1993
    %v1995 = vmul.f32 %v1994, %v1909
    %v1996 = vmul.f32 %v1994, %v1910
    %v1997 = vmul.f32 %v1994, %v1911
    %v1998 = vmul.f32 %v1994, %v1912
    %v1999 = vmul.f32 %v1994, %v1913
    %v2000 = vmul.f32 %v1994, %v1914
    %v2001 = vmul.f32 %v1994, %v1915
    %v2002 = vmul.f32 %v1994, %v1916
    %v2003 = vmul.f32 %v1994, %v1917
    %v2004 = vmul.f32 %v1994, %v1918
    %v2005 = vmul.f32 %v1994, %v1919
    %v2006 = vmul.f32 %v1994, %v1920
    %v2007 = vmul.f32 %v1994, %v1921
    %s2008 = sld [smem:[#allocation6 + $0x4]]
    %v2009 = vstv %s2008
    %v2010 = vmul.f32 %v2009, %v1922
    %v2011 = vmul.f32 %v2009, %v1923
    %v2012 = vmul.f32 %v2009, %v1924
    %v2013 = vmul.f32 %v2009, %v1925
    %v2014 = vmul.f32 %v2009, %v1926
    %v2015 = vmul.f32 %v2009, %v1927
    %v2016 = vmul.f32 %v2009, %v1928
    %v2017 = vmul.f32 %v2009, %v1929
    %v2018 = vmul.f32 %v2009, %v1930
    %v2019 = vmul.f32 %v2009, %v1931
    %v2020 = vmul.f32 %v2009, %v1932
    %v2021 = vmul.f32 %v2009, %v1933
    %v2022 = vmul.f32 %v2009, %v1934
    %v2023 = vadd.f32 %v1995, %v2010
    %v2024 = vadd.f32 %v1996, %v2011
    %v2025 = vadd.f32 %v1997, %v2012
    %v2026 = vadd.f32 %v1998, %v2013
    %v2027 = vadd.f32 %v1999, %v2014
    %v2028 = vadd.f32 %v2000, %v2015
    %v2029 = vadd.f32 %v2001, %v2016
    %v2030 = vadd.f32 %v2002, %v2017
    %v2031 = vadd.f32 %v2003, %v2018
    %v2032 = vadd.f32 %v2004, %v2019
    %v2033 = vadd.f32 %v2005, %v2020
    %v2034 = vadd.f32 %v2006, %v2021
    %v2035 = vadd.f32 %v2007, %v2022
    %s2036 = sld [smem:[#allocation6 + $0x5]]
    %v2037 = vstv %s2036
    %v2038 = vadd.f32 %v2023, %v2037
    %v2039 = vadd.f32 %v2024, %v2037
    %v2040 = vadd.f32 %v2025, %v2037
    %v2041 = vadd.f32 %v2026, %v2037
    %v2042 = vadd.f32 %v2027, %v2037
    %v2043 = vadd.f32 %v2028, %v2037
    %v2044 = vadd.f32 %v2029, %v2037
    %v2045 = vadd.f32 %v2030, %v2037
    %v2046 = vadd.f32 %v2031, %v2037
    %v2047 = vadd.f32 %v2032, %v2037
    %v2048 = vadd.f32 %v2033, %v2037
    %v2049 = vadd.f32 %v2034, %v2037
    %v2050 = vadd.f32 %v2035, %v2037
    %v2051 = vmul.f32 %v816, %v1006
    %v2052 = vmul.f32 %v817, %v1007
    %v2053 = vmul.f32 %v818, %v1008
    %v2054 = vmul.f32 %v819, %v1009
    %v2055 = vmul.f32 %v820, %v1010
    %v2056 = vmul.f32 %v821, %v1011
    %v2057 = vmul.f32 %v822, %v1012
    %v2058 = vmul.f32 %v823, %v1013
    %v2059 = vmul.f32 %v824, %v1014
    %v2060 = vmul.f32 %v825, %v1015
    %v2061 = vmul.f32 %v826, %v1016
    %v2062 = vmul.f32 %v827, %v1017
    %v2063 = vmul.f32 %v828, %v1018
    %v2064 = vmul.f32 %v1053, %v769
    %v2065 = vmul.f32 %v1054, %v770
    %v2066 = vmul.f32 %v1055, %v771
    %v2067 = vmul.f32 %v1056, %v772
    %v2068 = vmul.f32 %v1057, %v773
    %v2069 = vmul.f32 %v1058, %v774
    %v2070 = vmul.f32 %v1059, %v775
    %v2071 = vmul.f32 %v1060, %v776
    %v2072 = vmul.f32 %v1061, %v777
    %v2073 = vmul.f32 %v1062, %v778
    %v2074 = vmul.f32 %v1063, %v779
    %v2075 = vmul.f32 %v1064, %v780
    %v2076 = vmul.f32 %v1065, %v781
    %v2077 = vsub.f32 %v2051, %v2064
    %v2078 = vsub.f32 %v2052, %v2065
    %v2079 = vsub.f32 %v2053, %v2066
    %v2080 = vsub.f32 %v2054, %v2067
    %v2081 = vsub.f32 %v2055, %v2068
    %v2082 = vsub.f32 %v2056, %v2069
    %v2083 = vsub.f32 %v2057, %v2070
    %v2084 = vsub.f32 %v2058, %v2071
    %v2085 = vsub.f32 %v2059, %v2072
    %v2086 = vsub.f32 %v2060, %v2073
    %v2087 = vsub.f32 %v2061, %v2074
    %v2088 = vsub.f32 %v2062, %v2075
    %v2089 = vsub.f32 %v2063, %v2076
    %v2090 = vmul.f32 %v1053, %v532
    %v2091 = vmul.f32 %v1054, %v533
    %v2092 = vmul.f32 %v1055, %v534
    %v2093 = vmul.f32 %v1056, %v535
    %v2094 = vmul.f32 %v1057, %v536
    %v2095 = vmul.f32 %v1058, %v537
    %v2096 = vmul.f32 %v1059, %v538
    %v2097 = vmul.f32 %v1060, %v539
    %v2098 = vmul.f32 %v1061, %v540
    %v2099 = vmul.f32 %v1062, %v541
    %v2100 = vmul.f32 %v1063, %v542
    %v2101 = vmul.f32 %v1064, %v543
    %v2102 = vmul.f32 %v1065, %v544
    %v2103 = vmul.f32 %v579, %v1006
    %v2104 = vmul.f32 %v580, %v1007
    %v2105 = vmul.f32 %v581, %v1008
    %v2106 = vmul.f32 %v582, %v1009
    %v2107 = vmul.f32 %v583, %v1010
    %v2108 = vmul.f32 %v584, %v1011
    %v2109 = vmul.f32 %v585, %v1012
    %v2110 = vmul.f32 %v586, %v1013
    %v2111 = vmul.f32 %v587, %v1014
    %v2112 = vmul.f32 %v588, %v1015
    %v2113 = vmul.f32 %v589, %v1016
    %v2114 = vmul.f32 %v590, %v1017
    %v2115 = vmul.f32 %v591, %v1018
    %v2116 = vsub.f32 %v2090, %v2103
    %v2117 = vsub.f32 %v2091, %v2104
    %v2118 = vsub.f32 %v2092, %v2105
    %v2119 = vsub.f32 %v2093, %v2106
    %v2120 = vsub.f32 %v2094, %v2107
    %v2121 = vsub.f32 %v2095, %v2108
    %v2122 = vsub.f32 %v2096, %v2109
    %v2123 = vsub.f32 %v2097, %v2110
    %v2124 = vsub.f32 %v2098, %v2111
    %v2125 = vsub.f32 %v2099, %v2112
    %v2126 = vsub.f32 %v2100, %v2113
    %v2127 = vsub.f32 %v2101, %v2114
    %v2128 = vsub.f32 %v2102, %v2115
    %v2129 = vmul.f32 %v579, %v769
    %v2130 = vmul.f32 %v580, %v770
    %v2131 = vmul.f32 %v581, %v771
    %v2132 = vmul.f32 %v582, %v772
    %v2133 = vmul.f32 %v583, %v773
    %v2134 = vmul.f32 %v584, %v774
    %v2135 = vmul.f32 %v585, %v775
    %v2136 = vmul.f32 %v586, %v776
    %v2137 = vmul.f32 %v587, %v777
    %v2138 = vmul.f32 %v588, %v778
    %v2139 = vmul.f32 %v589, %v779
    %v2140 = vmul.f32 %v590, %v780
    %v2141 = vmul.f32 %v591, %v781
    %v2142 = vmul.f32 %v816, %v532
    %v2143 = vmul.f32 %v817, %v533
    %v2144 = vmul.f32 %v818, %v534
    %v2145 = vmul.f32 %v819, %v535
    %v2146 = vmul.f32 %v820, %v536
    %v2147 = vmul.f32 %v821, %v537
    %v2148 = vmul.f32 %v822, %v538
    %v2149 = vmul.f32 %v823, %v539
    %v2150 = vmul.f32 %v824, %v540
    %v2151 = vmul.f32 %v825, %v541
    %v2152 = vmul.f32 %v826, %v542
    %v2153 = vmul.f32 %v827, %v543
    %v2154 = vmul.f32 %v828, %v544
    %v2155 = vsub.f32 %v2129, %v2142
    %v2156 = vsub.f32 %v2130, %v2143
    %v2157 = vsub.f32 %v2131, %v2144
    %v2158 = vsub.f32 %v2132, %v2145
    %v2159 = vsub.f32 %v2133, %v2146
    %v2160 = vsub.f32 %v2134, %v2147
    %v2161 = vsub.f32 %v2135, %v2148
    %v2162 = vsub.f32 %v2136, %v2149
    %v2163 = vsub.f32 %v2137, %v2150
    %v2164 = vsub.f32 %v2138, %v2151
    %v2165 = vsub.f32 %v2139, %v2152
    %v2166 = vsub.f32 %v2140, %v2153
    %v2167 = vsub.f32 %v2141, %v2154
    %v2168 = vmul.f32 %v769, %v2155
    %v2169 = vmul.f32 %v770, %v2156
    %v2170 = vmul.f32 %v771, %v2157
    %v2171 = vmul.f32 %v772, %v2158
    %v2172 = vmul.f32 %v773, %v2159
    %v2173 = vmul.f32 %v774, %v2160
    %v2174 = vmul.f32 %v775, %v2161
    %v2175 = vmul.f32 %v776, %v2162
    %v2176 = vmul.f32 %v777, %v2163
    %v2177 = vmul.f32 %v778, %v2164
    %v2178 = vmul.f32 %v779, %v2165
    %v2179 = vmul.f32 %v780, %v2166
    %v2180 = vmul.f32 %v781, %v2167
    %v2181 = vmul.f32 %v1006, %v2116
    %v2182 = vmul.f32 %v1007, %v2117
    %v2183 = vmul.f32 %v1008, %v2118
    %v2184 = vmul.f32 %v1009, %v2119
    %v2185 = vmul.f32 %v1010, %v2120
    %v2186 = vmul.f32 %v1011, %v2121
    %v2187 = vmul.f32 %v1012, %v2122
    %v2188 = vmul.f32 %v1013, %v2123
    %v2189 = vmul.f32 %v1014, %v2124
    %v2190 = vmul.f32 %v1015, %v2125
    %v2191 = vmul.f32 %v1016, %v2126
    %v2192 = vmul.f32 %v1017, %v2127
    %v2193 = vmul.f32 %v1018, %v2128
    %v2194 = vsub.f32 %v2168, %v2181
    %v2195 = vsub.f32 %v2169, %v2182
    %v2196 = vsub.f32 %v2170, %v2183
    %v2197 = vsub.f32 %v2171, %v2184
    %v2198 = vsub.f32 %v2172, %v2185
    %v2199 = vsub.f32 %v2173, %v2186
    %v2200 = vsub.f32 %v2174, %v2187
    %v2201 = vsub.f32 %v2175, %v2188
    %v2202 = vsub.f32 %v2176, %v2189
    %v2203 = vsub.f32 %v2177, %v2190
    %v2204 = vsub.f32 %v2178, %v2191
    %v2205 = vsub.f32 %v2179, %v2192
    %v2206 = vsub.f32 %v2180, %v2193
    %v2207 = vmul.f32 %v1006, %v2077
    %v2208 = vmul.f32 %v1007, %v2078
    %v2209 = vmul.f32 %v1008, %v2079
    %v2210 = vmul.f32 %v1009, %v2080
    %v2211 = vmul.f32 %v1010, %v2081
    %v2212 = vmul.f32 %v1011, %v2082
    %v2213 = vmul.f32 %v1012, %v2083
    %v2214 = vmul.f32 %v1013, %v2084
    %v2215 = vmul.f32 %v1014, %v2085
    %v2216 = vmul.f32 %v1015, %v2086
    %v2217 = vmul.f32 %v1016, %v2087
    %v2218 = vmul.f32 %v1017, %v2088
    %v2219 = vmul.f32 %v1018, %v2089
    %v2220 = vmul.f32 %v532, %v2155
    %v2221 = vmul.f32 %v533, %v2156
    %v2222 = vmul.f32 %v534, %v2157
    %v2223 = vmul.f32 %v535, %v2158
    %v2224 = vmul.f32 %v536, %v2159
    %v2225 = vmul.f32 %v537, %v2160
    %v2226 = vmul.f32 %v538, %v2161
    %v2227 = vmul.f32 %v539, %v2162
    %v2228 = vmul.f32 %v540, %v2163
    %v2229 = vmul.f32 %v541, %v2164
    %v2230 = vmul.f32 %v542, %v2165
    %v2231 = vmul.f32 %v543, %v2166
    %v2232 = vmul.f32 %v544, %v2167
    %v2233 = vsub.f32 %v2207, %v2220
    %v2234 = vsub.f32 %v2208, %v2221
    %v2235 = vsub.f32 %v2209, %v2222
    %v2236 = vsub.f32 %v2210, %v2223
    %v2237 = vsub.f32 %v2211, %v2224
    %v2238 = vsub.f32 %v2212, %v2225
    %v2239 = vsub.f32 %v2213, %v2226
    %v2240 = vsub.f32 %v2214, %v2227
    %v2241 = vsub.f32 %v2215, %v2228
    %v2242 = vsub.f32 %v2216, %v2229
    %v2243 = vsub.f32 %v2217, %v2230
    %v2244 = vsub.f32 %v2218, %v2231
    %v2245 = vsub.f32 %v2219, %v2232
    %v2246 = vmul.f32 %v532, %v2116
    %v2247 = vmul.f32 %v533, %v2117
    %v2248 = vmul.f32 %v534, %v2118
    %v2249 = vmul.f32 %v535, %v2119
    %v2250 = vmul.f32 %v536, %v2120
    %v2251 = vmul.f32 %v537, %v2121
    %v2252 = vmul.f32 %v538, %v2122
    %v2253 = vmul.f32 %v539, %v2123
    %v2254 = vmul.f32 %v540, %v2124
    %v2255 = vmul.f32 %v541, %v2125
    %v2256 = vmul.f32 %v542, %v2126
    %v2257 = vmul.f32 %v543, %v2127
    %v2258 = vmul.f32 %v544, %v2128
    %v2259 = vmul.f32 %v769, %v2077
    %v2260 = vmul.f32 %v770, %v2078
    %v2261 = vmul.f32 %v771, %v2079
    %v2262 = vmul.f32 %v772, %v2080
    %v2263 = vmul.f32 %v773, %v2081
    %v2264 = vmul.f32 %v774, %v2082
    %v2265 = vmul.f32 %v775, %v2083
    %v2266 = vmul.f32 %v776, %v2084
    %v2267 = vmul.f32 %v777, %v2085
    %v2268 = vmul.f32 %v778, %v2086
    %v2269 = vmul.f32 %v779, %v2087
    %v2270 = vmul.f32 %v780, %v2088
    %v2271 = vmul.f32 %v781, %v2089
    %v2272 = vsub.f32 %v2246, %v2259
    %v2273 = vsub.f32 %v2247, %v2260
    %v2274 = vsub.f32 %v2248, %v2261
    %v2275 = vsub.f32 %v2249, %v2262
    %v2276 = vsub.f32 %v2250, %v2263
    %v2277 = vsub.f32 %v2251, %v2264
    %v2278 = vsub.f32 %v2252, %v2265
    %v2279 = vsub.f32 %v2253, %v2266
    %v2280 = vsub.f32 %v2254, %v2267
    %v2281 = vsub.f32 %v2255, %v2268
    %v2282 = vsub.f32 %v2256, %v2269
    %v2283 = vsub.f32 %v2257, %v2270
    %v2284 = vsub.f32 %v2258, %v2271
    %v2285 = vmul.f32 %v532, %v532
    %v2286 = vmul.f32 %v533, %v533
    %v2287 = vmul.f32 %v534, %v534
    %v2288 = vmul.f32 %v535, %v535
    %v2289 = vmul.f32 %v536, %v536
    %v2290 = vmul.f32 %v537, %v537
    %v2291 = vmul.f32 %v538, %v538
    %v2292 = vmul.f32 %v539, %v539
    %v2293 = vmul.f32 %v540, %v540
    %v2294 = vmul.f32 %v541, %v541
    %v2295 = vmul.f32 %v542, %v542
    %v2296 = vmul.f32 %v543, %v543
    %v2297 = vmul.f32 %v544, %v544
    %v2298 = vmul.f32 %v769, %v769
    %v2299 = vmul.f32 %v770, %v770
    %v2300 = vmul.f32 %v771, %v771
    %v2301 = vmul.f32 %v772, %v772
    %v2302 = vmul.f32 %v773, %v773
    %v2303 = vmul.f32 %v774, %v774
    %v2304 = vmul.f32 %v775, %v775
    %v2305 = vmul.f32 %v776, %v776
    %v2306 = vmul.f32 %v777, %v777
    %v2307 = vmul.f32 %v778, %v778
    %v2308 = vmul.f32 %v779, %v779
    %v2309 = vmul.f32 %v780, %v780
    %v2310 = vmul.f32 %v781, %v781
    %v2311 = vadd.f32 %v2285, %v2298
    %v2312 = vadd.f32 %v2286, %v2299
    %v2313 = vadd.f32 %v2287, %v2300
    %v2314 = vadd.f32 %v2288, %v2301
    %v2315 = vadd.f32 %v2289, %v2302
    %v2316 = vadd.f32 %v2290, %v2303
    %v2317 = vadd.f32 %v2291, %v2304
    %v2318 = vadd.f32 %v2292, %v2305
    %v2319 = vadd.f32 %v2293, %v2306
    %v2320 = vadd.f32 %v2294, %v2307
    %v2321 = vadd.f32 %v2295, %v2308
    %v2322 = vadd.f32 %v2296, %v2309
    %v2323 = vadd.f32 %v2297, %v2310
    %v2324 = vmul.f32 %v1006, %v1006
    %v2325 = vmul.f32 %v1007, %v1007
    %v2326 = vmul.f32 %v1008, %v1008
    %v2327 = vmul.f32 %v1009, %v1009
    %v2328 = vmul.f32 %v1010, %v1010
    %v2329 = vmul.f32 %v1011, %v1011
    %v2330 = vmul.f32 %v1012, %v1012
    %v2331 = vmul.f32 %v1013, %v1013
    %v2332 = vmul.f32 %v1014, %v1014
    %v2333 = vmul.f32 %v1015, %v1015
    %v2334 = vmul.f32 %v1016, %v1016
    %v2335 = vmul.f32 %v1017, %v1017
    %v2336 = vmul.f32 %v1018, %v1018
    %v2337 = vadd.f32 %v2311, %v2324
    %v2338 = vadd.f32 %v2312, %v2325
    %v2339 = vadd.f32 %v2313, %v2326
    %v2340 = vadd.f32 %v2314, %v2327
    %v2341 = vadd.f32 %v2315, %v2328
    %v2342 = vadd.f32 %v2316, %v2329
    %v2343 = vadd.f32 %v2317, %v2330
    %v2344 = vadd.f32 %v2318, %v2331
    %v2345 = vadd.f32 %v2319, %v2332
    %v2346 = vadd.f32 %v2320, %v2333
    %v2347 = vadd.f32 %v2321, %v2334
    %v2348 = vadd.f32 %v2322, %v2335
    %v2349 = vadd.f32 %v2323, %v2336
    %v2350 = vrsqrt.pop %v2337
    %v2351 = vmul.f32 %v2350, %v2337
    %v2352 = vmul.f32 %v2351, %v2350
    %v2353 = vmul.f32 0.5, %v2352
    %v2354 = vsub.f32 1.5, %v2353
    %v2355 = vmul.f32 %v2350, %v2354
    %v2356 = vmul.f32 %v2337, %v2355
    %vm2357 = vcmp.eq.f32.partialorder %v2337, inf
    %v2358 = vsel %vm2357, %v2337, %v2356
    %vm2359 = vcmp.eq.f32.partialorder %v2337, 0.0
    %v2360 = vand.u32 %v2337, 2147483648
    %v2361 = vsel %vm2359, %v2360, %v2358
    %v2362 = vrsqrt.pop %v2338
    %v2363 = vmul.f32 %v2362, %v2338
    %v2364 = vmul.f32 %v2363, %v2362
    %v2365 = vmul.f32 0.5, %v2364
    %v2366 = vsub.f32 1.5, %v2365
    %v2367 = vmul.f32 %v2362, %v2366
    %v2368 = vmul.f32 %v2338, %v2367
    %vm2369 = vcmp.eq.f32.partialorder %v2338, inf
    %v2370 = vsel %vm2369, %v2338, %v2368
    %vm2371 = vcmp.eq.f32.partialorder %v2338, 0.0
    %v2372 = vand.u32 %v2338, 2147483648
    %v2373 = vsel %vm2371, %v2372, %v2370
    %v2374 = vrsqrt.pop %v2339
    %v2375 = vmul.f32 %v2374, %v2339
    %v2376 = vmul.f32 %v2375, %v2374
    %v2377 = vmul.f32 0.5, %v2376
    %v2378 = vsub.f32 1.5, %v2377
    %v2379 = vmul.f32 %v2374, %v2378
    %v2380 = vmul.f32 %v2339, %v2379
    %vm2381 = vcmp.eq.f32.partialorder %v2339, inf
    %v2382 = vsel %vm2381, %v2339, %v2380
    %vm2383 = vcmp.eq.f32.partialorder %v2339, 0.0
    %v2384 = vand.u32 %v2339, 2147483648
    %v2385 = vsel %vm2383, %v2384, %v2382
    %v2386 = vrsqrt.pop %v2340
    %v2387 = vmul.f32 %v2386, %v2340
    %v2388 = vmul.f32 %v2387, %v2386
    %v2389 = vmul.f32 0.5, %v2388
    %v2390 = vsub.f32 1.5, %v2389
    %v2391 = vmul.f32 %v2386, %v2390
    %v2392 = vmul.f32 %v2340, %v2391
    %vm2393 = vcmp.eq.f32.partialorder %v2340, inf
    %v2394 = vsel %vm2393, %v2340, %v2392
    %vm2395 = vcmp.eq.f32.partialorder %v2340, 0.0
    %v2396 = vand.u32 %v2340, 2147483648
    %v2397 = vsel %vm2395, %v2396, %v2394
    %v2398 = vrsqrt.pop %v2341
    %v2399 = vmul.f32 %v2398, %v2341
    %v2400 = vmul.f32 %v2399, %v2398
    %v2401 = vmul.f32 0.5, %v2400
    %v2402 = vsub.f32 1.5, %v2401
    %v2403 = vmul.f32 %v2398, %v2402
    %v2404 = vmul.f32 %v2341, %v2403
    %vm2405 = vcmp.eq.f32.partialorder %v2341, inf
    %v2406 = vsel %vm2405, %v2341, %v2404
    %vm2407 = vcmp.eq.f32.partialorder %v2341, 0.0
    %v2408 = vand.u32 %v2341, 2147483648
    %v2409 = vsel %vm2407, %v2408, %v2406
    %v2410 = vrsqrt.pop %v2342
    %v2411 = vmul.f32 %v2410, %v2342
    %v2412 = vmul.f32 %v2411, %v2410
    %v2413 = vmul.f32 0.5, %v2412
    %v2414 = vsub.f32 1.5, %v2413
    %v2415 = vmul.f32 %v2410, %v2414
    %v2416 = vmul.f32 %v2342, %v2415
    %vm2417 = vcmp.eq.f32.partialorder %v2342, inf
    %v2418 = vsel %vm2417, %v2342, %v2416
    %vm2419 = vcmp.eq.f32.partialorder %v2342, 0.0
    %v2420 = vand.u32 %v2342, 2147483648
    %v2421 = vsel %vm2419, %v2420, %v2418
    %v2422 = vrsqrt.pop %v2343
    %v2423 = vmul.f32 %v2422, %v2343
    %v2424 = vmul.f32 %v2423, %v2422
    %v2425 = vmul.f32 0.5, %v2424
    %v2426 = vsub.f32 1.5, %v2425
    %v2427 = vmul.f32 %v2422, %v2426
    %v2428 = vmul.f32 %v2343, %v2427
    %vm2429 = vcmp.eq.f32.partialorder %v2343, inf
    %v2430 = vsel %vm2429, %v2343, %v2428
    %vm2431 = vcmp.eq.f32.partialorder %v2343, 0.0
    %v2432 = vand.u32 %v2343, 2147483648
    %v2433 = vsel %vm2431, %v2432, %v2430
    %v2434 = vrsqrt.pop %v2344
    %v2435 = vmul.f32 %v2434, %v2344
    %v2436 = vmul.f32 %v2435, %v2434
    %v2437 = vmul.f32 0.5, %v2436
    %v2438 = vsub.f32 1.5, %v2437
    %v2439 = vmul.f32 %v2434, %v2438
    %v2440 = vmul.f32 %v2344, %v2439
    %vm2441 = vcmp.eq.f32.partialorder %v2344, inf
    %v2442 = vsel %vm2441, %v2344, %v2440
    %vm2443 = vcmp.eq.f32.partialorder %v2344, 0.0
    %v2444 = vand.u32 %v2344, 2147483648
    %v2445 = vsel %vm2443, %v2444, %v2442
    %v2446 = vrsqrt.pop %v2345
    %v2447 = vmul.f32 %v2446, %v2345
    %v2448 = vmul.f32 %v2447, %v2446
    %v2449 = vmul.f32 0.5, %v2448
    %v2450 = vsub.f32 1.5, %v2449
    %v2451 = vmul.f32 %v2446, %v2450
    %v2452 = vmul.f32 %v2345, %v2451
    %vm2453 = vcmp.eq.f32.partialorder %v2345, inf
    %v2454 = vsel %vm2453, %v2345, %v2452
    %vm2455 = vcmp.eq.f32.partialorder %v2345, 0.0
    %v2456 = vand.u32 %v2345, 2147483648
    %v2457 = vsel %vm2455, %v2456, %v2454
    %v2458 = vrsqrt.pop %v2346
    %v2459 = vmul.f32 %v2458, %v2346
    %v2460 = vmul.f32 %v2459, %v2458
    %v2461 = vmul.f32 0.5, %v2460
    %v2462 = vsub.f32 1.5, %v2461
    %v2463 = vmul.f32 %v2458, %v2462
    %v2464 = vmul.f32 %v2346, %v2463
    %vm2465 = vcmp.eq.f32.partialorder %v2346, inf
    %v2466 = vsel %vm2465, %v2346, %v2464
    %vm2467 = vcmp.eq.f32.partialorder %v2346, 0.0
    %v2468 = vand.u32 %v2346, 2147483648
    %v2469 = vsel %vm2467, %v2468, %v2466
    %v2470 = vrsqrt.pop %v2347
    %v2471 = vmul.f32 %v2470, %v2347
    %v2472 = vmul.f32 %v2471, %v2470
    %v2473 = vmul.f32 0.5, %v2472
    %v2474 = vsub.f32 1.5, %v2473
    %v2475 = vmul.f32 %v2470, %v2474
    %v2476 = vmul.f32 %v2347, %v2475
    %vm2477 = vcmp.eq.f32.partialorder %v2347, inf
    %v2478 = vsel %vm2477, %v2347, %v2476
    %vm2479 = vcmp.eq.f32.partialorder %v2347, 0.0
    %v2480 = vand.u32 %v2347, 2147483648
    %v2481 = vsel %vm2479, %v2480, %v2478
    %v2482 = vrsqrt.pop %v2348
    %v2483 = vmul.f32 %v2482, %v2348
    %v2484 = vmul.f32 %v2483, %v2482
    %v2485 = vmul.f32 0.5, %v2484
    %v2486 = vsub.f32 1.5, %v2485
    %v2487 = vmul.f32 %v2482, %v2486
    %v2488 = vmul.f32 %v2348, %v2487
    %vm2489 = vcmp.eq.f32.partialorder %v2348, inf
    %v2490 = vsel %vm2489, %v2348, %v2488
    %vm2491 = vcmp.eq.f32.partialorder %v2348, 0.0
    %v2492 = vand.u32 %v2348, 2147483648
    %v2493 = vsel %vm2491, %v2492, %v2490
    %v2494 = vrsqrt.pop %v2349
    %v2495 = vmul.f32 %v2494, %v2349
    %v2496 = vmul.f32 %v2495, %v2494
    %v2497 = vmul.f32 0.5, %v2496
    %v2498 = vsub.f32 1.5, %v2497
    %v2499 = vmul.f32 %v2494, %v2498
    %v2500 = vmul.f32 %v2349, %v2499
    %vm2501 = vcmp.eq.f32.partialorder %v2349, inf
    %v2502 = vsel %vm2501, %v2349, %v2500
    %vm2503 = vcmp.eq.f32.partialorder %v2349, 0.0
    %v2504 = vand.u32 %v2349, 2147483648
    %v2505 = vsel %vm2503, %v2504, %v2502
    %v2506 = vmul.f32 %v2077, %v2077
    %v2507 = vmul.f32 %v2078, %v2078
    %v2508 = vmul.f32 %v2079, %v2079
    %v2509 = vmul.f32 %v2080, %v2080
    %v2510 = vmul.f32 %v2081, %v2081
    %v2511 = vmul.f32 %v2082, %v2082
    %v2512 = vmul.f32 %v2083, %v2083
    %v2513 = vmul.f32 %v2084, %v2084
    %v2514 = vmul.f32 %v2085, %v2085
    %v2515 = vmul.f32 %v2086, %v2086
    %v2516 = vmul.f32 %v2087, %v2087
    %v2517 = vmul.f32 %v2088, %v2088
    %v2518 = vmul.f32 %v2089, %v2089
    %v2519 = vmul.f32 %v2116, %v2116
    %v2520 = vmul.f32 %v2117, %v2117
    %v2521 = vmul.f32 %v2118, %v2118
    %v2522 = vmul.f32 %v2119, %v2119
    %v2523 = vmul.f32 %v2120, %v2120
    %v2524 = vmul.f32 %v2121, %v2121
    %v2525 = vmul.f32 %v2122, %v2122
    %v2526 = vmul.f32 %v2123, %v2123
    %v2527 = vmul.f32 %v2124, %v2124
    %v2528 = vmul.f32 %v2125, %v2125
    %v2529 = vmul.f32 %v2126, %v2126
    %v2530 = vmul.f32 %v2127, %v2127
    %v2531 = vmul.f32 %v2128, %v2128
    %v2532 = vadd.f32 %v2506, %v2519
    %v2533 = vadd.f32 %v2507, %v2520
    %v2534 = vadd.f32 %v2508, %v2521
    %v2535 = vadd.f32 %v2509, %v2522
    %v2536 = vadd.f32 %v2510, %v2523
    %v2537 = vadd.f32 %v2511, %v2524
    %v2538 = vadd.f32 %v2512, %v2525
    %v2539 = vadd.f32 %v2513, %v2526
    %v2540 = vadd.f32 %v2514, %v2527
    %v2541 = vadd.f32 %v2515, %v2528
    %v2542 = vadd.f32 %v2516, %v2529
    %v2543 = vadd.f32 %v2517, %v2530
    %v2544 = vadd.f32 %v2518, %v2531
    %v2545 = vmul.f32 %v2155, %v2155
    %v2546 = vmul.f32 %v2156, %v2156
    %v2547 = vmul.f32 %v2157, %v2157
    %v2548 = vmul.f32 %v2158, %v2158
    %v2549 = vmul.f32 %v2159, %v2159
    %v2550 = vmul.f32 %v2160, %v2160
    %v2551 = vmul.f32 %v2161, %v2161
    %v2552 = vmul.f32 %v2162, %v2162
    %v2553 = vmul.f32 %v2163, %v2163
    %v2554 = vmul.f32 %v2164, %v2164
    %v2555 = vmul.f32 %v2165, %v2165
    %v2556 = vmul.f32 %v2166, %v2166
    %v2557 = vmul.f32 %v2167, %v2167
    %v2558 = vadd.f32 %v2532, %v2545
    %v2559 = vadd.f32 %v2533, %v2546
    %v2560 = vadd.f32 %v2534, %v2547
    %v2561 = vadd.f32 %v2535, %v2548
    %v2562 = vadd.f32 %v2536, %v2549
    %v2563 = vadd.f32 %v2537, %v2550
    %v2564 = vadd.f32 %v2538, %v2551
    %v2565 = vadd.f32 %v2539, %v2552
    %v2566 = vadd.f32 %v2540, %v2553
    %v2567 = vadd.f32 %v2541, %v2554
    %v2568 = vadd.f32 %v2542, %v2555
    %v2569 = vadd.f32 %v2543, %v2556
    %v2570 = vadd.f32 %v2544, %v2557
    %v2571 = vrsqrt.pop %v2558
    %v2572 = vmul.f32 %v2571, %v2558
    %v2573 = vmul.f32 %v2572, %v2571
    %v2574 = vmul.f32 0.5, %v2573
    %v2575 = vsub.f32 1.5, %v2574
    %v2576 = vmul.f32 %v2571, %v2575
    %v2577 = vmul.f32 %v2558, %v2576
    %vm2578 = vcmp.eq.f32.partialorder %v2558, inf
    %v2579 = vsel %vm2578, %v2558, %v2577
    %vm2580 = vcmp.eq.f32.partialorder %v2558, 0.0
    %v2581 = vand.u32 %v2558, 2147483648
    %v2582 = vsel %vm2580, %v2581, %v2579
    %v2583 = vrsqrt.pop %v2559
    %v2584 = vmul.f32 %v2583, %v2559
    %v2585 = vmul.f32 %v2584, %v2583
    %v2586 = vmul.f32 0.5, %v2585
    %v2587 = vsub.f32 1.5, %v2586
    %v2588 = vmul.f32 %v2583, %v2587
    %v2589 = vmul.f32 %v2559, %v2588
    %vm2590 = vcmp.eq.f32.partialorder %v2559, inf
    %v2591 = vsel %vm2590, %v2559, %v2589
    %vm2592 = vcmp.eq.f32.partialorder %v2559, 0.0
    %v2593 = vand.u32 %v2559, 2147483648
    %v2594 = vsel %vm2592, %v2593, %v2591
    %v2595 = vrsqrt.pop %v2560
    %v2596 = vmul.f32 %v2595, %v2560
    %v2597 = vmul.f32 %v2596, %v2595
    %v2598 = vmul.f32 0.5, %v2597
    %v2599 = vsub.f32 1.5, %v2598
    %v2600 = vmul.f32 %v2595, %v2599
    %v2601 = vmul.f32 %v2560, %v2600
    %vm2602 = vcmp.eq.f32.partialorder %v2560, inf
    %v2603 = vsel %vm2602, %v2560, %v2601
    %vm2604 = vcmp.eq.f32.partialorder %v2560, 0.0
    %v2605 = vand.u32 %v2560, 2147483648
    %v2606 = vsel %vm2604, %v2605, %v2603
    %v2607 = vrsqrt.pop %v2561
    %v2608 = vmul.f32 %v2607, %v2561
    %v2609 = vmul.f32 %v2608, %v2607
    %v2610 = vmul.f32 0.5, %v2609
    %v2611 = vsub.f32 1.5, %v2610
    %v2612 = vmul.f32 %v2607, %v2611
    %v2613 = vmul.f32 %v2561, %v2612
    %vm2614 = vcmp.eq.f32.partialorder %v2561, inf
    %v2615 = vsel %vm2614, %v2561, %v2613
    %vm2616 = vcmp.eq.f32.partialorder %v2561, 0.0
    %v2617 = vand.u32 %v2561, 2147483648
    %v2618 = vsel %vm2616, %v2617, %v2615
    %v2619 = vrsqrt.pop %v2562
    %v2620 = vmul.f32 %v2619, %v2562
    %v2621 = vmul.f32 %v2620, %v2619
    %v2622 = vmul.f32 0.5, %v2621
    %v2623 = vsub.f32 1.5, %v2622
    %v2624 = vmul.f32 %v2619, %v2623
    %v2625 = vmul.f32 %v2562, %v2624
    %vm2626 = vcmp.eq.f32.partialorder %v2562, inf
    %v2627 = vsel %vm2626, %v2562, %v2625
    %vm2628 = vcmp.eq.f32.partialorder %v2562, 0.0
    %v2629 = vand.u32 %v2562, 2147483648
    %v2630 = vsel %vm2628, %v2629, %v2627
    %v2631 = vrsqrt.pop %v2563
    %v2632 = vmul.f32 %v2631, %v2563
    %v2633 = vmul.f32 %v2632, %v2631
    %v2634 = vmul.f32 0.5, %v2633
    %v2635 = vsub.f32 1.5, %v2634
    %v2636 = vmul.f32 %v2631, %v2635
    %v2637 = vmul.f32 %v2563, %v2636
    %vm2638 = vcmp.eq.f32.partialorder %v2563, inf
    %v2639 = vsel %vm2638, %v2563, %v2637
    %vm2640 = vcmp.eq.f32.partialorder %v2563, 0.0
    %v2641 = vand.u32 %v2563, 2147483648
    %v2642 = vsel %vm2640, %v2641, %v2639
    %v2643 = vrsqrt.pop %v2564
    %v2644 = vmul.f32 %v2643, %v2564
    %v2645 = vmul.f32 %v2644, %v2643
    %v2646 = vmul.f32 0.5, %v2645
    %v2647 = vsub.f32 1.5, %v2646
    %v2648 = vmul.f32 %v2643, %v2647
    %v2649 = vmul.f32 %v2564, %v2648
    %vm2650 = vcmp.eq.f32.partialorder %v2564, inf
    %v2651 = vsel %vm2650, %v2564, %v2649
    %vm2652 = vcmp.eq.f32.partialorder %v2564, 0.0
    %v2653 = vand.u32 %v2564, 2147483648
    %v2654 = vsel %vm2652, %v2653, %v2651
    %v2655 = vrsqrt.pop %v2565
    %v2656 = vmul.f32 %v2655, %v2565
    %v2657 = vmul.f32 %v2656, %v2655
    %v2658 = vmul.f32 0.5, %v2657
    %v2659 = vsub.f32 1.5, %v2658
    %v2660 = vmul.f32 %v2655, %v2659
    %v2661 = vmul.f32 %v2565, %v2660
    %vm2662 = vcmp.eq.f32.partialorder %v2565, inf
    %v2663 = vsel %vm2662, %v2565, %v2661
    %vm2664 = vcmp.eq.f32.partialorder %v2565, 0.0
    %v2665 = vand.u32 %v2565, 2147483648
    %v2666 = vsel %vm2664, %v2665, %v2663
    %v2667 = vrsqrt.pop %v2566
    %v2668 = vmul.f32 %v2667, %v2566
    %v2669 = vmul.f32 %v2668, %v2667
    %v2670 = vmul.f32 0.5, %v2669
    %v2671 = vsub.f32 1.5, %v2670
    %v2672 = vmul.f32 %v2667, %v2671
    %v2673 = vmul.f32 %v2566, %v2672
    %vm2674 = vcmp.eq.f32.partialorder %v2566, inf
    %v2675 = vsel %vm2674, %v2566, %v2673
    %vm2676 = vcmp.eq.f32.partialorder %v2566, 0.0
    %v2677 = vand.u32 %v2566, 2147483648
    %v2678 = vsel %vm2676, %v2677, %v2675
    %v2679 = vrsqrt.pop %v2567
    %v2680 = vmul.f32 %v2679, %v2567
    %v2681 = vmul.f32 %v2680, %v2679
    %v2682 = vmul.f32 0.5, %v2681
    %v2683 = vsub.f32 1.5, %v2682
    %v2684 = vmul.f32 %v2679, %v2683
    %v2685 = vmul.f32 %v2567, %v2684
    %vm2686 = vcmp.eq.f32.partialorder %v2567, inf
    %v2687 = vsel %vm2686, %v2567, %v2685
    %vm2688 = vcmp.eq.f32.partialorder %v2567, 0.0
    %v2689 = vand.u32 %v2567, 2147483648
    %v2690 = vsel %vm2688, %v2689, %v2687
    %v2691 = vrsqrt.pop %v2568
    %v2692 = vmul.f32 %v2691, %v2568
    %v2693 = vmul.f32 %v2692, %v2691
    %v2694 = vmul.f32 0.5, %v2693
    %v2695 = vsub.f32 1.5, %v2694
    %v2696 = vmul.f32 %v2691, %v2695
    %v2697 = vmul.f32 %v2568, %v2696
    %vm2698 = vcmp.eq.f32.partialorder %v2568, inf
    %v2699 = vsel %vm2698, %v2568, %v2697
    %vm2700 = vcmp.eq.f32.partialorder %v2568, 0.0
    %v2701 = vand.u32 %v2568, 2147483648
    %v2702 = vsel %vm2700, %v2701, %v2699
    %v2703 = vrsqrt.pop %v2569
    %v2704 = vmul.f32 %v2703, %v2569
    %v2705 = vmul.f32 %v2704, %v2703
    %v2706 = vmul.f32 0.5, %v2705
    %v2707 = vsub.f32 1.5, %v2706
    %v2708 = vmul.f32 %v2703, %v2707
    %v2709 = vmul.f32 %v2569, %v2708
    %vm2710 = vcmp.eq.f32.partialorder %v2569, inf
    %v2711 = vsel %vm2710, %v2569, %v2709
    %vm2712 = vcmp.eq.f32.partialorder %v2569, 0.0
    %v2713 = vand.u32 %v2569, 2147483648
    %v2714 = vsel %vm2712, %v2713, %v2711
    %v2715 = vrsqrt.pop %v2570
    %v2716 = vmul.f32 %v2715, %v2570
    %v2717 = vmul.f32 %v2716, %v2715
    %v2718 = vmul.f32 0.5, %v2717
    %v2719 = vsub.f32 1.5, %v2718
    %v2720 = vmul.f32 %v2715, %v2719
    %v2721 = vmul.f32 %v2570, %v2720
    %vm2722 = vcmp.eq.f32.partialorder %v2570, inf
    %v2723 = vsel %vm2722, %v2570, %v2721
    %vm2724 = vcmp.eq.f32.partialorder %v2570, 0.0
    %v2725 = vand.u32 %v2570, 2147483648
    %v2726 = vsel %vm2724, %v2725, %v2723
    %v2727 = vmul.f32 %v2361, %v2582
    %v2728 = vmul.f32 %v2373, %v2594
    %v2729 = vmul.f32 %v2385, %v2606
    %v2730 = vmul.f32 %v2397, %v2618
    %v2731 = vmul.f32 %v2409, %v2630
    %v2732 = vmul.f32 %v2421, %v2642
    %v2733 = vmul.f32 %v2433, %v2654
    %v2734 = vmul.f32 %v2445, %v2666
    %v2735 = vmul.f32 %v2457, %v2678
    %v2736 = vmul.f32 %v2469, %v2690
    %v2737 = vmul.f32 %v2481, %v2702
    %v2738 = vmul.f32 %v2493, %v2714
    %v2739 = vmul.f32 %v2505, %v2726
    %v2740 = vadd.f32 %v2727, 0.0001
    %v2741 = vadd.f32 %v2728, 0.0001
    %v2742 = vadd.f32 %v2729, 0.0001
    %v2743 = vadd.f32 %v2730, 0.0001
    %v2744 = vadd.f32 %v2731, 0.0001
    %v2745 = vadd.f32 %v2732, 0.0001
    %v2746 = vadd.f32 %v2733, 0.0001
    %v2747 = vadd.f32 %v2734, 0.0001
    %v2748 = vadd.f32 %v2735, 0.0001
    %v2749 = vadd.f32 %v2736, 0.0001
    %v2750 = vadd.f32 %v2737, 0.0001
    %v2751 = vadd.f32 %v2738, 0.0001
    %v2752 = vadd.f32 %v2739, 0.0001
    %v2753 = vrcp.pop %v2740
    %v2754 = vrcp.pop %v2741
    %v2755 = vrcp.pop %v2742
    %v2756 = vrcp.pop %v2743
    %v2757 = vrcp.pop %v2744
    %v2758 = vrcp.pop %v2745
    %v2759 = vrcp.pop %v2746
    %v2760 = vrcp.pop %v2747
    %v2761 = vrcp.pop %v2748
    %v2762 = vrcp.pop %v2749
    %v2763 = vrcp.pop %v2750
    %v2764 = vrcp.pop %v2751
    %v2765 = vrcp.pop %v2752
    %v2766 = vmul.f32 %v2194, %v2753
    %v2767 = vmul.f32 %v2195, %v2754
    %v2768 = vmul.f32 %v2196, %v2755
    %v2769 = vmul.f32 %v2197, %v2756
    %v2770 = vmul.f32 %v2198, %v2757
    %v2771 = vmul.f32 %v2199, %v2758
    %v2772 = vmul.f32 %v2200, %v2759
    %v2773 = vmul.f32 %v2201, %v2760
    %v2774 = vmul.f32 %v2202, %v2761
    %v2775 = vmul.f32 %v2203, %v2762
    %v2776 = vmul.f32 %v2204, %v2763
    %v2777 = vmul.f32 %v2205, %v2764
    %v2778 = vmul.f32 %v2206, %v2765
    %v2779 = vmul.f32 %v2233, %v2753
    %v2780 = vmul.f32 %v2234, %v2754
    %v2781 = vmul.f32 %v2235, %v2755
    %v2782 = vmul.f32 %v2236, %v2756
    %v2783 = vmul.f32 %v2237, %v2757
    %v2784 = vmul.f32 %v2238, %v2758
    %v2785 = vmul.f32 %v2239, %v2759
    %v2786 = vmul.f32 %v2240, %v2760
    %v2787 = vmul.f32 %v2241, %v2761
    %v2788 = vmul.f32 %v2242, %v2762
    %v2789 = vmul.f32 %v2243, %v2763
    %v2790 = vmul.f32 %v2244, %v2764
    %v2791 = vmul.f32 %v2245, %v2765
    %v2792 = vmul.f32 %v2272, %v2753
    %v2793 = vmul.f32 %v2273, %v2754
    %v2794 = vmul.f32 %v2274, %v2755
    %v2795 = vmul.f32 %v2275, %v2756
    %v2796 = vmul.f32 %v2276, %v2757
    %v2797 = vmul.f32 %v2277, %v2758
    %v2798 = vmul.f32 %v2278, %v2759
    %v2799 = vmul.f32 %v2279, %v2760
    %v2800 = vmul.f32 %v2280, %v2761
    %v2801 = vmul.f32 %v2281, %v2762
    %v2802 = vmul.f32 %v2282, %v2763
    %v2803 = vmul.f32 %v2283, %v2764
    %v2804 = vmul.f32 %v2284, %v2765
    %v2805 = vadd.f32 %v2582, 0.0001
    %v2806 = vadd.f32 %v2594, 0.0001
    %v2807 = vadd.f32 %v2606, 0.0001
    %v2808 = vadd.f32 %v2618, 0.0001
    %v2809 = vadd.f32 %v2630, 0.0001
    %v2810 = vadd.f32 %v2642, 0.0001
    %v2811 = vadd.f32 %v2654, 0.0001
    %v2812 = vadd.f32 %v2666, 0.0001
    %v2813 = vadd.f32 %v2678, 0.0001
    %v2814 = vadd.f32 %v2690, 0.0001
    %v2815 = vadd.f32 %v2702, 0.0001
    %v2816 = vadd.f32 %v2714, 0.0001
    %v2817 = vadd.f32 %v2726, 0.0001
    %v2818 = vrcp.pop %v2805
    %v2819 = vrcp.pop %v2806
    %v2820 = vrcp.pop %v2807
    %v2821 = vrcp.pop %v2808
    %v2822 = vrcp.pop %v2809
    %v2823 = vrcp.pop %v2810
    %v2824 = vrcp.pop %v2811
    %v2825 = vrcp.pop %v2812
    %v2826 = vrcp.pop %v2813
    %v2827 = vrcp.pop %v2814
    %v2828 = vrcp.pop %v2815
    %v2829 = vrcp.pop %v2816
    %v2830 = vrcp.pop %v2817
    %v2831 = vsub.f32 0.0, %v2077
    %v2832 = vsub.f32 0.0, %v2078
    %v2833 = vsub.f32 0.0, %v2079
    %v2834 = vsub.f32 0.0, %v2080
    %v2835 = vsub.f32 0.0, %v2081
    %v2836 = vsub.f32 0.0, %v2082
    %v2837 = vsub.f32 0.0, %v2083
    %v2838 = vsub.f32 0.0, %v2084
    %v2839 = vsub.f32 0.0, %v2085
    %v2840 = vsub.f32 0.0, %v2086
    %v2841 = vsub.f32 0.0, %v2087
    %v2842 = vsub.f32 0.0, %v2088
    %v2843 = vsub.f32 0.0, %v2089
    %v2844 = vmul.f32 %v2831, %v2818
    %v2845 = vmul.f32 %v2832, %v2819
    %v2846 = vmul.f32 %v2833, %v2820
    %v2847 = vmul.f32 %v2834, %v2821
    %v2848 = vmul.f32 %v2835, %v2822
    %v2849 = vmul.f32 %v2836, %v2823
    %v2850 = vmul.f32 %v2837, %v2824
    %v2851 = vmul.f32 %v2838, %v2825
    %v2852 = vmul.f32 %v2839, %v2826
    %v2853 = vmul.f32 %v2840, %v2827
    %v2854 = vmul.f32 %v2841, %v2828
    %v2855 = vmul.f32 %v2842, %v2829
    %v2856 = vmul.f32 %v2843, %v2830
    %v2857 = vsub.f32 0.0, %v2116
    %v2858 = vsub.f32 0.0, %v2117
    %v2859 = vsub.f32 0.0, %v2118
    %v2860 = vsub.f32 0.0, %v2119
    %v2861 = vsub.f32 0.0, %v2120
    %v2862 = vsub.f32 0.0, %v2121
    %v2863 = vsub.f32 0.0, %v2122
    %v2864 = vsub.f32 0.0, %v2123
    %v2865 = vsub.f32 0.0, %v2124
    %v2866 = vsub.f32 0.0, %v2125
    %v2867 = vsub.f32 0.0, %v2126
    %v2868 = vsub.f32 0.0, %v2127
    %v2869 = vsub.f32 0.0, %v2128
    %v2870 = vmul.f32 %v2857, %v2818
    %v2871 = vmul.f32 %v2858, %v2819
    %v2872 = vmul.f32 %v2859, %v2820
    %v2873 = vmul.f32 %v2860, %v2821
    %v2874 = vmul.f32 %v2861, %v2822
    %v2875 = vmul.f32 %v2862, %v2823
    %v2876 = vmul.f32 %v2863, %v2824
    %v2877 = vmul.f32 %v2864, %v2825
    %v2878 = vmul.f32 %v2865, %v2826
    %v2879 = vmul.f32 %v2866, %v2827
    %v2880 = vmul.f32 %v2867, %v2828
    %v2881 = vmul.f32 %v2868, %v2829
    %v2882 = vmul.f32 %v2869, %v2830
    %v2883 = vsub.f32 0.0, %v2155
    %v2884 = vsub.f32 0.0, %v2156
    %v2885 = vsub.f32 0.0, %v2157
    %v2886 = vsub.f32 0.0, %v2158
    %v2887 = vsub.f32 0.0, %v2159
    %v2888 = vsub.f32 0.0, %v2160
    %v2889 = vsub.f32 0.0, %v2161
    %v2890 = vsub.f32 0.0, %v2162
    %v2891 = vsub.f32 0.0, %v2163
    %v2892 = vsub.f32 0.0, %v2164
    %v2893 = vsub.f32 0.0, %v2165
    %v2894 = vsub.f32 0.0, %v2166
    %v2895 = vsub.f32 0.0, %v2167
    %v2896 = vmul.f32 %v2883, %v2818
    %v2897 = vmul.f32 %v2884, %v2819
    %v2898 = vmul.f32 %v2885, %v2820
    %v2899 = vmul.f32 %v2886, %v2821
    %v2900 = vmul.f32 %v2887, %v2822
    %v2901 = vmul.f32 %v2888, %v2823
    %v2902 = vmul.f32 %v2889, %v2824
    %v2903 = vmul.f32 %v2890, %v2825
    %v2904 = vmul.f32 %v2891, %v2826
    %v2905 = vmul.f32 %v2892, %v2827
    %v2906 = vmul.f32 %v2893, %v2828
    %v2907 = vmul.f32 %v2894, %v2829
    %v2908 = vmul.f32 %v2895, %v2830
    %vm2909 = vcmask 7168
    %2910 = vst.msk [vmem:[%s4] sm:$0xff] %vm2909, %v441
    %2911 = vst.msk [vmem:[%s4 + $0x8] sm:$0xff] %vm2909, %v442
    %2912 = vst.msk [vmem:[%s4 + $0x10] sm:$0xff] %vm2909, %v443
    %2913 = vst.msk [vmem:[%s4 + $0x18] sm:$0xff] %vm2909, %v444
    %2914 = vst.msk [vmem:[%s4 + $0x20] sm:$0xff] %vm2909, %v445
    %2915 = vst.msk [vmem:[%s4 + $0x28] sm:$0xff] %vm2909, %v446
    %2916 = vst.msk [vmem:[%s4 + $0x30] sm:$0xff] %vm2909, %v447
    %2917 = vst.msk [vmem:[%s4 + $0x38] sm:$0xff] %vm2909, %v448
    %2918 = vst.msk [vmem:[%s4 + $0x40] sm:$0xff] %vm2909, %v449
    %2919 = vst.msk [vmem:[%s4 + $0x48] sm:$0xff] %vm2909, %v450
    %2920 = vst.msk [vmem:[%s4 + $0x50] sm:$0xff] %vm2909, %v451
    %2921 = vst.msk [vmem:[%s4 + $0x58] sm:$0xff] %vm2909, %v452
    %2922 = vst.msk [vmem:[%s4 + $0x60] sm:$0xff] %vm2909, %v453
    %vm2923 = vcmask 15368
    %2924 = vst.msk [vmem:[%s4] sm:$0xff] %vm2923, %v678
    %2925 = vst.msk [vmem:[%s4 + $0x8] sm:$0xff] %vm2923, %v679
    %2926 = vst.msk [vmem:[%s4 + $0x10] sm:$0xff] %vm2923, %v680
    %2927 = vst.msk [vmem:[%s4 + $0x18] sm:$0xff] %vm2923, %v681
    %2928 = vst.msk [vmem:[%s4 + $0x20] sm:$0xff] %vm2923, %v682
    %2929 = vst.msk [vmem:[%s4 + $0x28] sm:$0xff] %vm2923, %v683
    %2930 = vst.msk [vmem:[%s4 + $0x30] sm:$0xff] %vm2923, %v684
    %2931 = vst.msk [vmem:[%s4 + $0x38] sm:$0xff] %vm2923, %v685
    %2932 = vst.msk [vmem:[%s4 + $0x40] sm:$0xff] %vm2923, %v686
    %2933 = vst.msk [vmem:[%s4 + $0x48] sm:$0xff] %vm2923, %v687
    %2934 = vst.msk [vmem:[%s4 + $0x50] sm:$0xff] %vm2923, %v688
    %2935 = vst.msk [vmem:[%s4 + $0x58] sm:$0xff] %vm2923, %v689
    %2936 = vst.msk [vmem:[%s4 + $0x60] sm:$0xff] %vm2923, %v690
    %vm2937 = vcmask 23568
    %2938 = vst.msk [vmem:[%s4] sm:$0xff] %vm2937, %v915
    %2939 = vst.msk [vmem:[%s4 + $0x8] sm:$0xff] %vm2937, %v916
    %2940 = vst.msk [vmem:[%s4 + $0x10] sm:$0xff] %vm2937, %v917
    %2941 = vst.msk [vmem:[%s4 + $0x18] sm:$0xff] %vm2937, %v918
    %2942 = vst.msk [vmem:[%s4 + $0x20] sm:$0xff] %vm2937, %v919
    %2943 = vst.msk [vmem:[%s4 + $0x28] sm:$0xff] %vm2937, %v920
    %2944 = vst.msk [vmem:[%s4 + $0x30] sm:$0xff] %vm2937, %v921
    %2945 = vst.msk [vmem:[%s4 + $0x38] sm:$0xff] %vm2937, %v922
    %2946 = vst.msk [vmem:[%s4 + $0x40] sm:$0xff] %vm2937, %v923
    %2947 = vst.msk [vmem:[%s4 + $0x48] sm:$0xff] %vm2937, %v924
    %2948 = vst.msk [vmem:[%s4 + $0x50] sm:$0xff] %vm2937, %v925
    %2949 = vst.msk [vmem:[%s4 + $0x58] sm:$0xff] %vm2937, %v926
    %2950 = vst.msk [vmem:[%s4 + $0x60] sm:$0xff] %vm2937, %v927
    %vm2951 = vcmask 31768
    %2952 = vst.msk [vmem:[%s4] sm:$0xff] %vm2951, %v1139
    %2953 = vst.msk [vmem:[%s4 + $0x8] sm:$0xff] %vm2951, %v1140
    %2954 = vst.msk [vmem:[%s4 + $0x10] sm:$0xff] %vm2951, %v1141
    %2955 = vst.msk [vmem:[%s4 + $0x18] sm:$0xff] %vm2951, %v1142
    %2956 = vst.msk [vmem:[%s4 + $0x20] sm:$0xff] %vm2951, %v1143
    %2957 = vst.msk [vmem:[%s4 + $0x28] sm:$0xff] %vm2951, %v1144
    %2958 = vst.msk [vmem:[%s4 + $0x30] sm:$0xff] %vm2951, %v1145
    %2959 = vst.msk [vmem:[%s4 + $0x38] sm:$0xff] %vm2951, %v1146
    %2960 = vst.msk [vmem:[%s4 + $0x40] sm:$0xff] %vm2951, %v1147
    %2961 = vst.msk [vmem:[%s4 + $0x48] sm:$0xff] %vm2951, %v1148
    %2962 = vst.msk [vmem:[%s4 + $0x50] sm:$0xff] %vm2951, %v1149
    %2963 = vst.msk [vmem:[%s4 + $0x58] sm:$0xff] %vm2951, %v1150
    %2964 = vst.msk [vmem:[%s4 + $0x60] sm:$0xff] %vm2951, %v1151
    %vm2965 = vcmask 39968
    %2966 = vst.msk [vmem:[%s4] sm:$0xff] %vm2965, %v1355
    %2967 = vst.msk [vmem:[%s4 + $0x8] sm:$0xff] %vm2965, %v1356
    %2968 = vst.msk [vmem:[%s4 + $0x10] sm:$0xff] %vm2965, %v1357
    %2969 = vst.msk [vmem:[%s4 + $0x18] sm:$0xff] %vm2965, %v1358
    %2970 = vst.msk [vmem:[%s4 + $0x20] sm:$0xff] %vm2965, %v1359
    %2971 = vst.msk [vmem:[%s4 + $0x28] sm:$0xff] %vm2965, %v1360
    %2972 = vst.msk [vmem:[%s4 + $0x30] sm:$0xff] %vm2965, %v1361
    %2973 = vst.msk [vmem:[%s4 + $0x38] sm:$0xff] %vm2965, %v1362
    %2974 = vst.msk [vmem:[%s4 + $0x40] sm:$0xff] %vm2965, %v1363
    %2975 = vst.msk [vmem:[%s4 + $0x48] sm:$0xff] %vm2965, %v1364
    %2976 = vst.msk [vmem:[%s4 + $0x50] sm:$0xff] %vm2965, %v1365
    %2977 = vst.msk [vmem:[%s4 + $0x58] sm:$0xff] %vm2965, %v1366
    %2978 = vst.msk [vmem:[%s4 + $0x60] sm:$0xff] %vm2965, %v1367
    %vm2979 = vcmask 48168
    %2980 = vst.msk [vmem:[%s4] sm:$0xff] %vm2979, %v1571
    %2981 = vst.msk [vmem:[%s4 + $0x8] sm:$0xff] %vm2979, %v1572
    %2982 = vst.msk [vmem:[%s4 + $0x10] sm:$0xff] %vm2979, %v1573
    %2983 = vst.msk [vmem:[%s4 + $0x18] sm:$0xff] %vm2979, %v1574
    %2984 = vst.msk [vmem:[%s4 + $0x20] sm:$0xff] %vm2979, %v1575
    %2985 = vst.msk [vmem:[%s4 + $0x28] sm:$0xff] %vm2979, %v1576
    %2986 = vst.msk [vmem:[%s4 + $0x30] sm:$0xff] %vm2979, %v1577
    %2987 = vst.msk [vmem:[%s4 + $0x38] sm:$0xff] %vm2979, %v1578
    %2988 = vst.msk [vmem:[%s4 + $0x40] sm:$0xff] %vm2979, %v1579
    %2989 = vst.msk [vmem:[%s4 + $0x48] sm:$0xff] %vm2979, %v1580
    %2990 = vst.msk [vmem:[%s4 + $0x50] sm:$0xff] %vm2979, %v1581
    %2991 = vst.msk [vmem:[%s4 + $0x58] sm:$0xff] %vm2979, %v1582
    %2992 = vst.msk [vmem:[%s4 + $0x60] sm:$0xff] %vm2979, %v1583
    %vm2993 = vcmask 56368
    %2994 = vst.msk [vmem:[%s4] sm:$0xff] %vm2993, %v1204
    %2995 = vst.msk [vmem:[%s4 + $0x8] sm:$0xff] %vm2993, %v1205
    %2996 = vst.msk [vmem:[%s4 + $0x10] sm:$0xff] %vm2993, %v1206
    %2997 = vst.msk [vmem:[%s4 + $0x18] sm:$0xff] %vm2993, %v1207
    %2998 = vst.msk [vmem:[%s4 + $0x20] sm:$0xff] %vm2993, %v1208
    %2999 = vst.msk [vmem:[%s4 + $0x28] sm:$0xff] %vm2993, %v1209
    %3000 = vst.msk [vmem:[%s4 + $0x30] sm:$0xff] %vm2993, %v1210
    %3001 = vst.msk [vmem:[%s4 + $0x38] sm:$0xff] %vm2993, %v1211
    %3002 = vst.msk [vmem:[%s4 + $0x40] sm:$0xff] %vm2993, %v1212
    %3003 = vst.msk [vmem:[%s4 + $0x48] sm:$0xff] %vm2993, %v1213
    %3004 = vst.msk [vmem:[%s4 + $0x50] sm:$0xff] %vm2993, %v1214
    %3005 = vst.msk [vmem:[%s4 + $0x58] sm:$0xff] %vm2993, %v1215
    %3006 = vst.msk [vmem:[%s4 + $0x60] sm:$0xff] %vm2993, %v1216
    %vm3007 = vcmask 64568
    %3008 = vst.msk [vmem:[%s4] sm:$0xff] %vm3007, %v1420
    %3009 = vst.msk [vmem:[%s4 + $0x8] sm:$0xff] %vm3007, %v1421
    %3010 = vst.msk [vmem:[%s4 + $0x10] sm:$0xff] %vm3007, %v1422
    %3011 = vst.msk [vmem:[%s4 + $0x18] sm:$0xff] %vm3007, %v1423
    %3012 = vst.msk [vmem:[%s4 + $0x20] sm:$0xff] %vm3007, %v1424
    %3013 = vst.msk [vmem:[%s4 + $0x28] sm:$0xff] %vm3007, %v1425
    %3014 = vst.msk [vmem:[%s4 + $0x30] sm:$0xff] %vm3007, %v1426
    %3015 = vst.msk [vmem:[%s4 + $0x38] sm:$0xff] %vm3007, %v1427
    %3016 = vst.msk [vmem:[%s4 + $0x40] sm:$0xff] %vm3007, %v1428
    %3017 = vst.msk [vmem:[%s4 + $0x48] sm:$0xff] %vm3007, %v1429
    %3018 = vst.msk [vmem:[%s4 + $0x50] sm:$0xff] %vm3007, %v1430
    %3019 = vst.msk [vmem:[%s4 + $0x58] sm:$0xff] %vm3007, %v1431
    %3020 = vst.msk [vmem:[%s4 + $0x60] sm:$0xff] %vm3007, %v1432
    %vm3021 = vcmask 72768
    %3022 = vst.msk [vmem:[%s4] sm:$0xff] %vm3021, %v1636
    %3023 = vst.msk [vmem:[%s4 + $0x8] sm:$0xff] %vm3021, %v1637
    %3024 = vst.msk [vmem:[%s4 + $0x10] sm:$0xff] %vm3021, %v1638
    %3025 = vst.msk [vmem:[%s4 + $0x18] sm:$0xff] %vm3021, %v1639
    %3026 = vst.msk [vmem:[%s4 + $0x20] sm:$0xff] %vm3021, %v1640
    %3027 = vst.msk [vmem:[%s4 + $0x28] sm:$0xff] %vm3021, %v1641
    %3028 = vst.msk [vmem:[%s4 + $0x30] sm:$0xff] %vm3021, %v1642
    %3029 = vst.msk [vmem:[%s4 + $0x38] sm:$0xff] %vm3021, %v1643
    %3030 = vst.msk [vmem:[%s4 + $0x40] sm:$0xff] %vm3021, %v1644
    %3031 = vst.msk [vmem:[%s4 + $0x48] sm:$0xff] %vm3021, %v1645
    %3032 = vst.msk [vmem:[%s4 + $0x50] sm:$0xff] %vm3021, %v1646
    %3033 = vst.msk [vmem:[%s4 + $0x58] sm:$0xff] %vm3021, %v1647
    %3034 = vst.msk [vmem:[%s4 + $0x60] sm:$0xff] %vm3021, %v1648
    %vm3035 = vcmask 80968
    %3036 = vst.msk [vmem:[%s4] sm:$0xff] %vm3035, %v1269
    %3037 = vst.msk [vmem:[%s4 + $0x8] sm:$0xff] %vm3035, %v1270
    %3038 = vst.msk [vmem:[%s4 + $0x10] sm:$0xff] %vm3035, %v1271
    %3039 = vst.msk [vmem:[%s4 + $0x18] sm:$0xff] %vm3035, %v1272
    %3040 = vst.msk [vmem:[%s4 + $0x20] sm:$0xff] %vm3035, %v1273
    %3041 = vst.msk [vmem:[%s4 + $0x28] sm:$0xff] %vm3035, %v1274
    %3042 = vst.msk [vmem:[%s4 + $0x30] sm:$0xff] %vm3035, %v1275
    %3043 = vst.msk [vmem:[%s4 + $0x38] sm:$0xff] %vm3035, %v1276
    %3044 = vst.msk [vmem:[%s4 + $0x40] sm:$0xff] %vm3035, %v1277
    %3045 = vst.msk [vmem:[%s4 + $0x48] sm:$0xff] %vm3035, %v1278
    %3046 = vst.msk [vmem:[%s4 + $0x50] sm:$0xff] %vm3035, %v1279
    %3047 = vst.msk [vmem:[%s4 + $0x58] sm:$0xff] %vm3035, %v1280
    %3048 = vst.msk [vmem:[%s4 + $0x60] sm:$0xff] %vm3035, %v1281
    %vm3049 = vcmask 89168
    %3050 = vst.msk [vmem:[%s4] sm:$0xff] %vm3049, %v1485
    %3051 = vst.msk [vmem:[%s4 + $0x8] sm:$0xff] %vm3049, %v1486
    %3052 = vst.msk [vmem:[%s4 + $0x10] sm:$0xff] %vm3049, %v1487
    %3053 = vst.msk [vmem:[%s4 + $0x18] sm:$0xff] %vm3049, %v1488
    %3054 = vst.msk [vmem:[%s4 + $0x20] sm:$0xff] %vm3049, %v1489
    %3055 = vst.msk [vmem:[%s4 + $0x28] sm:$0xff] %vm3049, %v1490
    %3056 = vst.msk [vmem:[%s4 + $0x30] sm:$0xff] %vm3049, %v1491
    %3057 = vst.msk [vmem:[%s4 + $0x38] sm:$0xff] %vm3049, %v1492
    %3058 = vst.msk [vmem:[%s4 + $0x40] sm:$0xff] %vm3049, %v1493
    %3059 = vst.msk [vmem:[%s4 + $0x48] sm:$0xff] %vm3049, %v1494
    %3060 = vst.msk [vmem:[%s4 + $0x50] sm:$0xff] %vm3049, %v1495
    %3061 = vst.msk [vmem:[%s4 + $0x58] sm:$0xff] %vm3049, %v1496
    %3062 = vst.msk [vmem:[%s4 + $0x60] sm:$0xff] %vm3049, %v1497
    %vm3063 = vcmask 97368
    %3064 = vst.msk [vmem:[%s4] sm:$0xff] %vm3063, %v1701
    %3065 = vst.msk [vmem:[%s4 + $0x8] sm:$0xff] %vm3063, %v1702
    %3066 = vst.msk [vmem:[%s4 + $0x10] sm:$0xff] %vm3063, %v1703
    %3067 = vst.msk [vmem:[%s4 + $0x18] sm:$0xff] %vm3063, %v1704
    %3068 = vst.msk [vmem:[%s4 + $0x20] sm:$0xff] %vm3063, %v1705
    %3069 = vst.msk [vmem:[%s4 + $0x28] sm:$0xff] %vm3063, %v1706
    %3070 = vst.msk [vmem:[%s4 + $0x30] sm:$0xff] %vm3063, %v1707
    %3071 = vst.msk [vmem:[%s4 + $0x38] sm:$0xff] %vm3063, %v1708
    %3072 = vst.msk [vmem:[%s4 + $0x40] sm:$0xff] %vm3063, %v1709
    %3073 = vst.msk [vmem:[%s4 + $0x48] sm:$0xff] %vm3063, %v1710
    %3074 = vst.msk [vmem:[%s4 + $0x50] sm:$0xff] %vm3063, %v1711
    %3075 = vst.msk [vmem:[%s4 + $0x58] sm:$0xff] %vm3063, %v1712
    %3076 = vst.msk [vmem:[%s4 + $0x60] sm:$0xff] %vm3063, %v1713
    %vm3077 = vcmask 105568
    %3078 = vst.msk [vmem:[%s4] sm:$0xff] %vm3077, %v1980
    %3079 = vst.msk [vmem:[%s4 + $0x8] sm:$0xff] %vm3077, %v1981
    %3080 = vst.msk [vmem:[%s4 + $0x10] sm:$0xff] %vm3077, %v1982
    %3081 = vst.msk [vmem:[%s4 + $0x18] sm:$0xff] %vm3077, %v1983
    %3082 = vst.msk [vmem:[%s4 + $0x20] sm:$0xff] %vm3077, %v1984
    %3083 = vst.msk [vmem:[%s4 + $0x28] sm:$0xff] %vm3077, %v1985
    %3084 = vst.msk [vmem:[%s4 + $0x30] sm:$0xff] %vm3077, %v1986
    %3085 = vst.msk [vmem:[%s4 + $0x38] sm:$0xff] %vm3077, %v1987
    %3086 = vst.msk [vmem:[%s4 + $0x40] sm:$0xff] %vm3077, %v1988
    %3087 = vst.msk [vmem:[%s4 + $0x48] sm:$0xff] %vm3077, %v1989
    %3088 = vst.msk [vmem:[%s4 + $0x50] sm:$0xff] %vm3077, %v1990
    %3089 = vst.msk [vmem:[%s4 + $0x58] sm:$0xff] %vm3077, %v1991
    %3090 = vst.msk [vmem:[%s4 + $0x60] sm:$0xff] %vm3077, %v1992
    %vm3091 = vcmask 113768
    %3092 = vst.msk [vmem:[%s4] sm:$0xff] %vm3091, %v2038
    %3093 = vst.msk [vmem:[%s4 + $0x8] sm:$0xff] %vm3091, %v2039
    %3094 = vst.msk [vmem:[%s4 + $0x10] sm:$0xff] %vm3091, %v2040
    %3095 = vst.msk [vmem:[%s4 + $0x18] sm:$0xff] %vm3091, %v2041
    %3096 = vst.msk [vmem:[%s4 + $0x20] sm:$0xff] %vm3091, %v2042
    %3097 = vst.msk [vmem:[%s4 + $0x28] sm:$0xff] %vm3091, %v2043
    %3098 = vst.msk [vmem:[%s4 + $0x30] sm:$0xff] %vm3091, %v2044
    %3099 = vst.msk [vmem:[%s4 + $0x38] sm:$0xff] %vm3091, %v2045
    %3100 = vst.msk [vmem:[%s4 + $0x40] sm:$0xff] %vm3091, %v2046
    %3101 = vst.msk [vmem:[%s4 + $0x48] sm:$0xff] %vm3091, %v2047
    %3102 = vst.msk [vmem:[%s4 + $0x50] sm:$0xff] %vm3091, %v2048
    %3103 = vst.msk [vmem:[%s4 + $0x58] sm:$0xff] %vm3091, %v2049
    %3104 = vst.msk [vmem:[%s4 + $0x60] sm:$0xff] %vm3091, %v2050
    %vm3105 = vcmask 121968
    %3106 = vst.msk [vmem:[%s4] sm:$0xff] %vm3105, %v2766
    %3107 = vst.msk [vmem:[%s4 + $0x8] sm:$0xff] %vm3105, %v2767
    %3108 = vst.msk [vmem:[%s4 + $0x10] sm:$0xff] %vm3105, %v2768
    %3109 = vst.msk [vmem:[%s4 + $0x18] sm:$0xff] %vm3105, %v2769
    %3110 = vst.msk [vmem:[%s4 + $0x20] sm:$0xff] %vm3105, %v2770
    %3111 = vst.msk [vmem:[%s4 + $0x28] sm:$0xff] %vm3105, %v2771
    %3112 = vst.msk [vmem:[%s4 + $0x30] sm:$0xff] %vm3105, %v2772
    %3113 = vst.msk [vmem:[%s4 + $0x38] sm:$0xff] %vm3105, %v2773
    %3114 = vst.msk [vmem:[%s4 + $0x40] sm:$0xff] %vm3105, %v2774
    %3115 = vst.msk [vmem:[%s4 + $0x48] sm:$0xff] %vm3105, %v2775
    %3116 = vst.msk [vmem:[%s4 + $0x50] sm:$0xff] %vm3105, %v2776
    %3117 = vst.msk [vmem:[%s4 + $0x58] sm:$0xff] %vm3105, %v2777
    %3118 = vst.msk [vmem:[%s4 + $0x60] sm:$0xff] %vm3105, %v2778
    %vm3119 = vcmask 130168
    %3120 = vst.msk [vmem:[%s4] sm:$0xff] %vm3119, %v2779
    %3121 = vst.msk [vmem:[%s4 + $0x8] sm:$0xff] %vm3119, %v2780
    %3122 = vst.msk [vmem:[%s4 + $0x10] sm:$0xff] %vm3119, %v2781
    %3123 = vst.msk [vmem:[%s4 + $0x18] sm:$0xff] %vm3119, %v2782
    %3124 = vst.msk [vmem:[%s4 + $0x20] sm:$0xff] %vm3119, %v2783
    %3125 = vst.msk [vmem:[%s4 + $0x28] sm:$0xff] %vm3119, %v2784
    %3126 = vst.msk [vmem:[%s4 + $0x30] sm:$0xff] %vm3119, %v2785
    %3127 = vst.msk [vmem:[%s4 + $0x38] sm:$0xff] %vm3119, %v2786
    %3128 = vst.msk [vmem:[%s4 + $0x40] sm:$0xff] %vm3119, %v2787
    %3129 = vst.msk [vmem:[%s4 + $0x48] sm:$0xff] %vm3119, %v2788
    %3130 = vst.msk [vmem:[%s4 + $0x50] sm:$0xff] %vm3119, %v2789
    %3131 = vst.msk [vmem:[%s4 + $0x58] sm:$0xff] %vm3119, %v2790
    %3132 = vst.msk [vmem:[%s4 + $0x60] sm:$0xff] %vm3119, %v2791
    %vm3133 = vcmask 138368
    %3134 = vst.msk [vmem:[%s4] sm:$0xff] %vm3133, %v2792
    %3135 = vst.msk [vmem:[%s4 + $0x8] sm:$0xff] %vm3133, %v2793
    %3136 = vst.msk [vmem:[%s4 + $0x10] sm:$0xff] %vm3133, %v2794
    %3137 = vst.msk [vmem:[%s4 + $0x18] sm:$0xff] %vm3133, %v2795
    %3138 = vst.msk [vmem:[%s4 + $0x20] sm:$0xff] %vm3133, %v2796
    %3139 = vst.msk [vmem:[%s4 + $0x28] sm:$0xff] %vm3133, %v2797
    %3140 = vst.msk [vmem:[%s4 + $0x30] sm:$0xff] %vm3133, %v2798
    %3141 = vst.msk [vmem:[%s4 + $0x38] sm:$0xff] %vm3133, %v2799
    %3142 = vst.msk [vmem:[%s4 + $0x40] sm:$0xff] %vm3133, %v2800
    %3143 = vst.msk [vmem:[%s4 + $0x48] sm:$0xff] %vm3133, %v2801
    %3144 = vst.msk [vmem:[%s4 + $0x50] sm:$0xff] %vm3133, %v2802
    %3145 = vst.msk [vmem:[%s4 + $0x58] sm:$0xff] %vm3133, %v2803
    %3146 = vst.msk [vmem:[%s4 + $0x60] sm:$0xff] %vm3133, %v2804
    %vm3147 = vcmask 146568
    %3148 = vst.msk [vmem:[%s4] sm:$0xff] %vm3147, %v2844
    %3149 = vst.msk [vmem:[%s4 + $0x8] sm:$0xff] %vm3147, %v2845
    %3150 = vst.msk [vmem:[%s4 + $0x10] sm:$0xff] %vm3147, %v2846
    %3151 = vst.msk [vmem:[%s4 + $0x18] sm:$0xff] %vm3147, %v2847
    %3152 = vst.msk [vmem:[%s4 + $0x20] sm:$0xff] %vm3147, %v2848
    %3153 = vst.msk [vmem:[%s4 + $0x28] sm:$0xff] %vm3147, %v2849
    %3154 = vst.msk [vmem:[%s4 + $0x30] sm:$0xff] %vm3147, %v2850
    %3155 = vst.msk [vmem:[%s4 + $0x38] sm:$0xff] %vm3147, %v2851
    %3156 = vst.msk [vmem:[%s4 + $0x40] sm:$0xff] %vm3147, %v2852
    %3157 = vst.msk [vmem:[%s4 + $0x48] sm:$0xff] %vm3147, %v2853
    %3158 = vst.msk [vmem:[%s4 + $0x50] sm:$0xff] %vm3147, %v2854
    %3159 = vst.msk [vmem:[%s4 + $0x58] sm:$0xff] %vm3147, %v2855
    %3160 = vst.msk [vmem:[%s4 + $0x60] sm:$0xff] %vm3147, %v2856
    %vm3161 = vcmask 154768
    %3162 = vst.msk [vmem:[%s4] sm:$0xff] %vm3161, %v2870
    %3163 = vst.msk [vmem:[%s4 + $0x8] sm:$0xff] %vm3161, %v2871
    %3164 = vst.msk [vmem:[%s4 + $0x10] sm:$0xff] %vm3161, %v2872
    %3165 = vst.msk [vmem:[%s4 + $0x18] sm:$0xff] %vm3161, %v2873
    %3166 = vst.msk [vmem:[%s4 + $0x20] sm:$0xff] %vm3161, %v2874
    %3167 = vst.msk [vmem:[%s4 + $0x28] sm:$0xff] %vm3161, %v2875
    %3168 = vst.msk [vmem:[%s4 + $0x30] sm:$0xff] %vm3161, %v2876
    %3169 = vst.msk [vmem:[%s4 + $0x38] sm:$0xff] %vm3161, %v2877
    %3170 = vst.msk [vmem:[%s4 + $0x40] sm:$0xff] %vm3161, %v2878
    %3171 = vst.msk [vmem:[%s4 + $0x48] sm:$0xff] %vm3161, %v2879
    %3172 = vst.msk [vmem:[%s4 + $0x50] sm:$0xff] %vm3161, %v2880
    %3173 = vst.msk [vmem:[%s4 + $0x58] sm:$0xff] %vm3161, %v2881
    %3174 = vst.msk [vmem:[%s4 + $0x60] sm:$0xff] %vm3161, %v2882
    %vm3175 = vcmask 162968
    %3176 = vst.msk [vmem:[%s4] sm:$0xff] %vm3175, %v2896
    %3177 = vst.msk [vmem:[%s4 + $0x8] sm:$0xff] %vm3175, %v2897
    %3178 = vst.msk [vmem:[%s4 + $0x10] sm:$0xff] %vm3175, %v2898
    %3179 = vst.msk [vmem:[%s4 + $0x18] sm:$0xff] %vm3175, %v2899
    %3180 = vst.msk [vmem:[%s4 + $0x20] sm:$0xff] %vm3175, %v2900
    %3181 = vst.msk [vmem:[%s4 + $0x28] sm:$0xff] %vm3175, %v2901
    %3182 = vst.msk [vmem:[%s4 + $0x30] sm:$0xff] %vm3175, %v2902
    %3183 = vst.msk [vmem:[%s4 + $0x38] sm:$0xff] %vm3175, %v2903
    %3184 = vst.msk [vmem:[%s4 + $0x40] sm:$0xff] %vm3175, %v2904
    %3185 = vst.msk [vmem:[%s4 + $0x48] sm:$0xff] %vm3175, %v2905
    %3186 = vst.msk [vmem:[%s4 + $0x50] sm:$0xff] %vm3175, %v2906
    %3187 = vst.msk [vmem:[%s4 + $0x58] sm:$0xff] %vm3175, %v2907
    %3188 = vst.msk [vmem:[%s4 + $0x60] sm:$0xff] %vm3175, %v2908
    %v3189 = vld [vmem:[%s3] ss:$8 sm:$0x3]
    %s3190 = scalar_lea.vmem %s3, 3
    %v3191 = vld [vmem:[%s3190] ss:$8 sm:$0x3]
    %s3192 = scalar_lea.vmem %s3, 6
    %v3193 = vld [vmem:[%s3192] ss:$8 sm:$0x3]
    %v3195 = vperm.slane %v3189, 0
    %v3196 = vperm.slane %v3189, 1
    %v3199 = vmul.f32 %v3195, %v441
    %v3200 = vmul.f32 %v3196, %v441
    %v3201 = vmul.f32 %v3195, %v442
    %v3202 = vmul.f32 %v3196, %v442
    %v3203 = vmul.f32 %v3195, %v443
    %v3204 = vmul.f32 %v3196, %v443
    %v3205 = vmul.f32 %v3195, %v444
    %v3206 = vmul.f32 %v3196, %v444
    %v3207 = vmul.f32 %v3195, %v445
    %v3208 = vmul.f32 %v3196, %v445
    %v3209 = vmul.f32 %v3195, %v446
    %v3210 = vmul.f32 %v3196, %v446
    %v3211 = vmul.f32 %v3195, %v447
    %v3212 = vmul.f32 %v3196, %v447
    %v3213 = vmul.f32 %v3195, %v448
    %v3214 = vmul.f32 %v3196, %v448
    %v3215 = vmul.f32 %v3195, %v449
    %v3216 = vmul.f32 %v3196, %v449
    %v3217 = vmul.f32 %v3195, %v450
    %v3218 = vmul.f32 %v3196, %v450
    %v3219 = vmul.f32 %v3195, %v451
    %v3220 = vmul.f32 %v3196, %v451
    %v3221 = vmul.f32 %v3195, %v452
    %v3222 = vmul.f32 %v3196, %v452
    %v3223 = vmul.f32 %v3195, %v453
    %v3224 = vmul.f32 %v3196, %v453
    %v3226 = vperm.slane %v3191, 0
    %v3227 = vperm.slane %v3191, 1
    %v3230 = vmul.f32 %v3226, %v2766
    %v3231 = vmul.f32 %v3227, %v2766
    %v3232 = vmul.f32 %v3226, %v2767
    %v3233 = vmul.f32 %v3227, %v2767
    %v3234 = vmul.f32 %v3226, %v2768
    %v3235 = vmul.f32 %v3227, %v2768
    %v3236 = vmul.f32 %v3226, %v2769
    %v3237 = vmul.f32 %v3227, %v2769
    %v3238 = vmul.f32 %v3226, %v2770
    %v3239 = vmul.f32 %v3227, %v2770
    %v3240 = vmul.f32 %v3226, %v2771
    %v3241 = vmul.f32 %v3227, %v2771
    %v3242 = vmul.f32 %v3226, %v2772
    %v3243 = vmul.f32 %v3227, %v2772
    %v3244 = vmul.f32 %v3226, %v2773
    %v3245 = vmul.f32 %v3227, %v2773
    %v3246 = vmul.f32 %v3226, %v2774
    %v3247 = vmul.f32 %v3227, %v2774
    %v3248 = vmul.f32 %v3226, %v2775
    %v3249 = vmul.f32 %v3227, %v2775
    %v3250 = vmul.f32 %v3226, %v2776
    %v3251 = vmul.f32 %v3227, %v2776
    %v3252 = vmul.f32 %v3226, %v2777
    %v3253 = vmul.f32 %v3227, %v2777
    %v3254 = vmul.f32 %v3226, %v2778
    %v3255 = vmul.f32 %v3227, %v2778
    %v3256 = vadd.f32 %v3199, %v3230
    %v3257 = vadd.f32 %v3200, %v3231
    %v3258 = vadd.f32 %v3201, %v3232
    %v3259 = vadd.f32 %v3202, %v3233
    %v3260 = vadd.f32 %v3203, %v3234
    %v3261 = vadd.f32 %v3204, %v3235
    %v3262 = vadd.f32 %v3205, %v3236
    %v3263 = vadd.f32 %v3206, %v3237
    %v3264 = vadd.f32 %v3207, %v3238
    %v3265 = vadd.f32 %v3208, %v3239
    %v3266 = vadd.f32 %v3209, %v3240
    %v3267 = vadd.f32 %v3210, %v3241
    %v3268 = vadd.f32 %v3211, %v3242
    %v3269 = vadd.f32 %v3212, %v3243
    %v3270 = vadd.f32 %v3213, %v3244
    %v3271 = vadd.f32 %v3214, %v3245
    %v3272 = vadd.f32 %v3215, %v3246
    %v3273 = vadd.f32 %v3216, %v3247
    %v3274 = vadd.f32 %v3217, %v3248
    %v3275 = vadd.f32 %v3218, %v3249
    %v3276 = vadd.f32 %v3219, %v3250
    %v3277 = vadd.f32 %v3220, %v3251
    %v3278 = vadd.f32 %v3221, %v3252
    %v3279 = vadd.f32 %v3222, %v3253
    %v3280 = vadd.f32 %v3223, %v3254
    %v3281 = vadd.f32 %v3224, %v3255
    %v3283 = vperm.slane %v3193, 0
    %v3284 = vperm.slane %v3193, 1
    %v3287 = vmul.f32 %v3283, %v2844
    %v3288 = vmul.f32 %v3284, %v2844
    %v3289 = vmul.f32 %v3283, %v2845
    %v3290 = vmul.f32 %v3284, %v2845
    %v3291 = vmul.f32 %v3283, %v2846
    %v3292 = vmul.f32 %v3284, %v2846
    %v3293 = vmul.f32 %v3283, %v2847
    %v3294 = vmul.f32 %v3284, %v2847
    %v3295 = vmul.f32 %v3283, %v2848
    %v3296 = vmul.f32 %v3284, %v2848
    %v3297 = vmul.f32 %v3283, %v2849
    %v3298 = vmul.f32 %v3284, %v2849
    %v3299 = vmul.f32 %v3283, %v2850
    %v3300 = vmul.f32 %v3284, %v2850
    %v3301 = vmul.f32 %v3283, %v2851
    %v3302 = vmul.f32 %v3284, %v2851
    %v3303 = vmul.f32 %v3283, %v2852
    %v3304 = vmul.f32 %v3284, %v2852
    %v3305 = vmul.f32 %v3283, %v2853
    %v3306 = vmul.f32 %v3284, %v2853
    %v3307 = vmul.f32 %v3283, %v2854
    %v3308 = vmul.f32 %v3284, %v2854
    %v3309 = vmul.f32 %v3283, %v2855
    %v3310 = vmul.f32 %v3284, %v2855
    %v3311 = vmul.f32 %v3283, %v2856
    %v3312 = vmul.f32 %v3284, %v2856
    %v3313 = vadd.f32 %v3256, %v3287
    %v3314 = vadd.f32 %v3257, %v3288
    %v3315 = vadd.f32 %v3258, %v3289
    %v3316 = vadd.f32 %v3259, %v3290
    %v3317 = vadd.f32 %v3260, %v3291
    %v3318 = vadd.f32 %v3261, %v3292
    %v3319 = vadd.f32 %v3262, %v3293
    %v3320 = vadd.f32 %v3263, %v3294
    %v3321 = vadd.f32 %v3264, %v3295
    %v3322 = vadd.f32 %v3265, %v3296
    %v3323 = vadd.f32 %v3266, %v3297
    %v3324 = vadd.f32 %v3267, %v3298
    %v3325 = vadd.f32 %v3268, %v3299
    %v3326 = vadd.f32 %v3269, %v3300
    %v3327 = vadd.f32 %v3270, %v3301
    %v3328 = vadd.f32 %v3271, %v3302
    %v3329 = vadd.f32 %v3272, %v3303
    %v3330 = vadd.f32 %v3273, %v3304
    %v3331 = vadd.f32 %v3274, %v3305
    %v3332 = vadd.f32 %v3275, %v3306
    %v3333 = vadd.f32 %v3276, %v3307
    %v3334 = vadd.f32 %v3277, %v3308
    %v3335 = vadd.f32 %v3278, %v3309
    %v3336 = vadd.f32 %v3279, %v3310
    %v3337 = vadd.f32 %v3280, %v3311
    %v3338 = vadd.f32 %v3281, %v3312
    %s3339 = scalar_lea.vmem %s3, 1
    %v3340 = vld [vmem:[%s3339] ss:$8 sm:$0x3]
    %s3341 = scalar_lea.vmem %s3, 4
    %v3342 = vld [vmem:[%s3341] ss:$8 sm:$0x3]
    %s3343 = scalar_lea.vmem %s3, 7
    %v3344 = vld [vmem:[%s3343] ss:$8 sm:$0x3]
    %v3346 = vperm.slane %v3340, 0
    %v3347 = vperm.slane %v3340, 1
    %v3350 = vmul.f32 %v3346, %v678
    %v3351 = vmul.f32 %v3347, %v678
    %v3352 = vmul.f32 %v3346, %v679
    %v3353 = vmul.f32 %v3347, %v679
    %v3354 = vmul.f32 %v3346, %v680
    %v3355 = vmul.f32 %v3347, %v680
    %v3356 = vmul.f32 %v3346, %v681
    %v3357 = vmul.f32 %v3347, %v681
    %v3358 = vmul.f32 %v3346, %v682
    %v3359 = vmul.f32 %v3347, %v682
    %v3360 = vmul.f32 %v3346, %v683
    %v3361 = vmul.f32 %v3347, %v683
    %v3362 = vmul.f32 %v3346, %v684
    %v3363 = vmul.f32 %v3347, %v684
    %v3364 = vmul.f32 %v3346, %v685
    %v3365 = vmul.f32 %v3347, %v685
    %v3366 = vmul.f32 %v3346, %v686
    %v3367 = vmul.f32 %v3347, %v686
    %v3368 = vmul.f32 %v3346, %v687
    %v3369 = vmul.f32 %v3347, %v687
    %v3370 = vmul.f32 %v3346, %v688
    %v3371 = vmul.f32 %v3347, %v688
    %v3372 = vmul.f32 %v3346, %v689
    %v3373 = vmul.f32 %v3347, %v689
    %v3374 = vmul.f32 %v3346, %v690
    %v3375 = vmul.f32 %v3347, %v690
    %v3377 = vperm.slane %v3342, 0
    %v3378 = vperm.slane %v3342, 1
    %v3381 = vmul.f32 %v3377, %v2779
    %v3382 = vmul.f32 %v3378, %v2779
    %v3383 = vmul.f32 %v3377, %v2780
    %v3384 = vmul.f32 %v3378, %v2780
    %v3385 = vmul.f32 %v3377, %v2781
    %v3386 = vmul.f32 %v3378, %v2781
    %v3387 = vmul.f32 %v3377, %v2782
    %v3388 = vmul.f32 %v3378, %v2782
    %v3389 = vmul.f32 %v3377, %v2783
    %v3390 = vmul.f32 %v3378, %v2783
    %v3391 = vmul.f32 %v3377, %v2784
    %v3392 = vmul.f32 %v3378, %v2784
    %v3393 = vmul.f32 %v3377, %v2785
    %v3394 = vmul.f32 %v3378, %v2785
    %v3395 = vmul.f32 %v3377, %v2786
    %v3396 = vmul.f32 %v3378, %v2786
    %v3397 = vmul.f32 %v3377, %v2787
    %v3398 = vmul.f32 %v3378, %v2787
    %v3399 = vmul.f32 %v3377, %v2788
    %v3400 = vmul.f32 %v3378, %v2788
    %v3401 = vmul.f32 %v3377, %v2789
    %v3402 = vmul.f32 %v3378, %v2789
    %v3403 = vmul.f32 %v3377, %v2790
    %v3404 = vmul.f32 %v3378, %v2790
    %v3405 = vmul.f32 %v3377, %v2791
    %v3406 = vmul.f32 %v3378, %v2791
    %v3407 = vadd.f32 %v3350, %v3381
    %v3408 = vadd.f32 %v3351, %v3382
    %v3409 = vadd.f32 %v3352, %v3383
    %v3410 = vadd.f32 %v3353, %v3384
    %v3411 = vadd.f32 %v3354, %v3385
    %v3412 = vadd.f32 %v3355, %v3386
    %v3413 = vadd.f32 %v3356, %v3387
    %v3414 = vadd.f32 %v3357, %v3388
    %v3415 = vadd.f32 %v3358, %v3389
    %v3416 = vadd.f32 %v3359, %v3390
    %v3417 = vadd.f32 %v3360, %v3391
    %v3418 = vadd.f32 %v3361, %v3392
    %v3419 = vadd.f32 %v3362, %v3393
    %v3420 = vadd.f32 %v3363, %v3394
    %v3421 = vadd.f32 %v3364, %v3395
    %v3422 = vadd.f32 %v3365, %v3396
    %v3423 = vadd.f32 %v3366, %v3397
    %v3424 = vadd.f32 %v3367, %v3398
    %v3425 = vadd.f32 %v3368, %v3399
    %v3426 = vadd.f32 %v3369, %v3400
    %v3427 = vadd.f32 %v3370, %v3401
    %v3428 = vadd.f32 %v3371, %v3402
    %v3429 = vadd.f32 %v3372, %v3403
    %v3430 = vadd.f32 %v3373, %v3404
    %v3431 = vadd.f32 %v3374, %v3405
    %v3432 = vadd.f32 %v3375, %v3406
    %v3434 = vperm.slane %v3344, 0
    %v3435 = vperm.slane %v3344, 1
    %v3438 = vmul.f32 %v3434, %v2870
    %v3439 = vmul.f32 %v3435, %v2870
    %v3440 = vmul.f32 %v3434, %v2871
    %v3441 = vmul.f32 %v3435, %v2871
    %v3442 = vmul.f32 %v3434, %v2872
    %v3443 = vmul.f32 %v3435, %v2872
    %v3444 = vmul.f32 %v3434, %v2873
    %v3445 = vmul.f32 %v3435, %v2873
    %v3446 = vmul.f32 %v3434, %v2874
    %v3447 = vmul.f32 %v3435, %v2874
    %v3448 = vmul.f32 %v3434, %v2875
    %v3449 = vmul.f32 %v3435, %v2875
    %v3450 = vmul.f32 %v3434, %v2876
    %v3451 = vmul.f32 %v3435, %v2876
    %v3452 = vmul.f32 %v3434, %v2877
    %v3453 = vmul.f32 %v3435, %v2877
    %v3454 = vmul.f32 %v3434, %v2878
    %v3455 = vmul.f32 %v3435, %v2878
    %v3456 = vmul.f32 %v3434, %v2879
    %v3457 = vmul.f32 %v3435, %v2879
    %v3458 = vmul.f32 %v3434, %v2880
    %v3459 = vmul.f32 %v3435, %v2880
    %v3460 = vmul.f32 %v3434, %v2881
    %v3461 = vmul.f32 %v3435, %v2881
    %v3462 = vmul.f32 %v3434, %v2882
    %v3463 = vmul.f32 %v3435, %v2882
    %v3464 = vadd.f32 %v3407, %v3438
    %v3465 = vadd.f32 %v3408, %v3439
    %v3466 = vadd.f32 %v3409, %v3440
    %v3467 = vadd.f32 %v3410, %v3441
    %v3468 = vadd.f32 %v3411, %v3442
    %v3469 = vadd.f32 %v3412, %v3443
    %v3470 = vadd.f32 %v3413, %v3444
    %v3471 = vadd.f32 %v3414, %v3445
    %v3472 = vadd.f32 %v3415, %v3446
    %v3473 = vadd.f32 %v3416, %v3447
    %v3474 = vadd.f32 %v3417, %v3448
    %v3475 = vadd.f32 %v3418, %v3449
    %v3476 = vadd.f32 %v3419, %v3450
    %v3477 = vadd.f32 %v3420, %v3451
    %v3478 = vadd.f32 %v3421, %v3452
    %v3479 = vadd.f32 %v3422, %v3453
    %v3480 = vadd.f32 %v3423, %v3454
    %v3481 = vadd.f32 %v3424, %v3455
    %v3482 = vadd.f32 %v3425, %v3456
    %v3483 = vadd.f32 %v3426, %v3457
    %v3484 = vadd.f32 %v3427, %v3458
    %v3485 = vadd.f32 %v3428, %v3459
    %v3486 = vadd.f32 %v3429, %v3460
    %v3487 = vadd.f32 %v3430, %v3461
    %v3488 = vadd.f32 %v3431, %v3462
    %v3489 = vadd.f32 %v3432, %v3463
    %v3490 = vadd.f32 %v3313, %v3464
    %v3491 = vadd.f32 %v3314, %v3465
    %v3492 = vadd.f32 %v3315, %v3466
    %v3493 = vadd.f32 %v3316, %v3467
    %v3494 = vadd.f32 %v3317, %v3468
    %v3495 = vadd.f32 %v3318, %v3469
    %v3496 = vadd.f32 %v3319, %v3470
    %v3497 = vadd.f32 %v3320, %v3471
    %v3498 = vadd.f32 %v3321, %v3472
    %v3499 = vadd.f32 %v3322, %v3473
    %v3500 = vadd.f32 %v3323, %v3474
    %v3501 = vadd.f32 %v3324, %v3475
    %v3502 = vadd.f32 %v3325, %v3476
    %v3503 = vadd.f32 %v3326, %v3477
    %v3504 = vadd.f32 %v3327, %v3478
    %v3505 = vadd.f32 %v3328, %v3479
    %v3506 = vadd.f32 %v3329, %v3480
    %v3507 = vadd.f32 %v3330, %v3481
    %v3508 = vadd.f32 %v3331, %v3482
    %v3509 = vadd.f32 %v3332, %v3483
    %v3510 = vadd.f32 %v3333, %v3484
    %v3511 = vadd.f32 %v3334, %v3485
    %v3512 = vadd.f32 %v3335, %v3486
    %v3513 = vadd.f32 %v3336, %v3487
    %v3514 = vadd.f32 %v3337, %v3488
    %v3515 = vadd.f32 %v3338, %v3489
    %s3516 = scalar_lea.vmem %s3, 2
    %v3517 = vld [vmem:[%s3516] ss:$8 sm:$0x3]
    %s3518 = scalar_lea.vmem %s3, 5
    %v3519 = vld [vmem:[%s3518] ss:$8 sm:$0x3]
    %s3520 = scalar_lea.vmem %s3, 16
    %v3521 = vld [vmem:[%s3520] ss:$8 sm:$0x3]
    %v3523 = vperm.slane %v3517, 0
    %v3524 = vperm.slane %v3517, 1
    %v3527 = vmul.f32 %v3523, %v915
    %v3528 = vmul.f32 %v3524, %v915
    %v3529 = vmul.f32 %v3523, %v916
    %v3530 = vmul.f32 %v3524, %v916
    %v3531 = vmul.f32 %v3523, %v917
    %v3532 = vmul.f32 %v3524, %v917
    %v3533 = vmul.f32 %v3523, %v918
    %v3534 = vmul.f32 %v3524, %v918
    %v3535 = vmul.f32 %v3523, %v919
    %v3536 = vmul.f32 %v3524, %v919
    %v3537 = vmul.f32 %v3523, %v920
    %v3538 = vmul.f32 %v3524, %v920
    %v3539 = vmul.f32 %v3523, %v921
    %v3540 = vmul.f32 %v3524, %v921
    %v3541 = vmul.f32 %v3523, %v922
    %v3542 = vmul.f32 %v3524, %v922
    %v3543 = vmul.f32 %v3523, %v923
    %v3544 = vmul.f32 %v3524, %v923
    %v3545 = vmul.f32 %v3523, %v924
    %v3546 = vmul.f32 %v3524, %v924
    %v3547 = vmul.f32 %v3523, %v925
    %v3548 = vmul.f32 %v3524, %v925
    %v3549 = vmul.f32 %v3523, %v926
    %v3550 = vmul.f32 %v3524, %v926
    %v3551 = vmul.f32 %v3523, %v927
    %v3552 = vmul.f32 %v3524, %v927
    %v3554 = vperm.slane %v3519, 0
    %v3555 = vperm.slane %v3519, 1
    %v3558 = vmul.f32 %v3554, %v2792
    %v3559 = vmul.f32 %v3555, %v2792
    %v3560 = vmul.f32 %v3554, %v2793
    %v3561 = vmul.f32 %v3555, %v2793
    %v3562 = vmul.f32 %v3554, %v2794
    %v3563 = vmul.f32 %v3555, %v2794
    %v3564 = vmul.f32 %v3554, %v2795
    %v3565 = vmul.f32 %v3555, %v2795
    %v3566 = vmul.f32 %v3554, %v2796
    %v3567 = vmul.f32 %v3555, %v2796
    %v3568 = vmul.f32 %v3554, %v2797
    %v3569 = vmul.f32 %v3555, %v2797
    %v3570 = vmul.f32 %v3554, %v2798
    %v3571 = vmul.f32 %v3555, %v2798
    %v3572 = vmul.f32 %v3554, %v2799
    %v3573 = vmul.f32 %v3555, %v2799
    %v3574 = vmul.f32 %v3554, %v2800
    %v3575 = vmul.f32 %v3555, %v2800
    %v3576 = vmul.f32 %v3554, %v2801
    %v3577 = vmul.f32 %v3555, %v2801
    %v3578 = vmul.f32 %v3554, %v2802
    %v3579 = vmul.f32 %v3555, %v2802
    %v3580 = vmul.f32 %v3554, %v2803
    %v3581 = vmul.f32 %v3555, %v2803
    %v3582 = vmul.f32 %v3554, %v2804
    %v3583 = vmul.f32 %v3555, %v2804
    %v3584 = vadd.f32 %v3527, %v3558
    %v3585 = vadd.f32 %v3528, %v3559
    %v3586 = vadd.f32 %v3529, %v3560
    %v3587 = vadd.f32 %v3530, %v3561
    %v3588 = vadd.f32 %v3531, %v3562
    %v3589 = vadd.f32 %v3532, %v3563
    %v3590 = vadd.f32 %v3533, %v3564
    %v3591 = vadd.f32 %v3534, %v3565
    %v3592 = vadd.f32 %v3535, %v3566
    %v3593 = vadd.f32 %v3536, %v3567
    %v3594 = vadd.f32 %v3537, %v3568
    %v3595 = vadd.f32 %v3538, %v3569
    %v3596 = vadd.f32 %v3539, %v3570
    %v3597 = vadd.f32 %v3540, %v3571
    %v3598 = vadd.f32 %v3541, %v3572
    %v3599 = vadd.f32 %v3542, %v3573
    %v3600 = vadd.f32 %v3543, %v3574
    %v3601 = vadd.f32 %v3544, %v3575
    %v3602 = vadd.f32 %v3545, %v3576
    %v3603 = vadd.f32 %v3546, %v3577
    %v3604 = vadd.f32 %v3547, %v3578
    %v3605 = vadd.f32 %v3548, %v3579
    %v3606 = vadd.f32 %v3549, %v3580
    %v3607 = vadd.f32 %v3550, %v3581
    %v3608 = vadd.f32 %v3551, %v3582
    %v3609 = vadd.f32 %v3552, %v3583
    %v3611 = vperm.slane %v3521, 0
    %v3612 = vperm.slane %v3521, 1
    %v3615 = vmul.f32 %v3611, %v2896
    %v3616 = vmul.f32 %v3612, %v2896
    %v3617 = vmul.f32 %v3611, %v2897
    %v3618 = vmul.f32 %v3612, %v2897
    %v3619 = vmul.f32 %v3611, %v2898
    %v3620 = vmul.f32 %v3612, %v2898
    %v3621 = vmul.f32 %v3611, %v2899
    %v3622 = vmul.f32 %v3612, %v2899
    %v3623 = vmul.f32 %v3611, %v2900
    %v3624 = vmul.f32 %v3612, %v2900
    %v3625 = vmul.f32 %v3611, %v2901
    %v3626 = vmul.f32 %v3612, %v2901
    %v3627 = vmul.f32 %v3611, %v2902
    %v3628 = vmul.f32 %v3612, %v2902
    %v3629 = vmul.f32 %v3611, %v2903
    %v3630 = vmul.f32 %v3612, %v2903
    %v3631 = vmul.f32 %v3611, %v2904
    %v3632 = vmul.f32 %v3612, %v2904
    %v3633 = vmul.f32 %v3611, %v2905
    %v3634 = vmul.f32 %v3612, %v2905
    %v3635 = vmul.f32 %v3611, %v2906
    %v3636 = vmul.f32 %v3612, %v2906
    %v3637 = vmul.f32 %v3611, %v2907
    %v3638 = vmul.f32 %v3612, %v2907
    %v3639 = vmul.f32 %v3611, %v2908
    %v3640 = vmul.f32 %v3612, %v2908
    %v3641 = vadd.f32 %v3584, %v3615
    %v3642 = vadd.f32 %v3585, %v3616
    %v3643 = vadd.f32 %v3586, %v3617
    %v3644 = vadd.f32 %v3587, %v3618
    %v3645 = vadd.f32 %v3588, %v3619
    %v3646 = vadd.f32 %v3589, %v3620
    %v3647 = vadd.f32 %v3590, %v3621
    %v3648 = vadd.f32 %v3591, %v3622
    %v3649 = vadd.f32 %v3592, %v3623
    %v3650 = vadd.f32 %v3593, %v3624
    %v3651 = vadd.f32 %v3594, %v3625
    %v3652 = vadd.f32 %v3595, %v3626
    %v3653 = vadd.f32 %v3596, %v3627
    %v3654 = vadd.f32 %v3597, %v3628
    %v3655 = vadd.f32 %v3598, %v3629
    %v3656 = vadd.f32 %v3599, %v3630
    %v3657 = vadd.f32 %v3600, %v3631
    %v3658 = vadd.f32 %v3601, %v3632
    %v3659 = vadd.f32 %v3602, %v3633
    %v3660 = vadd.f32 %v3603, %v3634
    %v3661 = vadd.f32 %v3604, %v3635
    %v3662 = vadd.f32 %v3605, %v3636
    %v3663 = vadd.f32 %v3606, %v3637
    %v3664 = vadd.f32 %v3607, %v3638
    %v3665 = vadd.f32 %v3608, %v3639
    %v3666 = vadd.f32 %v3609, %v3640
    %v3667 = vadd.f32 %v3490, %v3641
    %v3668 = vadd.f32 %v3491, %v3642
    %v3669 = vadd.f32 %v3492, %v3643
    %v3670 = vadd.f32 %v3493, %v3644
    %v3671 = vadd.f32 %v3494, %v3645
    %v3672 = vadd.f32 %v3495, %v3646
    %v3673 = vadd.f32 %v3496, %v3647
    %v3674 = vadd.f32 %v3497, %v3648
    %v3675 = vadd.f32 %v3498, %v3649
    %v3676 = vadd.f32 %v3499, %v3650
    %v3677 = vadd.f32 %v3500, %v3651
    %v3678 = vadd.f32 %v3501, %v3652
    %v3679 = vadd.f32 %v3502, %v3653
    %v3680 = vadd.f32 %v3503, %v3654
    %v3681 = vadd.f32 %v3504, %v3655
    %v3682 = vadd.f32 %v3505, %v3656
    %v3683 = vadd.f32 %v3506, %v3657
    %v3684 = vadd.f32 %v3507, %v3658
    %v3685 = vadd.f32 %v3508, %v3659
    %v3686 = vadd.f32 %v3509, %v3660
    %v3687 = vadd.f32 %v3510, %v3661
    %v3688 = vadd.f32 %v3511, %v3662
    %v3689 = vadd.f32 %v3512, %v3663
    %v3690 = vadd.f32 %v3513, %v3664
    %v3691 = vadd.f32 %v3514, %v3665
    %v3692 = vadd.f32 %v3515, %v3666
    %3693 = vst [vmem:[%s5] sm:$0xff] %v3667
    %3694 = vst [vmem:[%s5 + $0x8] sm:$0xff] %v3668
    %3695 = vst [vmem:[%s5 + $0x10] sm:$0xff] %v3669
    %3696 = vst [vmem:[%s5 + $0x18] sm:$0xff] %v3670
    %3697 = vst [vmem:[%s5 + $0x20] sm:$0xff] %v3671
    %3698 = vst [vmem:[%s5 + $0x28] sm:$0xff] %v3672
    %3699 = vst [vmem:[%s5 + $0x30] sm:$0xff] %v3673
    %3700 = vst [vmem:[%s5 + $0x38] sm:$0xff] %v3674
    %3701 = vst [vmem:[%s5 + $0x40] sm:$0xff] %v3675
    %3702 = vst [vmem:[%s5 + $0x48] sm:$0xff] %v3676
    %3703 = vst [vmem:[%s5 + $0x50] sm:$0xff] %v3677
    %3704 = vst [vmem:[%s5 + $0x58] sm:$0xff] %v3678
    %3705 = vst [vmem:[%s5 + $0x60] sm:$0xff] %v3679
    %3706 = vst [vmem:[%s5 + $0x68] sm:$0xff] %v3680
    %3707 = vst [vmem:[%s5 + $0x70] sm:$0xff] %v3681
    %3708 = vst [vmem:[%s5 + $0x78] sm:$0xff] %v3682
    %3709 = vst [vmem:[%s5 + $0x80] sm:$0xff] %v3683
    %3710 = vst [vmem:[%s5 + $0x88] sm:$0xff] %v3684
    %3711 = vst [vmem:[%s5 + $0x90] sm:$0xff] %v3685
    %3712 = vst [vmem:[%s5 + $0x98] sm:$0xff] %v3686
    %3713 = vst [vmem:[%s5 + $0xa0] sm:$0xff] %v3687
    %3714 = vst [vmem:[%s5 + $0xa8] sm:$0xff] %v3688
    %3715 = vst [vmem:[%s5 + $0xb0] sm:$0xff] %v3689
    %3716 = vst [vmem:[%s5 + $0xb8] sm:$0xff] %v3690
    %3717 = vst [vmem:[%s5 + $0xc0] sm:$0xff] %v3691
    %3718 = vst [vmem:[%s5 + $0xc8] sm:$0xff] %v3692
    // Predicated region
    $region30: #{construction_bezier_forward.1} parent=1 // pred_check
      _
    $region31: #{construction_bezier_forward.1} parent=1 // pred_check_branch
      %3720 = sbr.rel (0) target = $region33
    $region32: #{construction_bezier_forward.1} parent=1 // pred_region
      _
    $region33: #{construction_bezier_forward.1} parent=1 // pred_fallthru
      _
    // Predicated region
    $region34: #{construction_bezier_forward.1} parent=1 // pred_check
      _
    $region35: #{construction_bezier_forward.1} parent=1 // pred_check_branch
      %3722 = sbr.rel (0) target = $region37
    $region36: #{construction_bezier_forward.1} parent=1 // pred_region
      _
    $region37: #{construction_bezier_forward.1} parent=1 // pred_fallthru
      _
    // Predicated region
    $region38: #{construction_bezier_forward.1} parent=1 // pred_check
      _
    $region39: #{construction_bezier_forward.1} parent=1 // pred_check_branch
      %3724 = sbr.rel (0) target = $region41
    $region40: #{construction_bezier_forward.1} parent=1 // pred_region
      _
    $region41: #{construction_bezier_forward.1} parent=1 // pred_fallthru
      _
    // Predicated region
    $region42: #{construction_bezier_forward.1} parent=1 // pred_check
      _
    $region43: #{construction_bezier_forward.1} parent=1 // pred_check_branch
      %3726 = sbr.rel (0) target = $region45
    $region44: #{construction_bezier_forward.1} parent=1 // pred_region
      _
    $region45: #{construction_bezier_forward.1} parent=1 // pred_fallthru
      _
    %3727 = vsyncpa [#allocation3], 1
    %3728 = vsyncpa [#allocation5], 1

</llo_original>
